<compile_context>
chip_gen: v6e
topology: v6e:2x2x1
jax: 0.10.0
libtpu: 0.0.40
codegen_flags: <defaults>
</compile_context>

<pallas_src>
import jax
import jax.numpy as jnp
from jax.experimental import pallas as pl
from jax.experimental.pallas import tpu as pltpu

# ------------------------- model hyper-parameters --------------------------
N_NODES = 16      # n_vertex
N_FEAT = 2        # num_features
WINDOW = 8        # args.n_his
NHID = 32         # nhid
LSTM_H = 40       # LSTM hidden size (bidirectional -> 80)
N_CLASSES = 1
BATCH = 1
BN_EPS = 1e-5
GP = 128          # lane-aligned gate pitch for the fused LSTM gate layout


def h_stgcn_kernel(
    xin_ref,                    # (T, N*F)            input, node-major/channel-minor lanes
    cw1_ref, cb1_ref,           # (N*F, N*nhid), (1, N*nhid)      kron(I_N, W_conv1), tiled bias
    gk1_ref, gb1_ref,           # (N*nhid, N*nhid), (1, N*nhid)   kron(A^T, W_gcn1), tiled bias
    bn1s_ref, bn1b_ref,         # (1, N*nhid) x2                  BN1 eval scale/shift (tiled)
    gk2_ref, gb2_ref,           # GCN 2
    bn2s_ref, bn2b_ref,         # BN2
    fc1w_ref, fc1b_ref,         # (N*nhid, nhid), (1, nhid)
    wihf_ref, whhf_ref, bf_ref,  # (nhid, 4*GP), (H, 4*GP), (1, 4*GP)   forward LSTM (gates padded)
    wihb_ref, bb_ref,           # (nhid, 4*GP), (1, 4*GP)              backward LSTM (whh unused)
    c1wf_ref, c1wb_ref, c1b_ref,  # (H, 16), (H, 16), (1, 16)           classifier layer 1 (split)
    c2w_ref, c2b_ref,           # (16, 1), (1, 1)
    out_ref,                    # (1, 1)
):
    f32 = jnp.float32
    H = LSTM_H

    # ---- 1x1 conv over channels, all (t, n) at once: (8,32)@(32,512) ----
    X0 = jnp.dot(xin_ref[...], cw1_ref[...], preferred_element_type=f32) + cb1_ref[...]

    # ---- Hierarchical GCN block 1: BN(relu(A@(X@W)+b)) + X, fused as one matmul ----
    Y1 = jnp.dot(X0, gk1_ref[...], preferred_element_type=f32) + gb1_ref[...]
    X1 = jax.nn.relu(Y1) * bn1s_ref[...] + bn1b_ref[...] + X0

    # ---- Hierarchical GCN block 2 ----
    Y2 = jnp.dot(X1, gk2_ref[...], preferred_element_type=f32) + gb2_ref[...]
    X2 = jax.nn.relu(Y2) * bn2s_ref[...] + bn2b_ref[...] + X1        # (T, N*nhid) = (8, 512)

    # ---- fc1: X2 is already the (T, N*nhid) flatten -> one (8,512)@(512,32) matmul ----
    feats = jax.nn.relu(
        jnp.dot(X2, fc1w_ref[...], preferred_element_type=f32) + fc1b_ref[...])   # (T, nhid)

    # ---- forward LSTM: hoist all input-gate projections out of the recurrence ----
    gi_all = jnp.dot(feats, wihf_ref[...], preferred_element_type=f32) + bf_ref[...]  # (T, 4*GP)

    whhf = whhf_ref[...]                                             # (H, 4*GP)
    h = jnp.zeros((1, H), f32)
    c = jnp.zeros((1, H), f32)
    for t in range(WINDOW):
        g = gi_all[t:t + 1, :] + jnp.dot(h, whhf, preferred_element_type=f32)  # (1, 4*GP)
        i_g = jax.nn.sigmoid(g[:, 0 * GP:0 * GP + H])
        f_g = jax.nn.sigmoid(g[:, 1 * GP:1 * GP + H])
        g_g = jnp.tanh(g[:, 2 * GP:2 * GP + H])
        o_g = jax.nn.sigmoid(g[:, 3 * GP:3 * GP + H])
        c = f_g * c + i_g * g_g
        h = o_g * jnp.tanh(c)
    h_fwd = h                                                        # (1, H)

    # ---- backward direction at position T-1: one cell step from zero state ----
    gb = (jnp.dot(feats[WINDOW - 1:WINDOW, :], wihb_ref[...], preferred_element_type=f32)
          + bb_ref[...])                                             # (1, 4*GP)
    bi = jax.nn.sigmoid(gb[:, 0 * GP:0 * GP + H])
    bg = jnp.tanh(gb[:, 2 * GP:2 * GP + H])
    bo = jax.nn.sigmoid(gb[:, 3 * GP:3 * GP + H])
    h_bwd = bo * jnp.tanh(bi * bg)                                   # (1, H)

    # ---- classifier: Linear(80,16) (split into fwd/bwd halves) -> ReLU -> Linear(16,1) ----
    z = jax.nn.relu(jnp.dot(h_fwd, c1wf_ref[...], preferred_element_type=f32)
                    + jnp.dot(h_bwd, c1wb_ref[...], preferred_element_type=f32)
                    + c1b_ref[...])
    out_ref[...] = jnp.dot(z, c2w_ref[...], preferred_element_type=f32) + c2b_ref[...]


# --------------------- wrapper: pack params + pallas_call -------------------
def pack_inputs(data, a_hat, p):
    """Build the lane-blocked / kron-fused kernel operands (plain XLA, outside the kernel)."""
    x = jnp.transpose(data.astype(jnp.float32), (2, 0, 1))           # (T, N, F)
    xin = x.reshape(WINDOW, N_NODES * N_FEAT)                        # (T, N*F)

    def tile_n(v):                                                   # (nhid,) -> (1, N*nhid)
        return jnp.tile(v.reshape(1, -1), (1, N_NODES))

    eye_n = jnp.eye(N_NODES, dtype=jnp.float32)
    cw1 = jnp.kron(eye_n, p["conv1_w"])                              # (N*F, N*nhid)
    cb1 = tile_n(p["conv1_b"])

    # GCN layer:  A_hat @ (X @ W)  ==  X @ kron(A_hat^T, W)  in the (t, n*nhid+c) layout.
    gk1 = jnp.kron(a_hat.T, p["g1_w"])                               # (N*nhid, N*nhid)
    gk2 = jnp.kron(a_hat.T, p["g2_w"])
    gb1, gb2 = tile_n(p["g1_b"]), tile_n(p["g2_b"])
    bn1s, bn1b = tile_n(p["bn1_scale"]), tile_n(p["bn1_shift"])
    bn2s, bn2b = tile_n(p["bn2_scale"]), tile_n(p["bn2_shift"])

    fc1w = p["fc1_w"]                                                # (N*nhid, nhid)
    fc1b = p["fc1_b"].reshape(1, -1)

    def pack_gates(w_ih, b, w_hh=None):
        """Place gates (i, f, g, o) in 128-lane-aligned blocks for aligned in-kernel slicing."""
        in_dim = w_ih.shape[1]
        wih = jnp.zeros((in_dim, 4 * GP), jnp.float32)
        bias = jnp.zeros((1, 4 * GP), jnp.float32)
        whh = None if w_hh is None else jnp.zeros((LSTM_H, 4 * GP), jnp.float32)
        for g in range(4):
            wih = wih.at[:, g * GP:g * GP + LSTM_H].set(w_ih[g])
            bias = bias.at[:, g * GP:g * GP + LSTM_H].set(b[g][None, :])
            if w_hh is not None:
                whh = whh.at[:, g * GP:g * GP + LSTM_H].set(w_hh[g])
        return wih, whh, bias

    wihf, whhf, bf = pack_gates(p["lstm_f_wih"], p["lstm_f_b"], p["lstm_f_whh"])
    wihb, _, bbk = pack_gates(p["lstm_b_wih"], p["lstm_b_b"])        # backward whh not needed

    c1wf = p["cls1_w"][:LSTM_H, :]                                   # forward half of Linear(80,16)
    c1wb = p["cls1_w"][LSTM_H:, :]                                   # backward half
    c1b = p["cls1_b"].reshape(1, -1)
    c2w = p["cls2_w"]
    c2b = p["cls2_b"].reshape(1, -1)

    return [xin, cw1, cb1, gk1, gb1, bn1s, bn1b, gk2, gb2, bn2s, bn2b,
            fc1w, fc1b, wihf, whhf, bf, wihb, bbk,
            c1wf, c1wb, c1b, c2w, c2b]


@jax.jit
def h_stgcn_forward(data, a_hat, params):
    """data: (B*N, F, T) float32 (PyTorch layout, B = 1)."""
    args = pack_inputs(data, a_hat, params)
    vmem = pltpu.MemorySpace.VMEM
    return pl.pallas_call(
        h_stgcn_kernel,
        out_shape=jax.ShapeDtypeStruct((BATCH, N_CLASSES), jnp.float32),
        in_specs=[pl.BlockSpec(memory_space=vmem)] * len(args),
        out_specs=pl.BlockSpec(memory_space=vmem),
    )(*args)


# ------------------------------ glue / setup -------------------------------
def gcn_norm_dense(edge_index, edge_weight, n):
    """Dense GCNConv normalization: add self loops, D^-1/2 A D^-1/2,
    with A_hat[dst, src] so that out = A_hat @ X."""
    src = jnp.concatenate([edge_index[0], jnp.arange(n)])
    dst = jnp.concatenate([edge_index[1], jnp.arange(n)])
    w = jnp.concatenate([edge_weight, jnp.ones((n,), jnp.float32)])
    deg = jnp.zeros((n,), jnp.float32).at[dst].add(w)
    dinv = jnp.where(deg > 0, 1.0 / jnp.sqrt(deg), 0.0)
    norm = dinv[dst] * w * dinv[src]
    a = jnp.zeros((n, n), jnp.float32).at[dst, src].add(norm)
    return a


def init_params(key):
    ks = jax.random.split(key, 32)

    def w(k, shape, scale=0.1):
        return (scale * jax.random.normal(k, shape)).astype(jnp.float32)

    p = {}
    # 1x1 conv (Conv2d(F, nhid, (1,1))): stored transposed as (F, nhid)
    p["conv1_w"] = w(ks[0], (N_FEAT, NHID))
    p["conv1_b"] = w(ks[1], (NHID,))
    # GCNConv weights (stored as (in, out), i.e. lin.weight.T) and biases
    p["g1_w"], p["g1_b"] = w(ks[2], (NHID, NHID)), w(ks[3], (NHID,))
    p["g2_w"], p["g2_b"] = w(ks[4], (NHID, NHID)), w(ks[5], (NHID,))

    # BatchNorm1d eval-mode -> fold into scale/shift
    def bn(kg, kb, km, kv):
        gamma = 1.0 + 0.1 * jax.random.normal(kg, (NHID,))
        beta = 0.1 * jax.random.normal(kb, (NHID,))
        mean = 0.05 * jax.random.normal(km, (NHID,))
        var = 1.0 + 0.1 * jax.random.uniform(kv, (NHID,))
        scale = gamma / jnp.sqrt(var + BN_EPS)
        shift = beta - mean * scale
        return scale.astype(jnp.float32), shift.astype(jnp.float32)

    p["bn1_scale"], p["bn1_shift"] = bn(ks[6], ks[7], ks[8], ks[9])
    p["bn2_scale"], p["bn2_shift"] = bn(ks[10], ks[11], ks[12], ks[13])

    # fc1: Linear(N*nhid, nhid); stored as weight.T of shape (N*nhid, nhid)
    p["fc1_w"] = w(ks[14], (N_NODES * NHID, NHID), scale=0.05)
    p["fc1_b"] = w(ks[15], (NHID,))

    # LSTM (PyTorch gate order i, f, g, o); bias = b_ih + b_hh combined
    p["lstm_f_wih"] = w(ks[16], (4, NHID, LSTM_H))     # weight_ih.T per gate
    p["lstm_f_whh"] = w(ks[17], (4, LSTM_H, LSTM_H))   # weight_hh.T per gate
    p["lstm_f_b"] = w(ks[18], (4, LSTM_H))
    p["lstm_b_wih"] = w(ks[19], (4, NHID, LSTM_H))
    p["lstm_b_b"] = w(ks[20], (4, LSTM_H))
    # Backward-direction weight_hh is never used for r_out[-1] (zero initial state) -> omitted.

    # classifier: Linear(80,16) -> ReLU -> Dropout -> Linear(16,1); weights transposed
    p["cls1_w"], p["cls1_b"] = w(ks[21], (2 * LSTM_H, 16)), w(ks[22], (16,))
    p["cls2_w"], p["cls2_b"] = w(ks[23], (16, N_CLASSES)), w(ks[24], (N_CLASSES,))
    return p


if __name__ == "__main__":
    key = jax.random.PRNGKey(0)
    k_data, k_edge, k_par = jax.random.split(key, 3)

    # data in the PyTorch layout: (B*N, num_features, window)
    data = jax.random.normal(k_data, (BATCH * N_NODES, N_FEAT, WINDOW), jnp.float32)

    # synthetic ring graph with positive edge weights (edge_index / edge_attr)
    idx = jnp.arange(N_NODES)
    src = jnp.concatenate([idx, (idx + 1) % N_NODES])
    dst = jnp.concatenate([(idx + 1) % N_NODES, idx])
    edge_index = jnp.stack([src, dst])                                   # (2, 2N)
    edge_attr = jax.random.uniform(k_edge, (edge_index.shape[1],),
                                   minval=0.5, maxval=1.5).astype(jnp.float32)

    a_hat = gcn_norm_dense(edge_index, edge_attr, N_NODES)
    params = init_params(k_par)

    out = h_stgcn_forward(data, a_hat, params)
    out = jax.block_until_ready(out)
    assert out.shape == (BATCH, N_CLASSES)
    print("KERNEL_OK")
</pallas_src>

<mosaic_0001>
module attributes {stable_mosaic.version = 11 : i64} {
  func.func @h_stgcn_kernel(%arg0: memref<8x32xf32, #tpu.memory_space<vmem>>, %arg1: memref<32x512xf32, #tpu.memory_space<vmem>>, %arg2: memref<1x512xf32, #tpu.memory_space<vmem>>, %arg3: memref<512x512xf32, #tpu.memory_space<vmem>>, %arg4: memref<1x512xf32, #tpu.memory_space<vmem>>, %arg5: memref<1x512xf32, #tpu.memory_space<vmem>>, %arg6: memref<1x512xf32, #tpu.memory_space<vmem>>, %arg7: memref<512x512xf32, #tpu.memory_space<vmem>>, %arg8: memref<1x512xf32, #tpu.memory_space<vmem>>, %arg9: memref<1x512xf32, #tpu.memory_space<vmem>>, %arg10: memref<1x512xf32, #tpu.memory_space<vmem>>, %arg11: memref<512x32xf32, #tpu.memory_space<vmem>>, %arg12: memref<1x32xf32, #tpu.memory_space<vmem>>, %arg13: memref<32x512xf32, #tpu.memory_space<vmem>>, %arg14: memref<40x512xf32, #tpu.memory_space<vmem>>, %arg15: memref<1x512xf32, #tpu.memory_space<vmem>>, %arg16: memref<32x512xf32, #tpu.memory_space<vmem>>, %arg17: memref<1x512xf32, #tpu.memory_space<vmem>>, %arg18: memref<40x16xf32, #tpu.memory_space<vmem>>, %arg19: memref<40x16xf32, #tpu.memory_space<vmem>>, %arg20: memref<1x16xf32, #tpu.memory_space<vmem>>, %arg21: memref<16x1xf32, #tpu.memory_space<vmem>>, %arg22: memref<1x1xf32, #tpu.memory_space<vmem>>, %arg23: memref<1x1xf32, #tpu.memory_space<vmem>>) attributes {dimension_semantics = [], scalar_prefetch = 0 : i64, scratch_operands = 0 : i64, tpu.core_type = #tpu.core_type<tc>} {
    %c0 = arith.constant 0 : index
    %c0_0 = arith.constant 0 : index
    %0 = vector.load %arg0[%c0, %c0_0] : memref<8x32xf32, #tpu.memory_space<vmem>>, vector<8x32xf32>
    %c0_1 = arith.constant 0 : index
    %c0_2 = arith.constant 0 : index
    %1 = vector.load %arg1[%c0_1, %c0_2] : memref<32x512xf32, #tpu.memory_space<vmem>>, vector<32x512xf32>
    %cst = arith.constant dense<0.000000e+00> : vector<8x512xf32>
    %2 = tpu.matmul %0, %1, %cst {dimension_numbers = #tpu.dot_dimension_numbers<[1], [0], [0], [1], [0, 0, 1, 1], [], []>} : vector<8x32xf32>, vector<32x512xf32>, vector<8x512xf32> -> vector<8x512xf32>
    %c0_3 = arith.constant 0 : index
    %c0_4 = arith.constant 0 : index
    %3 = vector.load %arg2[%c0_3, %c0_4] : memref<1x512xf32, #tpu.memory_space<vmem>>, vector<1x512xf32>
    %4 = vector.broadcast %3 : vector<1x512xf32> to vector<8x512xf32>
    %5 = arith.addf %2, %4 : vector<8x512xf32>
    %c0_5 = arith.constant 0 : index
    %c0_6 = arith.constant 0 : index
    %6 = vector.load %arg3[%c0_5, %c0_6] : memref<512x512xf32, #tpu.memory_space<vmem>>, vector<512x512xf32>
    %cst_7 = arith.constant dense<0.000000e+00> : vector<8x512xf32>
    %7 = tpu.matmul %5, %6, %cst_7 {dimension_numbers = #tpu.dot_dimension_numbers<[1], [0], [0], [1], [0, 0, 1, 1], [], []>} : vector<8x512xf32>, vector<512x512xf32>, vector<8x512xf32> -> vector<8x512xf32>
    %c0_8 = arith.constant 0 : index
    %c0_9 = arith.constant 0 : index
    %8 = vector.load %arg4[%c0_8, %c0_9] : memref<1x512xf32, #tpu.memory_space<vmem>>, vector<1x512xf32>
    %9 = vector.broadcast %8 : vector<1x512xf32> to vector<8x512xf32>
    %10 = arith.addf %7, %9 : vector<8x512xf32>
    %cst_10 = arith.constant 0.000000e+00 : f32
    %11 = vector.broadcast %cst_10 : f32 to vector<8x512xf32>
    %12 = arith.maximumf %10, %11 : vector<8x512xf32>
    %c0_11 = arith.constant 0 : index
    %c0_12 = arith.constant 0 : index
    %13 = vector.load %arg5[%c0_11, %c0_12] : memref<1x512xf32, #tpu.memory_space<vmem>>, vector<1x512xf32>
    %14 = vector.broadcast %13 : vector<1x512xf32> to vector<8x512xf32>
    %15 = arith.mulf %12, %14 : vector<8x512xf32>
    %c0_13 = arith.constant 0 : index
    %c0_14 = arith.constant 0 : index
    %16 = vector.load %arg6[%c0_13, %c0_14] : memref<1x512xf32, #tpu.memory_space<vmem>>, vector<1x512xf32>
    %17 = vector.broadcast %16 : vector<1x512xf32> to vector<8x512xf32>
    %18 = arith.addf %15, %17 : vector<8x512xf32>
    %19 = arith.addf %18, %5 : vector<8x512xf32>
    %c0_15 = arith.constant 0 : index
    %c0_16 = arith.constant 0 : index
    %20 = vector.load %arg7[%c0_15, %c0_16] : memref<512x512xf32, #tpu.memory_space<vmem>>, vector<512x512xf32>
    %cst_17 = arith.constant dense<0.000000e+00> : vector<8x512xf32>
    %21 = tpu.matmul %19, %20, %cst_17 {dimension_numbers = #tpu.dot_dimension_numbers<[1], [0], [0], [1], [0, 0, 1, 1], [], []>} : vector<8x512xf32>, vector<512x512xf32>, vector<8x512xf32> -> vector<8x512xf32>
    %c0_18 = arith.constant 0 : index
    %c0_19 = arith.constant 0 : index
    %22 = vector.load %arg8[%c0_18, %c0_19] : memref<1x512xf32, #tpu.memory_space<vmem>>, vector<1x512xf32>
    %23 = vector.broadcast %22 : vector<1x512xf32> to vector<8x512xf32>
    %24 = arith.addf %21, %23 : vector<8x512xf32>
    %cst_20 = arith.constant 0.000000e+00 : f32
    %25 = vector.broadcast %cst_20 : f32 to vector<8x512xf32>
    %26 = arith.maximumf %24, %25 : vector<8x512xf32>
    %c0_21 = arith.constant 0 : index
    %c0_22 = arith.constant 0 : index
    %27 = vector.load %arg9[%c0_21, %c0_22] : memref<1x512xf32, #tpu.memory_space<vmem>>, vector<1x512xf32>
    %28 = vector.broadcast %27 : vector<1x512xf32> to vector<8x512xf32>
    %29 = arith.mulf %26, %28 : vector<8x512xf32>
    %c0_23 = arith.constant 0 : index
    %c0_24 = arith.constant 0 : index
    %30 = vector.load %arg10[%c0_23, %c0_24] : memref<1x512xf32, #tpu.memory_space<vmem>>, vector<1x512xf32>
    %31 = vector.broadcast %30 : vector<1x512xf32> to vector<8x512xf32>
    %32 = arith.addf %29, %31 : vector<8x512xf32>
    %33 = arith.addf %32, %19 : vector<8x512xf32>
    %c0_25 = arith.constant 0 : index
    %c0_26 = arith.constant 0 : index
    %34 = vector.load %arg11[%c0_25, %c0_26] : memref<512x32xf32, #tpu.memory_space<vmem>>, vector<512x32xf32>
    %cst_27 = arith.constant dense<0.000000e+00> : vector<8x32xf32>
    %35 = tpu.matmul %33, %34, %cst_27 {dimension_numbers = #tpu.dot_dimension_numbers<[1], [0], [0], [1], [0, 0, 1, 1], [], []>} : vector<8x512xf32>, vector<512x32xf32>, vector<8x32xf32> -> vector<8x32xf32>
    %c0_28 = arith.constant 0 : index
    %c0_29 = arith.constant 0 : index
    %36 = vector.load %arg12[%c0_28, %c0_29] : memref<1x32xf32, #tpu.memory_space<vmem>>, vector<1x32xf32>
    %37 = vector.broadcast %36 : vector<1x32xf32> to vector<8x32xf32>
    %38 = arith.addf %35, %37 : vector<8x32xf32>
    %cst_30 = arith.constant 0.000000e+00 : f32
    %39 = vector.broadcast %cst_30 : f32 to vector<8x32xf32>
    %40 = arith.maximumf %38, %39 : vector<8x32xf32>
    %c0_31 = arith.constant 0 : index
    %c0_32 = arith.constant 0 : index
    %41 = vector.load %arg13[%c0_31, %c0_32] : memref<32x512xf32, #tpu.memory_space<vmem>>, vector<32x512xf32>
    %cst_33 = arith.constant dense<0.000000e+00> : vector<8x512xf32>
    %42 = tpu.matmul %40, %41, %cst_33 {dimension_numbers = #tpu.dot_dimension_numbers<[1], [0], [0], [1], [0, 0, 1, 1], [], []>} : vector<8x32xf32>, vector<32x512xf32>, vector<8x512xf32> -> vector<8x512xf32>
    %c0_34 = arith.constant 0 : index
    %c0_35 = arith.constant 0 : index
    %43 = vector.load %arg15[%c0_34, %c0_35] : memref<1x512xf32, #tpu.memory_space<vmem>>, vector<1x512xf32>
    %44 = vector.broadcast %43 : vector<1x512xf32> to vector<8x512xf32>
    %45 = arith.addf %42, %44 : vector<8x512xf32>
    %c0_36 = arith.constant 0 : index
    %c0_37 = arith.constant 0 : index
    %46 = vector.load %arg14[%c0_36, %c0_37] : memref<40x512xf32, #tpu.memory_space<vmem>>, vector<40x512xf32>
    %cst_38 = arith.constant 0.000000e+00 : f32
    %47 = vector.broadcast %cst_38 : f32 to vector<1x40xf32>
    %cst_39 = arith.constant 0.000000e+00 : f32
    %48 = vector.broadcast %cst_39 : f32 to vector<1x40xf32>
    %49 = vector.extract_strided_slice %45 {offsets = [0, 0], sizes = [1, 512], strides = [1, 1]} : vector<8x512xf32> to vector<1x512xf32>
    %cst_40 = arith.constant dense<0.000000e+00> : vector<1x512xf32>
    %50 = tpu.matmul %47, %46, %cst_40 {dimension_numbers = #tpu.dot_dimension_numbers<[1], [0], [0], [1], [0, 0, 1, 1], [], []>} : vector<1x40xf32>, vector<40x512xf32>, vector<1x512xf32> -> vector<1x512xf32>
    %51 = arith.addf %49, %50 : vector<1x512xf32>
    %52 = vector.extract_strided_slice %51 {offsets = [0, 0], sizes = [1, 40], strides = [1, 1]} : vector<1x512xf32> to vector<1x40xf32>
    %53 = arith.negf %52 : vector<1x40xf32>
    %54 = math.exp %53 : vector<1x40xf32>
    %cst_41 = arith.constant 1.000000e+00 : f32
    %55 = vector.broadcast %cst_41 : f32 to vector<1x40xf32>
    %56 = arith.addf %55, %54 : vector<1x40xf32>
    %57 = arith.divf %55, %56 : vector<1x40xf32>
    %58 = vector.extract_strided_slice %51 {offsets = [0, 128], sizes = [1, 40], strides = [1, 1]} : vector<1x512xf32> to vector<1x40xf32>
    %59 = arith.negf %58 : vector<1x40xf32>
    %60 = math.exp %59 : vector<1x40xf32>
    %cst_42 = arith.constant 1.000000e+00 : f32
    %61 = vector.broadcast %cst_42 : f32 to vector<1x40xf32>
    %62 = arith.addf %61, %60 : vector<1x40xf32>
    %63 = arith.divf %61, %62 : vector<1x40xf32>
    %64 = vector.extract_strided_slice %51 {offsets = [0, 256], sizes = [1, 40], strides = [1, 1]} : vector<1x512xf32> to vector<1x40xf32>
    %65 = math.tanh %64 : vector<1x40xf32>
    %66 = vector.extract_strided_slice %51 {offsets = [0, 384], sizes = [1, 40], strides = [1, 1]} : vector<1x512xf32> to vector<1x40xf32>
    %67 = arith.negf %66 : vector<1x40xf32>
    %68 = math.exp %67 : vector<1x40xf32>
    %cst_43 = arith.constant 1.000000e+00 : f32
    %69 = vector.broadcast %cst_43 : f32 to vector<1x40xf32>
    %70 = arith.addf %69, %68 : vector<1x40xf32>
    %71 = arith.divf %69, %70 : vector<1x40xf32>
    %72 = arith.mulf %63, %48 : vector<1x40xf32>
    %73 = arith.mulf %57, %65 : vector<1x40xf32>
    %74 = arith.addf %72, %73 : vector<1x40xf32>
    %75 = math.tanh %74 : vector<1x40xf32>
    %76 = arith.mulf %71, %75 : vector<1x40xf32>
    %77 = vector.extract_strided_slice %45 {offsets = [1, 0], sizes = [1, 512], strides = [1, 1]} : vector<8x512xf32> to vector<1x512xf32>
    %cst_44 = arith.constant dense<0.000000e+00> : vector<1x512xf32>
    %78 = tpu.matmul %76, %46, %cst_44 {dimension_numbers = #tpu.dot_dimension_numbers<[1], [0], [0], [1], [0, 0, 1, 1], [], []>} : vector<1x40xf32>, vector<40x512xf32>, vector<1x512xf32> -> vector<1x512xf32>
    %79 = arith.addf %77, %78 : vector<1x512xf32>
    %80 = vector.extract_strided_slice %79 {offsets = [0, 0], sizes = [1, 40], strides = [1, 1]} : vector<1x512xf32> to vector<1x40xf32>
    %81 = arith.negf %80 : vector<1x40xf32>
    %82 = math.exp %81 : vector<1x40xf32>
    %cst_45 = arith.constant 1.000000e+00 : f32
    %83 = vector.broadcast %cst_45 : f32 to vector<1x40xf32>
    %84 = arith.addf %83, %82 : vector<1x40xf32>
    %85 = arith.divf %83, %84 : vector<1x40xf32>
    %86 = vector.extract_strided_slice %79 {offsets = [0, 128], sizes = [1, 40], strides = [1, 1]} : vector<1x512xf32> to vector<1x40xf32>
    %87 = arith.negf %86 : vector<1x40xf32>
    %88 = math.exp %87 : vector<1x40xf32>
    %cst_46 = arith.constant 1.000000e+00 : f32
    %89 = vector.broadcast %cst_46 : f32 to vector<1x40xf32>
    %90 = arith.addf %89, %88 : vector<1x40xf32>
    %91 = arith.divf %89, %90 : vector<1x40xf32>
    %92 = vector.extract_strided_slice %79 {offsets = [0, 256], sizes = [1, 40], strides = [1, 1]} : vector<1x512xf32> to vector<1x40xf32>
    %93 = math.tanh %92 : vector<1x40xf32>
    %94 = vector.extract_strided_slice %79 {offsets = [0, 384], sizes = [1, 40], strides = [1, 1]} : vector<1x512xf32> to vector<1x40xf32>
    %95 = arith.negf %94 : vector<1x40xf32>
    %96 = math.exp %95 : vector<1x40xf32>
    %cst_47 = arith.constant 1.000000e+00 : f32
    %97 = vector.broadcast %cst_47 : f32 to vector<1x40xf32>
    %98 = arith.addf %97, %96 : vector<1x40xf32>
    %99 = arith.divf %97, %98 : vector<1x40xf32>
    %100 = arith.mulf %91, %74 : vector<1x40xf32>
    %101 = arith.mulf %85, %93 : vector<1x40xf32>
    %102 = arith.addf %100, %101 : vector<1x40xf32>
    %103 = math.tanh %102 : vector<1x40xf32>
    %104 = arith.mulf %99, %103 : vector<1x40xf32>
    %105 = vector.extract_strided_slice %45 {offsets = [2, 0], sizes = [1, 512], strides = [1, 1]} : vector<8x512xf32> to vector<1x512xf32>
    %cst_48 = arith.constant dense<0.000000e+00> : vector<1x512xf32>
    %106 = tpu.matmul %104, %46, %cst_48 {dimension_numbers = #tpu.dot_dimension_numbers<[1], [0], [0], [1], [0, 0, 1, 1], [], []>} : vector<1x40xf32>, vector<40x512xf32>, vector<1x512xf32> -> vector<1x512xf32>
    %107 = arith.addf %105, %106 : vector<1x512xf32>
    %108 = vector.extract_strided_slice %107 {offsets = [0, 0], sizes = [1, 40], strides = [1, 1]} : vector<1x512xf32> to vector<1x40xf32>
    %109 = arith.negf %108 : vector<1x40xf32>
    %110 = math.exp %109 : vector<1x40xf32>
    %cst_49 = arith.constant 1.000000e+00 : f32
    %111 = vector.broadcast %cst_49 : f32 to vector<1x40xf32>
    %112 = arith.addf %111, %110 : vector<1x40xf32>
    %113 = arith.divf %111, %112 : vector<1x40xf32>
    %114 = vector.extract_strided_slice %107 {offsets = [0, 128], sizes = [1, 40], strides = [1, 1]} : vector<1x512xf32> to vector<1x40xf32>
    %115 = arith.negf %114 : vector<1x40xf32>
    %116 = math.exp %115 : vector<1x40xf32>
    %cst_50 = arith.constant 1.000000e+00 : f32
    %117 = vector.broadcast %cst_50 : f32 to vector<1x40xf32>
    %118 = arith.addf %117, %116 : vector<1x40xf32>
    %119 = arith.divf %117, %118 : vector<1x40xf32>
    %120 = vector.extract_strided_slice %107 {offsets = [0, 256], sizes = [1, 40], strides = [1, 1]} : vector<1x512xf32> to vector<1x40xf32>
    %121 = math.tanh %120 : vector<1x40xf32>
    %122 = vector.extract_strided_slice %107 {offsets = [0, 384], sizes = [1, 40], strides = [1, 1]} : vector<1x512xf32> to vector<1x40xf32>
    %123 = arith.negf %122 : vector<1x40xf32>
    %124 = math.exp %123 : vector<1x40xf32>
    %cst_51 = arith.constant 1.000000e+00 : f32
    %125 = vector.broadcast %cst_51 : f32 to vector<1x40xf32>
    %126 = arith.addf %125, %124 : vector<1x40xf32>
    %127 = arith.divf %125, %126 : vector<1x40xf32>
    %128 = arith.mulf %119, %102 : vector<1x40xf32>
    %129 = arith.mulf %113, %121 : vector<1x40xf32>
    %130 = arith.addf %128, %129 : vector<1x40xf32>
    %131 = math.tanh %130 : vector<1x40xf32>
    %132 = arith.mulf %127, %131 : vector<1x40xf32>
    %133 = vector.extract_strided_slice %45 {offsets = [3, 0], sizes = [1, 512], strides = [1, 1]} : vector<8x512xf32> to vector<1x512xf32>
    %cst_52 = arith.constant dense<0.000000e+00> : vector<1x512xf32>
    %134 = tpu.matmul %132, %46, %cst_52 {dimension_numbers = #tpu.dot_dimension_numbers<[1], [0], [0], [1], [0, 0, 1, 1], [], []>} : vector<1x40xf32>, vector<40x512xf32>, vector<1x512xf32> -> vector<1x512xf32>
    %135 = arith.addf %133, %134 : vector<1x512xf32>
    %136 = vector.extract_strided_slice %135 {offsets = [0, 0], sizes = [1, 40], strides = [1, 1]} : vector<1x512xf32> to vector<1x40xf32>
    %137 = arith.negf %136 : vector<1x40xf32>
    %138 = math.exp %137 : vector<1x40xf32>
    %cst_53 = arith.constant 1.000000e+00 : f32
    %139 = vector.broadcast %cst_53 : f32 to vector<1x40xf32>
    %140 = arith.addf %139, %138 : vector<1x40xf32>
    %141 = arith.divf %139, %140 : vector<1x40xf32>
    %142 = vector.extract_strided_slice %135 {offsets = [0, 128], sizes = [1, 40], strides = [1, 1]} : vector<1x512xf32> to vector<1x40xf32>
    %143 = arith.negf %142 : vector<1x40xf32>
    %144 = math.exp %143 : vector<1x40xf32>
    %cst_54 = arith.constant 1.000000e+00 : f32
    %145 = vector.broadcast %cst_54 : f32 to vector<1x40xf32>
    %146 = arith.addf %145, %144 : vector<1x40xf32>
    %147 = arith.divf %145, %146 : vector<1x40xf32>
    %148 = vector.extract_strided_slice %135 {offsets = [0, 256], sizes = [1, 40], strides = [1, 1]} : vector<1x512xf32> to vector<1x40xf32>
    %149 = math.tanh %148 : vector<1x40xf32>
    %150 = vector.extract_strided_slice %135 {offsets = [0, 384], sizes = [1, 40], strides = [1, 1]} : vector<1x512xf32> to vector<1x40xf32>
    %151 = arith.negf %150 : vector<1x40xf32>
    %152 = math.exp %151 : vector<1x40xf32>
    %cst_55 = arith.constant 1.000000e+00 : f32
    %153 = vector.broadcast %cst_55 : f32 to vector<1x40xf32>
    %154 = arith.addf %153, %152 : vector<1x40xf32>
    %155 = arith.divf %153, %154 : vector<1x40xf32>
    %156 = arith.mulf %147, %130 : vector<1x40xf32>
    %157 = arith.mulf %141, %149 : vector<1x40xf32>
    %158 = arith.addf %156, %157 : vector<1x40xf32>
    %159 = math.tanh %158 : vector<1x40xf32>
    %160 = arith.mulf %155, %159 : vector<1x40xf32>
    %161 = vector.extract_strided_slice %45 {offsets = [4, 0], sizes = [1, 512], strides = [1, 1]} : vector<8x512xf32> to vector<1x512xf32>
    %cst_56 = arith.constant dense<0.000000e+00> : vector<1x512xf32>
    %162 = tpu.matmul %160, %46, %cst_56 {dimension_numbers = #tpu.dot_dimension_numbers<[1], [0], [0], [1], [0, 0, 1, 1], [], []>} : vector<1x40xf32>, vector<40x512xf32>, vector<1x512xf32> -> vector<1x512xf32>
    %163 = arith.addf %161, %162 : vector<1x512xf32>
    %164 = vector.extract_strided_slice %163 {offsets = [0, 0], sizes = [1, 40], strides = [1, 1]} : vector<1x512xf32> to vector<1x40xf32>
    %165 = arith.negf %164 : vector<1x40xf32>
    %166 = math.exp %165 : vector<1x40xf32>
    %cst_57 = arith.constant 1.000000e+00 : f32
    %167 = vector.broadcast %cst_57 : f32 to vector<1x40xf32>
    %168 = arith.addf %167, %166 : vector<1x40xf32>
    %169 = arith.divf %167, %168 : vector<1x40xf32>
    %170 = vector.extract_strided_slice %163 {offsets = [0, 128], sizes = [1, 40], strides = [1, 1]} : vector<1x512xf32> to vector<1x40xf32>
    %171 = arith.negf %170 : vector<1x40xf32>
    %172 = math.exp %171 : vector<1x40xf32>
    %cst_58 = arith.constant 1.000000e+00 : f32
    %173 = vector.broadcast %cst_58 : f32 to vector<1x40xf32>
    %174 = arith.addf %173, %172 : vector<1x40xf32>
    %175 = arith.divf %173, %174 : vector<1x40xf32>
    %176 = vector.extract_strided_slice %163 {offsets = [0, 256], sizes = [1, 40], strides = [1, 1]} : vector<1x512xf32> to vector<1x40xf32>
    %177 = math.tanh %176 : vector<1x40xf32>
    %178 = vector.extract_strided_slice %163 {offsets = [0, 384], sizes = [1, 40], strides = [1, 1]} : vector<1x512xf32> to vector<1x40xf32>
    %179 = arith.negf %178 : vector<1x40xf32>
    %180 = math.exp %179 : vector<1x40xf32>
    %cst_59 = arith.constant 1.000000e+00 : f32
    %181 = vector.broadcast %cst_59 : f32 to vector<1x40xf32>
    %182 = arith.addf %181, %180 : vector<1x40xf32>
    %183 = arith.divf %181, %182 : vector<1x40xf32>
    %184 = arith.mulf %175, %158 : vector<1x40xf32>
    %185 = arith.mulf %169, %177 : vector<1x40xf32>
    %186 = arith.addf %184, %185 : vector<1x40xf32>
    %187 = math.tanh %186 : vector<1x40xf32>
    %188 = arith.mulf %183, %187 : vector<1x40xf32>
    %189 = vector.extract_strided_slice %45 {offsets = [5, 0], sizes = [1, 512], strides = [1, 1]} : vector<8x512xf32> to vector<1x512xf32>
    %cst_60 = arith.constant dense<0.000000e+00> : vector<1x512xf32>
    %190 = tpu.matmul %188, %46, %cst_60 {dimension_numbers = #tpu.dot_dimension_numbers<[1], [0], [0], [1], [0, 0, 1, 1], [], []>} : vector<1x40xf32>, vector<40x512xf32>, vector<1x512xf32> -> vector<1x512xf32>
    %191 = arith.addf %189, %190 : vector<1x512xf32>
    %192 = vector.extract_strided_slice %191 {offsets = [0, 0], sizes = [1, 40], strides = [1, 1]} : vector<1x512xf32> to vector<1x40xf32>
    %193 = arith.negf %192 : vector<1x40xf32>
    %194 = math.exp %193 : vector<1x40xf32>
    %cst_61 = arith.constant 1.000000e+00 : f32
    %195 = vector.broadcast %cst_61 : f32 to vector<1x40xf32>
    %196 = arith.addf %195, %194 : vector<1x40xf32>
    %197 = arith.divf %195, %196 : vector<1x40xf32>
    %198 = vector.extract_strided_slice %191 {offsets = [0, 128], sizes = [1, 40], strides = [1, 1]} : vector<1x512xf32> to vector<1x40xf32>
    %199 = arith.negf %198 : vector<1x40xf32>
    %200 = math.exp %199 : vector<1x40xf32>
    %cst_62 = arith.constant 1.000000e+00 : f32
    %201 = vector.broadcast %cst_62 : f32 to vector<1x40xf32>
    %202 = arith.addf %201, %200 : vector<1x40xf32>
    %203 = arith.divf %201, %202 : vector<1x40xf32>
    %204 = vector.extract_strided_slice %191 {offsets = [0, 256], sizes = [1, 40], strides = [1, 1]} : vector<1x512xf32> to vector<1x40xf32>
    %205 = math.tanh %204 : vector<1x40xf32>
    %206 = vector.extract_strided_slice %191 {offsets = [0, 384], sizes = [1, 40], strides = [1, 1]} : vector<1x512xf32> to vector<1x40xf32>
    %207 = arith.negf %206 : vector<1x40xf32>
    %208 = math.exp %207 : vector<1x40xf32>
    %cst_63 = arith.constant 1.000000e+00 : f32
    %209 = vector.broadcast %cst_63 : f32 to vector<1x40xf32>
    %210 = arith.addf %209, %208 : vector<1x40xf32>
    %211 = arith.divf %209, %210 : vector<1x40xf32>
    %212 = arith.mulf %203, %186 : vector<1x40xf32>
    %213 = arith.mulf %197, %205 : vector<1x40xf32>
    %214 = arith.addf %212, %213 : vector<1x40xf32>
    %215 = math.tanh %214 : vector<1x40xf32>
    %216 = arith.mulf %211, %215 : vector<1x40xf32>
    %217 = vector.extract_strided_slice %45 {offsets = [6, 0], sizes = [1, 512], strides = [1, 1]} : vector<8x512xf32> to vector<1x512xf32>
    %cst_64 = arith.constant dense<0.000000e+00> : vector<1x512xf32>
    %218 = tpu.matmul %216, %46, %cst_64 {dimension_numbers = #tpu.dot_dimension_numbers<[1], [0], [0], [1], [0, 0, 1, 1], [], []>} : vector<1x40xf32>, vector<40x512xf32>, vector<1x512xf32> -> vector<1x512xf32>
    %219 = arith.addf %217, %218 : vector<1x512xf32>
    %220 = vector.extract_strided_slice %219 {offsets = [0, 0], sizes = [1, 40], strides = [1, 1]} : vector<1x512xf32> to vector<1x40xf32>
    %221 = arith.negf %220 : vector<1x40xf32>
    %222 = math.exp %221 : vector<1x40xf32>
    %cst_65 = arith.constant 1.000000e+00 : f32
    %223 = vector.broadcast %cst_65 : f32 to vector<1x40xf32>
    %224 = arith.addf %223, %222 : vector<1x40xf32>
    %225 = arith.divf %223, %224 : vector<1x40xf32>
    %226 = vector.extract_strided_slice %219 {offsets = [0, 128], sizes = [1, 40], strides = [1, 1]} : vector<1x512xf32> to vector<1x40xf32>
    %227 = arith.negf %226 : vector<1x40xf32>
    %228 = math.exp %227 : vector<1x40xf32>
    %cst_66 = arith.constant 1.000000e+00 : f32
    %229 = vector.broadcast %cst_66 : f32 to vector<1x40xf32>
    %230 = arith.addf %229, %228 : vector<1x40xf32>
    %231 = arith.divf %229, %230 : vector<1x40xf32>
    %232 = vector.extract_strided_slice %219 {offsets = [0, 256], sizes = [1, 40], strides = [1, 1]} : vector<1x512xf32> to vector<1x40xf32>
    %233 = math.tanh %232 : vector<1x40xf32>
    %234 = vector.extract_strided_slice %219 {offsets = [0, 384], sizes = [1, 40], strides = [1, 1]} : vector<1x512xf32> to vector<1x40xf32>
    %235 = arith.negf %234 : vector<1x40xf32>
    %236 = math.exp %235 : vector<1x40xf32>
    %cst_67 = arith.constant 1.000000e+00 : f32
    %237 = vector.broadcast %cst_67 : f32 to vector<1x40xf32>
    %238 = arith.addf %237, %236 : vector<1x40xf32>
    %239 = arith.divf %237, %238 : vector<1x40xf32>
    %240 = arith.mulf %231, %214 : vector<1x40xf32>
    %241 = arith.mulf %225, %233 : vector<1x40xf32>
    %242 = arith.addf %240, %241 : vector<1x40xf32>
    %243 = math.tanh %242 : vector<1x40xf32>
    %244 = arith.mulf %239, %243 : vector<1x40xf32>
    %245 = vector.extract_strided_slice %45 {offsets = [7, 0], sizes = [1, 512], strides = [1, 1]} : vector<8x512xf32> to vector<1x512xf32>
    %cst_68 = arith.constant dense<0.000000e+00> : vector<1x512xf32>
    %246 = tpu.matmul %244, %46, %cst_68 {dimension_numbers = #tpu.dot_dimension_numbers<[1], [0], [0], [1], [0, 0, 1, 1], [], []>} : vector<1x40xf32>, vector<40x512xf32>, vector<1x512xf32> -> vector<1x512xf32>
    %247 = arith.addf %245, %246 : vector<1x512xf32>
    %248 = vector.extract_strided_slice %247 {offsets = [0, 0], sizes = [1, 40], strides = [1, 1]} : vector<1x512xf32> to vector<1x40xf32>
    %249 = arith.negf %248 : vector<1x40xf32>
    %250 = math.exp %249 : vector<1x40xf32>
    %cst_69 = arith.constant 1.000000e+00 : f32
    %251 = vector.broadcast %cst_69 : f32 to vector<1x40xf32>
    %252 = arith.addf %251, %250 : vector<1x40xf32>
    %253 = arith.divf %251, %252 : vector<1x40xf32>
    %254 = vector.extract_strided_slice %247 {offsets = [0, 128], sizes = [1, 40], strides = [1, 1]} : vector<1x512xf32> to vector<1x40xf32>
    %255 = arith.negf %254 : vector<1x40xf32>
    %256 = math.exp %255 : vector<1x40xf32>
    %cst_70 = arith.constant 1.000000e+00 : f32
    %257 = vector.broadcast %cst_70 : f32 to vector<1x40xf32>
    %258 = arith.addf %257, %256 : vector<1x40xf32>
    %259 = arith.divf %257, %258 : vector<1x40xf32>
    %260 = vector.extract_strided_slice %247 {offsets = [0, 256], sizes = [1, 40], strides = [1, 1]} : vector<1x512xf32> to vector<1x40xf32>
    %261 = math.tanh %260 : vector<1x40xf32>
    %262 = vector.extract_strided_slice %247 {offsets = [0, 384], sizes = [1, 40], strides = [1, 1]} : vector<1x512xf32> to vector<1x40xf32>
    %263 = arith.negf %262 : vector<1x40xf32>
    %264 = math.exp %263 : vector<1x40xf32>
    %cst_71 = arith.constant 1.000000e+00 : f32
    %265 = vector.broadcast %cst_71 : f32 to vector<1x40xf32>
    %266 = arith.addf %265, %264 : vector<1x40xf32>
    %267 = arith.divf %265, %266 : vector<1x40xf32>
    %268 = arith.mulf %259, %242 : vector<1x40xf32>
    %269 = arith.mulf %253, %261 : vector<1x40xf32>
    %270 = arith.addf %268, %269 : vector<1x40xf32>
    %271 = math.tanh %270 : vector<1x40xf32>
    %272 = arith.mulf %267, %271 : vector<1x40xf32>
    %273 = vector.extract_strided_slice %40 {offsets = [7, 0], sizes = [1, 32], strides = [1, 1]} : vector<8x32xf32> to vector<1x32xf32>
    %c0_72 = arith.constant 0 : index
    %c0_73 = arith.constant 0 : index
    %274 = vector.load %arg16[%c0_72, %c0_73] : memref<32x512xf32, #tpu.memory_space<vmem>>, vector<32x512xf32>
    %cst_74 = arith.constant dense<0.000000e+00> : vector<1x512xf32>
    %275 = tpu.matmul %273, %274, %cst_74 {dimension_numbers = #tpu.dot_dimension_numbers<[1], [0], [0], [1], [0, 0, 1, 1], [], []>} : vector<1x32xf32>, vector<32x512xf32>, vector<1x512xf32> -> vector<1x512xf32>
    %c0_75 = arith.constant 0 : index
    %c0_76 = arith.constant 0 : index
    %276 = vector.load %arg17[%c0_75, %c0_76] : memref<1x512xf32, #tpu.memory_space<vmem>>, vector<1x512xf32>
    %277 = arith.addf %275, %276 : vector<1x512xf32>
    %278 = vector.extract_strided_slice %277 {offsets = [0, 0], sizes = [1, 40], strides = [1, 1]} : vector<1x512xf32> to vector<1x40xf32>
    %279 = arith.negf %278 : vector<1x40xf32>
    %280 = math.exp %279 : vector<1x40xf32>
    %cst_77 = arith.constant 1.000000e+00 : f32
    %281 = vector.broadcast %cst_77 : f32 to vector<1x40xf32>
    %282 = arith.addf %281, %280 : vector<1x40xf32>
    %283 = arith.divf %281, %282 : vector<1x40xf32>
    %284 = vector.extract_strided_slice %277 {offsets = [0, 256], sizes = [1, 40], strides = [1, 1]} : vector<1x512xf32> to vector<1x40xf32>
    %285 = math.tanh %284 : vector<1x40xf32>
    %286 = vector.extract_strided_slice %277 {offsets = [0, 384], sizes = [1, 40], strides = [1, 1]} : vector<1x512xf32> to vector<1x40xf32>
    %287 = arith.negf %286 : vector<1x40xf32>
    %288 = math.exp %287 : vector<1x40xf32>
    %cst_78 = arith.constant 1.000000e+00 : f32
    %289 = vector.broadcast %cst_78 : f32 to vector<1x40xf32>
    %290 = arith.addf %289, %288 : vector<1x40xf32>
    %291 = arith.divf %289, %290 : vector<1x40xf32>
    %292 = arith.mulf %283, %285 : vector<1x40xf32>
    %293 = math.tanh %292 : vector<1x40xf32>
    %294 = arith.mulf %291, %293 : vector<1x40xf32>
    %c0_79 = arith.constant 0 : index
    %c0_80 = arith.constant 0 : index
    %295 = vector.load %arg18[%c0_79, %c0_80] : memref<40x16xf32, #tpu.memory_space<vmem>>, vector<40x16xf32>
    %cst_81 = arith.constant dense<0.000000e+00> : vector<1x16xf32>
    %296 = tpu.matmul %272, %295, %cst_81 {dimension_numbers = #tpu.dot_dimension_numbers<[1], [0], [0], [1], [0, 0, 1, 1], [], []>} : vector<1x40xf32>, vector<40x16xf32>, vector<1x16xf32> -> vector<1x16xf32>
    %c0_82 = arith.constant 0 : index
    %c0_83 = arith.constant 0 : index
    %297 = vector.load %arg19[%c0_82, %c0_83] : memref<40x16xf32, #tpu.memory_space<vmem>>, vector<40x16xf32>
    %cst_84 = arith.constant dense<0.000000e+00> : vector<1x16xf32>
    %298 = tpu.matmul %294, %297, %cst_84 {dimension_numbers = #tpu.dot_dimension_numbers<[1], [0], [0], [1], [0, 0, 1, 1], [], []>} : vector<1x40xf32>, vector<40x16xf32>, vector<1x16xf32> -> vector<1x16xf32>
    %299 = arith.addf %296, %298 : vector<1x16xf32>
    %c0_85 = arith.constant 0 : index
    %c0_86 = arith.constant 0 : index
    %300 = vector.load %arg20[%c0_85, %c0_86] : memref<1x16xf32, #tpu.memory_space<vmem>>, vector<1x16xf32>
    %301 = arith.addf %299, %300 : vector<1x16xf32>
    %cst_87 = arith.constant 0.000000e+00 : f32
    %302 = vector.broadcast %cst_87 : f32 to vector<1x16xf32>
    %303 = arith.maximumf %301, %302 : vector<1x16xf32>
    %c0_88 = arith.constant 0 : index
    %c0_89 = arith.constant 0 : index
    %304 = vector.load %arg21[%c0_88, %c0_89] : memref<16x1xf32, #tpu.memory_space<vmem>>, vector<16x1xf32>
    %cst_90 = arith.constant dense<0.000000e+00> : vector<1x1xf32>
    %305 = tpu.matmul %303, %304, %cst_90 {dimension_numbers = #tpu.dot_dimension_numbers<[1], [0], [0], [1], [0, 0, 1, 1], [], []>} : vector<1x16xf32>, vector<16x1xf32>, vector<1x1xf32> -> vector<1x1xf32>
    %c0_91 = arith.constant 0 : index
    %c0_92 = arith.constant 0 : index
    %306 = vector.load %arg22[%c0_91, %c0_92] : memref<1x1xf32, #tpu.memory_space<vmem>>, vector<1x1xf32>
    %307 = arith.addf %305, %306 : vector<1x1xf32>
    %c0_93 = arith.constant 0 : index
    %c0_94 = arith.constant 0 : index
    %308 = vector.load %arg23[%c0_93, %c0_94] : memref<1x1xf32, #tpu.memory_space<vmem>>, vector<1x1xf32>
    tpu.vector_store %arg23[%c0_93, %c0_94], %307 {strides = array<i32>} : memref<1x1xf32, #tpu.memory_space<vmem>>, vector<1x1xf32>,
    return
  }
}

</mosaic_0001>

<llo_original>
// kernel: h_stgcn_forward.1
$region0: #{h_stgcn_forward.1}
  #allocation0 [shape = 'u32[]', space=smem, size = 0x4, offset = 0x4, fixed_abs, tag = 'smem constant byte address 0x4 - core index']
  #allocation1 [shape = 'u32[144,128]{1,0:T(1,128)}', space=vmem, size = 0x12000, scoped, tag = 'internal scratch']
  #allocation2 [shape = 'f32[1,1]{1,0:T(1,128)S(1)}', space=vmem, size = 0x200, scoped, tag = 'scoped memory for h_stgcn_forward.1']
  %s0 = inlined_call_operand.vmem [shape: f32[8,32], index: 0, kind: input, shape index: {}]
  %s1 = inlined_call_operand.vmem [shape: f32[32,512], index: 1, kind: input, shape index: {}]
  %s2 = inlined_call_operand.vmem [shape: f32[1,512], index: 2, kind: input, shape index: {}]
  %s3 = inlined_call_operand.vmem [shape: f32[512,512], index: 3, kind: input, shape index: {}]
  %s4 = inlined_call_operand.vmem [shape: f32[1,512], index: 4, kind: input, shape index: {}]
  %s5 = inlined_call_operand.vmem [shape: f32[1,512], index: 5, kind: input, shape index: {}]
  %s6 = inlined_call_operand.vmem [shape: f32[1,512], index: 6, kind: input, shape index: {}]
  %s7 = inlined_call_operand.vmem [shape: f32[512,512], index: 7, kind: input, shape index: {}]
  %s8 = inlined_call_operand.vmem [shape: f32[1,512], index: 8, kind: input, shape index: {}]
  %s9 = inlined_call_operand.vmem [shape: f32[1,512], index: 9, kind: input, shape index: {}]
  %s10 = inlined_call_operand.vmem [shape: f32[1,512], index: 10, kind: input, shape index: {}]
  %s11 = inlined_call_operand.vmem [shape: f32[512,32], index: 11, kind: input, shape index: {}]
  %s12 = inlined_call_operand.vmem [shape: f32[1,32], index: 12, kind: input, shape index: {}]
  %s13 = inlined_call_operand.vmem [shape: f32[32,512], index: 13, kind: input, shape index: {}]
  %s14 = inlined_call_operand.vmem [shape: f32[40,512], index: 14, kind: input, shape index: {}]
  %s15 = inlined_call_operand.vmem [shape: f32[1,512], index: 15, kind: input, shape index: {}]
  %s16 = inlined_call_operand.vmem [shape: f32[32,512], index: 16, kind: input, shape index: {}]
  %s17 = inlined_call_operand.vmem [shape: f32[1,512], index: 17, kind: input, shape index: {}]
  %s18 = inlined_call_operand.vmem [shape: f32[40,16], index: 18, kind: input, shape index: {}]
  %s19 = inlined_call_operand.vmem [shape: f32[40,16], index: 19, kind: input, shape index: {}]
  %s20 = inlined_call_operand.vmem [shape: f32[1,16], index: 20, kind: input, shape index: {}]
  %s21 = inlined_call_operand.vmem [shape: f32[16,1], index: 21, kind: input, shape index: {}]
  %s22 = inlined_call_operand.<no memory space> [shape: f32[1,1], index: 22, kind: input, shape index: {}]
  %s23 = inlined_call_operand.hbm [shape: f32[1,1], index: 23, kind: output, shape index: {}]
  %s24 = sld [smem:[#allocation0]]
  $region102: #{h_stgcn_forward.1} parent=0
    _
  %s26 = ssub.s32 1, %s24
  %s27 = scalar_select 0, %s26, %s24
  %v28 = vstv %s22
  %29 = vst [vmem:[#allocation2] sm:$0x1] %v28
  $region1: #{h_stgcn_forward.1} parent=0
    #allocation3 [shape = 'u8[512]{0}', space=vmem, size = 0x400, scoped, tag = 'output window, operand 0, single buffered']
    #allocation4 [shape = 's32[1]{0}', space=sflag, size = 0x4, scoped, tag = 'scoped memory for h_stgcn_forward.1']
    %30 = vsyncpa [#allocation4], 0
    // Predicated region
    $region2: #{h_stgcn_forward.1} parent=1 // pred_check
      _
    $region3: #{h_stgcn_forward.1} parent=1 // pred_check_branch
      %32 = sbr.rel (0) target = $region5
    $region4: #{h_stgcn_forward.1} parent=1 // pred_region
      _
    $region5: #{h_stgcn_forward.1} parent=1 // pred_fallthru
      _
    // Predicated region
    $region6: #{h_stgcn_forward.1} parent=1 // pred_check
      _
    $region7: #{h_stgcn_forward.1} parent=1 // pred_check_branch
      %34 = sbr.rel (0) target = $region9
    $region8: #{h_stgcn_forward.1} parent=1 // pred_region
      _
    $region9: #{h_stgcn_forward.1} parent=1 // pred_fallthru
      _
    // Predicated region
    $region10: #{h_stgcn_forward.1} parent=1 // pred_check
      _
    $region11: #{h_stgcn_forward.1} parent=1 // pred_check_branch
      %36 = sbr.rel (0) target = $region13
    $region12: #{h_stgcn_forward.1} parent=1 // pred_region
      _
    $region13: #{h_stgcn_forward.1} parent=1 // pred_fallthru
      _
    // Predicated region
    $region14: #{h_stgcn_forward.1} parent=1 // pred_check
      _
    $region15: #{h_stgcn_forward.1} parent=1 // pred_check_branch
      %38 = sbr.rel (0) target = $region17
    $region16: #{h_stgcn_forward.1} parent=1 // pred_region
      _
    $region17: #{h_stgcn_forward.1} parent=1 // pred_fallthru
      _
    // Predicated region
    $region18: #{h_stgcn_forward.1} parent=1 // pred_check
      _
    $region19: #{h_stgcn_forward.1} parent=1 // pred_check_branch
      %40 = sbr.rel (0) target = $region21
    $region20: #{h_stgcn_forward.1} parent=1 // pred_region
      _
    $region21: #{h_stgcn_forward.1} parent=1 // pred_fallthru
      _
    // Predicated region
    $region22: #{h_stgcn_forward.1} parent=1 // pred_check
      _
    $region23: #{h_stgcn_forward.1} parent=1 // pred_check_branch
      %42 = sbr.rel (0) target = $region25
    $region24: #{h_stgcn_forward.1} parent=1 // pred_region
      _
    $region25: #{h_stgcn_forward.1} parent=1 // pred_fallthru
      _
    // Predicated region
    $region26: #{h_stgcn_forward.1} parent=1 // pred_check
      _
    $region27: #{h_stgcn_forward.1} parent=1 // pred_check_branch
      %44 = sbr.rel (0) target = $region29
    $region28: #{h_stgcn_forward.1} parent=1 // pred_region
      _
    $region29: #{h_stgcn_forward.1} parent=1 // pred_fallthru
      _
    // Predicated region
    $region30: #{h_stgcn_forward.1} parent=1 // pred_check
      _
    $region31: #{h_stgcn_forward.1} parent=1 // pred_check_branch
      %46 = sbr.rel (0) target = $region33
    $region32: #{h_stgcn_forward.1} parent=1 // pred_region
      _
    $region33: #{h_stgcn_forward.1} parent=1 // pred_fallthru
      _
    // Predicated region
    $region34: #{h_stgcn_forward.1} parent=1 // pred_check
      _
    $region35: #{h_stgcn_forward.1} parent=1 // pred_check_branch
      %48 = sbr.rel (0) target = $region37
    $region36: #{h_stgcn_forward.1} parent=1 // pred_region
      _
    $region37: #{h_stgcn_forward.1} parent=1 // pred_fallthru
      _
    // Predicated region
    $region38: #{h_stgcn_forward.1} parent=1 // pred_check
      _
    $region39: #{h_stgcn_forward.1} parent=1 // pred_check_branch
      %50 = sbr.rel (0) target = $region41
    $region40: #{h_stgcn_forward.1} parent=1 // pred_region
      _
    $region41: #{h_stgcn_forward.1} parent=1 // pred_fallthru
      _
    // Predicated region
    $region42: #{h_stgcn_forward.1} parent=1 // pred_check
      _
    $region43: #{h_stgcn_forward.1} parent=1 // pred_check_branch
      %52 = sbr.rel (0) target = $region45
    $region44: #{h_stgcn_forward.1} parent=1 // pred_region
      _
    $region45: #{h_stgcn_forward.1} parent=1 // pred_fallthru
      _
    // Predicated region
    $region46: #{h_stgcn_forward.1} parent=1 // pred_check
      _
    $region47: #{h_stgcn_forward.1} parent=1 // pred_check_branch
      %54 = sbr.rel (0) target = $region49
    $region48: #{h_stgcn_forward.1} parent=1 // pred_region
      _
    $region49: #{h_stgcn_forward.1} parent=1 // pred_fallthru
      _
    // Predicated region
    $region50: #{h_stgcn_forward.1} parent=1 // pred_check
      _
    $region51: #{h_stgcn_forward.1} parent=1 // pred_check_branch
      %56 = sbr.rel (0) target = $region53
    $region52: #{h_stgcn_forward.1} parent=1 // pred_region
      _
    $region53: #{h_stgcn_forward.1} parent=1 // pred_fallthru
      _
    // Predicated region
    $region54: #{h_stgcn_forward.1} parent=1 // pred_check
      _
    $region55: #{h_stgcn_forward.1} parent=1 // pred_check_branch
      %58 = sbr.rel (0) target = $region57
    $region56: #{h_stgcn_forward.1} parent=1 // pred_region
      _
    $region57: #{h_stgcn_forward.1} parent=1 // pred_fallthru
      _
    // Predicated region
    $region58: #{h_stgcn_forward.1} parent=1 // pred_check
      _
    $region59: #{h_stgcn_forward.1} parent=1 // pred_check_branch
      %60 = sbr.rel (0) target = $region61
    $region60: #{h_stgcn_forward.1} parent=1 // pred_region
      _
    $region61: #{h_stgcn_forward.1} parent=1 // pred_fallthru
      _
    // Predicated region
    $region62: #{h_stgcn_forward.1} parent=1 // pred_check
      _
    $region63: #{h_stgcn_forward.1} parent=1 // pred_check_branch
      %62 = sbr.rel (0) target = $region65
    $region64: #{h_stgcn_forward.1} parent=1 // pred_region
      _
    $region65: #{h_stgcn_forward.1} parent=1 // pred_fallthru
      _
    // Predicated region
    $region66: #{h_stgcn_forward.1} parent=1 // pred_check
      _
    $region67: #{h_stgcn_forward.1} parent=1 // pred_check_branch
      %64 = sbr.rel (0) target = $region69
    $region68: #{h_stgcn_forward.1} parent=1 // pred_region
      _
    $region69: #{h_stgcn_forward.1} parent=1 // pred_fallthru
      _
    // Predicated region
    $region70: #{h_stgcn_forward.1} parent=1 // pred_check
      _
    $region71: #{h_stgcn_forward.1} parent=1 // pred_check_branch
      %66 = sbr.rel (0) target = $region73
    $region72: #{h_stgcn_forward.1} parent=1 // pred_region
      _
    $region73: #{h_stgcn_forward.1} parent=1 // pred_fallthru
      _
    // Predicated region
    $region74: #{h_stgcn_forward.1} parent=1 // pred_check
      _
    $region75: #{h_stgcn_forward.1} parent=1 // pred_check_branch
      %68 = sbr.rel (0) target = $region77
    $region76: #{h_stgcn_forward.1} parent=1 // pred_region
      _
    $region77: #{h_stgcn_forward.1} parent=1 // pred_fallthru
      _
    // Predicated region
    $region78: #{h_stgcn_forward.1} parent=1 // pred_check
      _
    $region79: #{h_stgcn_forward.1} parent=1 // pred_check_branch
      %70 = sbr.rel (0) target = $region81
    $region80: #{h_stgcn_forward.1} parent=1 // pred_region
      _
    $region81: #{h_stgcn_forward.1} parent=1 // pred_fallthru
      _
    // Predicated region
    $region82: #{h_stgcn_forward.1} parent=1 // pred_check
      _
    $region83: #{h_stgcn_forward.1} parent=1 // pred_check_branch
      %72 = sbr.rel (0) target = $region85
    $region84: #{h_stgcn_forward.1} parent=1 // pred_region
      _
    $region85: #{h_stgcn_forward.1} parent=1 // pred_fallthru
      _
    // Predicated region
    $region86: #{h_stgcn_forward.1} parent=1 // pred_check
      _
    $region87: #{h_stgcn_forward.1} parent=1 // pred_check_branch
      %74 = sbr.rel (0) target = $region89
    $region88: #{h_stgcn_forward.1} parent=1 // pred_region
      _
    $region89: #{h_stgcn_forward.1} parent=1 // pred_fallthru
      _
    // Predicated region
    $region90: #{h_stgcn_forward.1} parent=1 // pred_check
      _
    $region91: #{h_stgcn_forward.1} parent=1 // pred_check_branch
      %76 = sbr.rel (0) target = $region93
    $region92: #{h_stgcn_forward.1} parent=1 // pred_region
      _
    $region93: #{h_stgcn_forward.1} parent=1 // pred_fallthru
      _
    %v77 = vld [vmem:[%s0] sm:$0xff]
    %v78 = vld [vmem:[%s1] sm:$0xff]
    %v79 = vld [vmem:[%s1 + $0x8] sm:$0xff]
    %v80 = vld [vmem:[%s1 + $0x10] sm:$0xff]
    %v81 = vld [vmem:[%s1 + $0x18] sm:$0xff]
    %v82 = vld [vmem:[%s1 + $0x20] sm:$0xff]
    %v83 = vld [vmem:[%s1 + $0x28] sm:$0xff]
    %v84 = vld [vmem:[%s1 + $0x30] sm:$0xff]
    %v85 = vld [vmem:[%s1 + $0x38] sm:$0xff]
    %v86 = vld [vmem:[%s1 + $0x40] sm:$0xff]
    %v87 = vld [vmem:[%s1 + $0x48] sm:$0xff]
    %v88 = vld [vmem:[%s1 + $0x50] sm:$0xff]
    %v89 = vld [vmem:[%s1 + $0x58] sm:$0xff]
    %v90 = vld [vmem:[%s1 + $0x60] sm:$0xff]
    %v91 = vld [vmem:[%s1 + $0x68] sm:$0xff]
    %v92 = vld [vmem:[%s1 + $0x70] sm:$0xff]
    %v93 = vld [vmem:[%s1 + $0x78] sm:$0xff]
    %v94 = vld [vmem:[%s2] sm:$0xf]
    %v96 = vlaneseq
    %v97 = vshrl.u32 %v96, 7
    %v98 = vsub.s32 0, %v97
    %v99 = vrot.slane %v94, %v98
    %v100 = vlaneseq
    %v101 = vshrl.u32 %v100, 7
    %v102 = vsub.s32 1, %v101
    %v103 = vrot.slane %v94, %v102
    %v104 = vlaneseq
    %v105 = vshrl.u32 %v104, 7
    %v106 = vsub.s32 2, %v105
    %v107 = vrot.slane %v94, %v106
    %v108 = vlaneseq
    %v109 = vshrl.u32 %v108, 7
    %v110 = vsub.s32 3, %v109
    %v111 = vrot.slane %v94, %v110
    %vm116 = vcmask 261120
    %v118 = vsel %vm116, %v77, 0
    %120 = vmatprep.subr.mxu0 0.0
    %121 = vmatpush1.msra.mxu0 0.0
    %122 = vmatprep.subr.mxu0 0.0
    %123 = vmatpush1.msra.mxu0 0.0
    %124 = vmatprep.subr.mxu0 0.0
    %125 = vmatpush1.msra.mxu0 0.0
    %126 = vmatprep.subr.mxu0 0.0
    %127 = vmatpush1.msra.mxu0 0.0
    %128 = vmatprep.subr.mxu0 0.0
    %129 = vmatpush1.msra.mxu0 0.0
    %130 = vmatprep.subr.mxu0 0.0
    %131 = vmatpush1.msra.mxu0 0.0
    %132 = vmatprep.subr.mxu0 0.0
    %133 = vmatpush1.msra.mxu0 0.0
    %134 = vmatprep.subr.mxu0 0.0
    %135 = vmatpush1.msra.mxu0 0.0
    %136 = vmatprep.subr.mxu0 0.0
    %137 = vmatpush1.msra.mxu0 0.0
    %138 = vmatprep.subr.mxu0 0.0
    %139 = vmatpush1.msra.mxu0 0.0
    %140 = vmatprep.subr.mxu0 0.0
    %141 = vmatpush1.msra.mxu0 0.0
    %142 = vmatprep.subr.mxu0 0.0
    %143 = vmatpush1.msra.mxu0 0.0
    %144 = vmatprep.subr.mxu0 %v91
    %145 = vmatpush1.msra.mxu0 %v90
    %146 = vmatprep.subr.mxu0 %v87
    %147 = vmatpush1.msra.mxu0 %v86
    %148 = vmatprep.subr.mxu0 %v83
    %149 = vmatpush1.msra.mxu0 %v82
    %150 = vmatprep.subr.mxu0 %v79
    %151 = vmatpush1.msra.mxu0 %v78
    %152 = vmatprep.subr.mxu0 0.0
    %153 = vmatpush2.msra.mxu0 0.0
    %154 = vmatprep.subr.mxu0 0.0
    %155 = vmatpush2.msra.mxu0 0.0
    %156 = vmatprep.subr.mxu0 0.0
    %157 = vmatpush2.msra.mxu0 0.0
    %158 = vmatprep.subr.mxu0 0.0
    %159 = vmatpush2.msra.mxu0 0.0
    %160 = vmatprep.subr.mxu0 0.0
    %161 = vmatpush2.msra.mxu0 0.0
    %162 = vmatprep.subr.mxu0 0.0
    %163 = vmatpush2.msra.mxu0 0.0
    %164 = vmatprep.subr.mxu0 0.0
    %165 = vmatpush2.msra.mxu0 0.0
    %166 = vmatprep.subr.mxu0 0.0
    %167 = vmatpush2.msra.mxu0 0.0
    %168 = vmatprep.subr.mxu0 0.0
    %169 = vmatpush2.msra.mxu0 0.0
    %170 = vmatprep.subr.mxu0 0.0
    %171 = vmatpush2.msra.mxu0 0.0
    %172 = vmatprep.subr.mxu0 0.0
    %173 = vmatpush2.msra.mxu0 0.0
    %174 = vmatprep.subr.mxu0 0.0
    %175 = vmatpush2.msra.mxu0 0.0
    %176 = vmatprep.subr.mxu0 0.0
    %177 = vmatpush2.msra.mxu0 0.0
    %178 = vmatprep.subr.mxu0 0.0
    %179 = vmatpush2.msra.mxu0 0.0
    %180 = vmatprep.subr.mxu0 0.0
    %181 = vmatpush2.msra.mxu0 0.0
    %182 = vmatprep.subr.mxu0 0.0
    %183 = vmatpush2.msra.mxu0 0.0
    %184 = vmatprep.mubr.f32.mxu0 0.0
    %185 = vmatmul.mubr.f32.gmra.mxu0 %v118
    %v186 = vpop.f32.mrf.mxu0
    %v187 = vadd.f32 %v99, %v186
    %v188 = vpop.f32.mrf.mxu0
    %v189 = vadd.f32 %v103, %v188
    %190 = vdwg.mxu0
    %191 = vmatprep.subr.mxu0 0.0
    %192 = vmatpush1.msra.mxu0 0.0
    %193 = vmatprep.subr.mxu0 0.0
    %194 = vmatpush1.msra.mxu0 0.0
    %195 = vmatprep.subr.mxu0 0.0
    %196 = vmatpush1.msra.mxu0 0.0
    %197 = vmatprep.subr.mxu0 0.0
    %198 = vmatpush1.msra.mxu0 0.0
    %199 = vmatprep.subr.mxu0 0.0
    %200 = vmatpush1.msra.mxu0 0.0
    %201 = vmatprep.subr.mxu0 0.0
    %202 = vmatpush1.msra.mxu0 0.0
    %203 = vmatprep.subr.mxu0 0.0
    %204 = vmatpush1.msra.mxu0 0.0
    %205 = vmatprep.subr.mxu0 0.0
    %206 = vmatpush1.msra.mxu0 0.0
    %207 = vmatprep.subr.mxu0 0.0
    %208 = vmatpush1.msra.mxu0 0.0
    %209 = vmatprep.subr.mxu0 0.0
    %210 = vmatpush1.msra.mxu0 0.0
    %211 = vmatprep.subr.mxu0 0.0
    %212 = vmatpush1.msra.mxu0 0.0
    %213 = vmatprep.subr.mxu0 0.0
    %214 = vmatpush1.msra.mxu0 0.0
    %215 = vmatprep.subr.mxu0 %v93
    %216 = vmatpush1.msra.mxu0 %v92
    %217 = vmatprep.subr.mxu0 %v89
    %218 = vmatpush1.msra.mxu0 %v88
    %219 = vmatprep.subr.mxu0 %v85
    %220 = vmatpush1.msra.mxu0 %v84
    %221 = vmatprep.subr.mxu0 %v81
    %222 = vmatpush1.msra.mxu0 %v80
    %223 = vmatprep.subr.mxu0 0.0
    %224 = vmatpush2.msra.mxu0 0.0
    %225 = vmatprep.subr.mxu0 0.0
    %226 = vmatpush2.msra.mxu0 0.0
    %227 = vmatprep.subr.mxu0 0.0
    %228 = vmatpush2.msra.mxu0 0.0
    %229 = vmatprep.subr.mxu0 0.0
    %230 = vmatpush2.msra.mxu0 0.0
    %231 = vmatprep.subr.mxu0 0.0
    %232 = vmatpush2.msra.mxu0 0.0
    %233 = vmatprep.subr.mxu0 0.0
    %234 = vmatpush2.msra.mxu0 0.0
    %235 = vmatprep.subr.mxu0 0.0
    %236 = vmatpush2.msra.mxu0 0.0
    %237 = vmatprep.subr.mxu0 0.0
    %238 = vmatpush2.msra.mxu0 0.0
    %239 = vmatprep.subr.mxu0 0.0
    %240 = vmatpush2.msra.mxu0 0.0
    %241 = vmatprep.subr.mxu0 0.0
    %242 = vmatpush2.msra.mxu0 0.0
    %243 = vmatprep.subr.mxu0 0.0
    %244 = vmatpush2.msra.mxu0 0.0
    %245 = vmatprep.subr.mxu0 0.0
    %246 = vmatpush2.msra.mxu0 0.0
    %247 = vmatprep.subr.mxu0 0.0
    %248 = vmatpush2.msra.mxu0 0.0
    %249 = vmatprep.subr.mxu0 0.0
    %250 = vmatpush2.msra.mxu0 0.0
    %251 = vmatprep.subr.mxu0 0.0
    %252 = vmatpush2.msra.mxu0 0.0
    %253 = vmatprep.subr.mxu0 0.0
    %254 = vmatpush2.msra.mxu0 0.0
    %255 = vmatprep.mubr.f32.mxu0 0.0
    %256 = vmatmul.mubr.f32.gmra.mxu0 %v118
    %v257 = vpop.f32.mrf.mxu0
    %v258 = vadd.f32 %v107, %v257
    %v259 = vpop.f32.mrf.mxu0
    %v260 = vadd.f32 %v111, %v259
    %261 = vdwg.mxu0
    %v262 = vld [vmem:[%s3] sm:$0xff]
    %v263 = vld [vmem:[%s3 + $0x8] sm:$0xff]
    %v264 = vld [vmem:[%s3 + $0x10] sm:$0xff]
    %v265 = vld [vmem:[%s3 + $0x18] sm:$0xff]
    %v266 = vld [vmem:[%s3 + $0x20] sm:$0xff]
    %v267 = vld [vmem:[%s3 + $0x28] sm:$0xff]
    %v268 = vld [vmem:[%s3 + $0x30] sm:$0xff]
    %v269 = vld [vmem:[%s3 + $0x38] sm:$0xff]
    %v270 = vld [vmem:[%s3 + $0x40] sm:$0xff]
    %v271 = vld [vmem:[%s3 + $0x48] sm:$0xff]
    %v272 = vld [vmem:[%s3 + $0x50] sm:$0xff]
    %v273 = vld [vmem:[%s3 + $0x58] sm:$0xff]
    %v274 = vld [vmem:[%s3 + $0x60] sm:$0xff]
    %v275 = vld [vmem:[%s3 + $0x68] sm:$0xff]
    %v276 = vld [vmem:[%s3 + $0x70] sm:$0xff]
    %v277 = vld [vmem:[%s3 + $0x78] sm:$0xff]
    %v278 = vld [vmem:[%s3 + $0x80] sm:$0xff]
    %v279 = vld [vmem:[%s3 + $0x88] sm:$0xff]
    %v280 = vld [vmem:[%s3 + $0x90] sm:$0xff]
    %v281 = vld [vmem:[%s3 + $0x98] sm:$0xff]
    %v282 = vld [vmem:[%s3 + $0xa0] sm:$0xff]
    %v283 = vld [vmem:[%s3 + $0xa8] sm:$0xff]
    %v284 = vld [vmem:[%s3 + $0xb0] sm:$0xff]
    %v285 = vld [vmem:[%s3 + $0xb8] sm:$0xff]
    %v286 = vld [vmem:[%s3 + $0xc0] sm:$0xff]
    %v287 = vld [vmem:[%s3 + $0xc8] sm:$0xff]
    %v288 = vld [vmem:[%s3 + $0xd0] sm:$0xff]
    %v289 = vld [vmem:[%s3 + $0xd8] sm:$0xff]
    %v290 = vld [vmem:[%s3 + $0xe0] sm:$0xff]
    %v291 = vld [vmem:[%s3 + $0xe8] sm:$0xff]
    %v292 = vld [vmem:[%s3 + $0xf0] sm:$0xff]
    %v293 = vld [vmem:[%s3 + $0xf8] sm:$0xff]
    %v294 = vld [vmem:[%s3 + $0x100] sm:$0xff]
    %v295 = vld [vmem:[%s3 + $0x108] sm:$0xff]
    %v296 = vld [vmem:[%s3 + $0x110] sm:$0xff]
    %v297 = vld [vmem:[%s3 + $0x118] sm:$0xff]
    %v298 = vld [vmem:[%s3 + $0x120] sm:$0xff]
    %v299 = vld [vmem:[%s3 + $0x128] sm:$0xff]
    %v300 = vld [vmem:[%s3 + $0x130] sm:$0xff]
    %v301 = vld [vmem:[%s3 + $0x138] sm:$0xff]
    %v302 = vld [vmem:[%s3 + $0x140] sm:$0xff]
    %v303 = vld [vmem:[%s3 + $0x148] sm:$0xff]
    %v304 = vld [vmem:[%s3 + $0x150] sm:$0xff]
    %v305 = vld [vmem:[%s3 + $0x158] sm:$0xff]
    %v306 = vld [vmem:[%s3 + $0x160] sm:$0xff]
    %v307 = vld [vmem:[%s3 + $0x168] sm:$0xff]
    %v308 = vld [vmem:[%s3 + $0x170] sm:$0xff]
    %v309 = vld [vmem:[%s3 + $0x178] sm:$0xff]
    %v310 = vld [vmem:[%s3 + $0x180] sm:$0xff]
    %v311 = vld [vmem:[%s3 + $0x188] sm:$0xff]
    %v312 = vld [vmem:[%s3 + $0x190] sm:$0xff]
    %v313 = vld [vmem:[%s3 + $0x198] sm:$0xff]
    %v314 = vld [vmem:[%s3 + $0x1a0] sm:$0xff]
    %v315 = vld [vmem:[%s3 + $0x1a8] sm:$0xff]
    %v316 = vld [vmem:[%s3 + $0x1b0] sm:$0xff]
    %v317 = vld [vmem:[%s3 + $0x1b8] sm:$0xff]
    %v318 = vld [vmem:[%s3 + $0x1c0] sm:$0xff]
    %v319 = vld [vmem:[%s3 + $0x1c8] sm:$0xff]
    %v320 = vld [vmem:[%s3 + $0x1d0] sm:$0xff]
    %v321 = vld [vmem:[%s3 + $0x1d8] sm:$0xff]
    %v322 = vld [vmem:[%s3 + $0x1e0] sm:$0xff]
    %v323 = vld [vmem:[%s3 + $0x1e8] sm:$0xff]
    %v324 = vld [vmem:[%s3 + $0x1f0] sm:$0xff]
    %v325 = vld [vmem:[%s3 + $0x1f8] sm:$0xff]
    %v326 = vld [vmem:[%s3 + $0x200] sm:$0xff]
    %v327 = vld [vmem:[%s3 + $0x208] sm:$0xff]
    %v328 = vld [vmem:[%s3 + $0x210] sm:$0xff]
    %v329 = vld [vmem:[%s3 + $0x218] sm:$0xff]
    %v330 = vld [vmem:[%s3 + $0x220] sm:$0xff]
    %v331 = vld [vmem:[%s3 + $0x228] sm:$0xff]
    %v332 = vld [vmem:[%s3 + $0x230] sm:$0xff]
    %v333 = vld [vmem:[%s3 + $0x238] sm:$0xff]
    %v334 = vld [vmem:[%s3 + $0x240] sm:$0xff]
    %v335 = vld [vmem:[%s3 + $0x248] sm:$0xff]
    %v336 = vld [vmem:[%s3 + $0x250] sm:$0xff]
    %v337 = vld [vmem:[%s3 + $0x258] sm:$0xff]
    %v338 = vld [vmem:[%s3 + $0x260] sm:$0xff]
    %v339 = vld [vmem:[%s3 + $0x268] sm:$0xff]
    %v340 = vld [vmem:[%s3 + $0x270] sm:$0xff]
    %v341 = vld [vmem:[%s3 + $0x278] sm:$0xff]
    %v342 = vld [vmem:[%s3 + $0x280] sm:$0xff]
    %v343 = vld [vmem:[%s3 + $0x288] sm:$0xff]
    %v344 = vld [vmem:[%s3 + $0x290] sm:$0xff]
    %v345 = vld [vmem:[%s3 + $0x298] sm:$0xff]
    %v346 = vld [vmem:[%s3 + $0x2a0] sm:$0xff]
    %v347 = vld [vmem:[%s3 + $0x2a8] sm:$0xff]
    %v348 = vld [vmem:[%s3 + $0x2b0] sm:$0xff]
    %v349 = vld [vmem:[%s3 + $0x2b8] sm:$0xff]
    %v350 = vld [vmem:[%s3 + $0x2c0] sm:$0xff]
    %v351 = vld [vmem:[%s3 + $0x2c8] sm:$0xff]
    %v352 = vld [vmem:[%s3 + $0x2d0] sm:$0xff]
    %v353 = vld [vmem:[%s3 + $0x2d8] sm:$0xff]
    %v354 = vld [vmem:[%s3 + $0x2e0] sm:$0xff]
    %v355 = vld [vmem:[%s3 + $0x2e8] sm:$0xff]
    %v356 = vld [vmem:[%s3 + $0x2f0] sm:$0xff]
    %v357 = vld [vmem:[%s3 + $0x2f8] sm:$0xff]
    %v358 = vld [vmem:[%s3 + $0x300] sm:$0xff]
    %v359 = vld [vmem:[%s3 + $0x308] sm:$0xff]
    %v360 = vld [vmem:[%s3 + $0x310] sm:$0xff]
    %v361 = vld [vmem:[%s3 + $0x318] sm:$0xff]
    %v362 = vld [vmem:[%s3 + $0x320] sm:$0xff]
    %v363 = vld [vmem:[%s3 + $0x328] sm:$0xff]
    %v364 = vld [vmem:[%s3 + $0x330] sm:$0xff]
    %v365 = vld [vmem:[%s3 + $0x338] sm:$0xff]
    %v366 = vld [vmem:[%s3 + $0x340] sm:$0xff]
    %v367 = vld [vmem:[%s3 + $0x348] sm:$0xff]
    %v368 = vld [vmem:[%s3 + $0x350] sm:$0xff]
    %v369 = vld [vmem:[%s3 + $0x358] sm:$0xff]
    %v370 = vld [vmem:[%s3 + $0x360] sm:$0xff]
    %v371 = vld [vmem:[%s3 + $0x368] sm:$0xff]
    %v372 = vld [vmem:[%s3 + $0x370] sm:$0xff]
    %v373 = vld [vmem:[%s3 + $0x378] sm:$0xff]
    %v374 = vld [vmem:[%s3 + $0x380] sm:$0xff]
    %v375 = vld [vmem:[%s3 + $0x388] sm:$0xff]
    %v376 = vld [vmem:[%s3 + $0x390] sm:$0xff]
    %v377 = vld [vmem:[%s3 + $0x398] sm:$0xff]
    %v378 = vld [vmem:[%s3 + $0x3a0] sm:$0xff]
    %v379 = vld [vmem:[%s3 + $0x3a8] sm:$0xff]
    %v380 = vld [vmem:[%s3 + $0x3b0] sm:$0xff]
    %v381 = vld [vmem:[%s3 + $0x3b8] sm:$0xff]
    %v382 = vld [vmem:[%s3 + $0x3c0] sm:$0xff]
    %v383 = vld [vmem:[%s3 + $0x3c8] sm:$0xff]
    %v384 = vld [vmem:[%s3 + $0x3d0] sm:$0xff]
    %v385 = vld [vmem:[%s3 + $0x3d8] sm:$0xff]
    %v386 = vld [vmem:[%s3 + $0x3e0] sm:$0xff]
    %v387 = vld [vmem:[%s3 + $0x3e8] sm:$0xff]
    %v388 = vld [vmem:[%s3 + $0x3f0] sm:$0xff]
    %v389 = vld [vmem:[%s3 + $0x3f8] sm:$0xff]
    %v390 = vld [vmem:[%s3 + $0x400] sm:$0xff]
    %v391 = vld [vmem:[%s3 + $0x408] sm:$0xff]
    %v392 = vld [vmem:[%s3 + $0x410] sm:$0xff]
    %v393 = vld [vmem:[%s3 + $0x418] sm:$0xff]
    %v394 = vld [vmem:[%s3 + $0x420] sm:$0xff]
    %v395 = vld [vmem:[%s3 + $0x428] sm:$0xff]
    %v396 = vld [vmem:[%s3 + $0x430] sm:$0xff]
    %v397 = vld [vmem:[%s3 + $0x438] sm:$0xff]
    %v398 = vld [vmem:[%s3 + $0x440] sm:$0xff]
    %v399 = vld [vmem:[%s3 + $0x448] sm:$0xff]
    %v400 = vld [vmem:[%s3 + $0x450] sm:$0xff]
    %v401 = vld [vmem:[%s3 + $0x458] sm:$0xff]
    %v402 = vld [vmem:[%s3 + $0x460] sm:$0xff]
    %v403 = vld [vmem:[%s3 + $0x468] sm:$0xff]
    %v404 = vld [vmem:[%s3 + $0x470] sm:$0xff]
    %v405 = vld [vmem:[%s3 + $0x478] sm:$0xff]
    %v406 = vld [vmem:[%s3 + $0x480] sm:$0xff]
    %v407 = vld [vmem:[%s3 + $0x488] sm:$0xff]
    %v408 = vld [vmem:[%s3 + $0x490] sm:$0xff]
    %v409 = vld [vmem:[%s3 + $0x498] sm:$0xff]
    %v410 = vld [vmem:[%s3 + $0x4a0] sm:$0xff]
    %v411 = vld [vmem:[%s3 + $0x4a8] sm:$0xff]
    %v412 = vld [vmem:[%s3 + $0x4b0] sm:$0xff]
    %v413 = vld [vmem:[%s3 + $0x4b8] sm:$0xff]
    %v414 = vld [vmem:[%s3 + $0x4c0] sm:$0xff]
    %v415 = vld [vmem:[%s3 + $0x4c8] sm:$0xff]
    %v416 = vld [vmem:[%s3 + $0x4d0] sm:$0xff]
    %v417 = vld [vmem:[%s3 + $0x4d8] sm:$0xff]
    %v418 = vld [vmem:[%s3 + $0x4e0] sm:$0xff]
    %v419 = vld [vmem:[%s3 + $0x4e8] sm:$0xff]
    %v420 = vld [vmem:[%s3 + $0x4f0] sm:$0xff]
    %v421 = vld [vmem:[%s3 + $0x4f8] sm:$0xff]
    %v422 = vld [vmem:[%s3 + $0x500] sm:$0xff]
    %v423 = vld [vmem:[%s3 + $0x508] sm:$0xff]
    %v424 = vld [vmem:[%s3 + $0x510] sm:$0xff]
    %v425 = vld [vmem:[%s3 + $0x518] sm:$0xff]
    %v426 = vld [vmem:[%s3 + $0x520] sm:$0xff]
    %v427 = vld [vmem:[%s3 + $0x528] sm:$0xff]
    %v428 = vld [vmem:[%s3 + $0x530] sm:$0xff]
    %v429 = vld [vmem:[%s3 + $0x538] sm:$0xff]
    %v430 = vld [vmem:[%s3 + $0x540] sm:$0xff]
    %v431 = vld [vmem:[%s3 + $0x548] sm:$0xff]
    %v432 = vld [vmem:[%s3 + $0x550] sm:$0xff]
    %v433 = vld [vmem:[%s3 + $0x558] sm:$0xff]
    %v434 = vld [vmem:[%s3 + $0x560] sm:$0xff]
    %v435 = vld [vmem:[%s3 + $0x568] sm:$0xff]
    %v436 = vld [vmem:[%s3 + $0x570] sm:$0xff]
    %v437 = vld [vmem:[%s3 + $0x578] sm:$0xff]
    %v438 = vld [vmem:[%s3 + $0x580] sm:$0xff]
    %v439 = vld [vmem:[%s3 + $0x588] sm:$0xff]
    %v440 = vld [vmem:[%s3 + $0x590] sm:$0xff]
    %v441 = vld [vmem:[%s3 + $0x598] sm:$0xff]
    %v442 = vld [vmem:[%s3 + $0x5a0] sm:$0xff]
    %v443 = vld [vmem:[%s3 + $0x5a8] sm:$0xff]
    %v444 = vld [vmem:[%s3 + $0x5b0] sm:$0xff]
    %v445 = vld [vmem:[%s3 + $0x5b8] sm:$0xff]
    %v446 = vld [vmem:[%s3 + $0x5c0] sm:$0xff]
    %v447 = vld [vmem:[%s3 + $0x5c8] sm:$0xff]
    %v448 = vld [vmem:[%s3 + $0x5d0] sm:$0xff]
    %v449 = vld [vmem:[%s3 + $0x5d8] sm:$0xff]
    %v450 = vld [vmem:[%s3 + $0x5e0] sm:$0xff]
    %v451 = vld [vmem:[%s3 + $0x5e8] sm:$0xff]
    %v452 = vld [vmem:[%s3 + $0x5f0] sm:$0xff]
    %v453 = vld [vmem:[%s3 + $0x5f8] sm:$0xff]
    %v454 = vld [vmem:[%s3 + $0x600] sm:$0xff]
    %v455 = vld [vmem:[%s3 + $0x608] sm:$0xff]
    %v456 = vld [vmem:[%s3 + $0x610] sm:$0xff]
    %v457 = vld [vmem:[%s3 + $0x618] sm:$0xff]
    %v458 = vld [vmem:[%s3 + $0x620] sm:$0xff]
    %v459 = vld [vmem:[%s3 + $0x628] sm:$0xff]
    %v460 = vld [vmem:[%s3 + $0x630] sm:$0xff]
    %v461 = vld [vmem:[%s3 + $0x638] sm:$0xff]
    %v462 = vld [vmem:[%s3 + $0x640] sm:$0xff]
    %v463 = vld [vmem:[%s3 + $0x648] sm:$0xff]
    %v464 = vld [vmem:[%s3 + $0x650] sm:$0xff]
    %v465 = vld [vmem:[%s3 + $0x658] sm:$0xff]
    %v466 = vld [vmem:[%s3 + $0x660] sm:$0xff]
    %v467 = vld [vmem:[%s3 + $0x668] sm:$0xff]
    %v468 = vld [vmem:[%s3 + $0x670] sm:$0xff]
    %v469 = vld [vmem:[%s3 + $0x678] sm:$0xff]
    %v470 = vld [vmem:[%s3 + $0x680] sm:$0xff]
    %v471 = vld [vmem:[%s3 + $0x688] sm:$0xff]
    %v472 = vld [vmem:[%s3 + $0x690] sm:$0xff]
    %v473 = vld [vmem:[%s3 + $0x698] sm:$0xff]
    %v474 = vld [vmem:[%s3 + $0x6a0] sm:$0xff]
    %v475 = vld [vmem:[%s3 + $0x6a8] sm:$0xff]
    %v476 = vld [vmem:[%s3 + $0x6b0] sm:$0xff]
    %v477 = vld [vmem:[%s3 + $0x6b8] sm:$0xff]
    %v478 = vld [vmem:[%s3 + $0x6c0] sm:$0xff]
    %v479 = vld [vmem:[%s3 + $0x6c8] sm:$0xff]
    %v480 = vld [vmem:[%s3 + $0x6d0] sm:$0xff]
    %v481 = vld [vmem:[%s3 + $0x6d8] sm:$0xff]
    %v482 = vld [vmem:[%s3 + $0x6e0] sm:$0xff]
    %v483 = vld [vmem:[%s3 + $0x6e8] sm:$0xff]
    %v484 = vld [vmem:[%s3 + $0x6f0] sm:$0xff]
    %v485 = vld [vmem:[%s3 + $0x6f8] sm:$0xff]
    %v486 = vld [vmem:[%s3 + $0x700] sm:$0xff]
    %v487 = vld [vmem:[%s3 + $0x708] sm:$0xff]
    %v488 = vld [vmem:[%s3 + $0x710] sm:$0xff]
    %v489 = vld [vmem:[%s3 + $0x718] sm:$0xff]
    %v490 = vld [vmem:[%s3 + $0x720] sm:$0xff]
    %v491 = vld [vmem:[%s3 + $0x728] sm:$0xff]
    %v492 = vld [vmem:[%s3 + $0x730] sm:$0xff]
    %v493 = vld [vmem:[%s3 + $0x738] sm:$0xff]
    %v494 = vld [vmem:[%s3 + $0x740] sm:$0xff]
    %v495 = vld [vmem:[%s3 + $0x748] sm:$0xff]
    %v496 = vld [vmem:[%s3 + $0x750] sm:$0xff]
    %v497 = vld [vmem:[%s3 + $0x758] sm:$0xff]
    %v498 = vld [vmem:[%s3 + $0x760] sm:$0xff]
    %v499 = vld [vmem:[%s3 + $0x768] sm:$0xff]
    %v500 = vld [vmem:[%s3 + $0x770] sm:$0xff]
    %v501 = vld [vmem:[%s3 + $0x778] sm:$0xff]
    %v502 = vld [vmem:[%s3 + $0x780] sm:$0xff]
    %v503 = vld [vmem:[%s3 + $0x788] sm:$0xff]
    %v504 = vld [vmem:[%s3 + $0x790] sm:$0xff]
    %v505 = vld [vmem:[%s3 + $0x798] sm:$0xff]
    %v506 = vld [vmem:[%s3 + $0x7a0] sm:$0xff]
    %v507 = vld [vmem:[%s3 + $0x7a8] sm:$0xff]
    %v508 = vld [vmem:[%s3 + $0x7b0] sm:$0xff]
    %v509 = vld [vmem:[%s3 + $0x7b8] sm:$0xff]
    %v510 = vld [vmem:[%s3 + $0x7c0] sm:$0xff]
    %v511 = vld [vmem:[%s3 + $0x7c8] sm:$0xff]
    %v512 = vld [vmem:[%s3 + $0x7d0] sm:$0xff]
    %v513 = vld [vmem:[%s3 + $0x7d8] sm:$0xff]
    %v514 = vld [vmem:[%s3 + $0x7e0] sm:$0xff]
    %v515 = vld [vmem:[%s3 + $0x7e8] sm:$0xff]
    %v516 = vld [vmem:[%s3 + $0x7f0] sm:$0xff]
    %v517 = vld [vmem:[%s3 + $0x7f8] sm:$0xff]
    %v518 = vld [vmem:[%s4] sm:$0xf]
    %v520 = vlaneseq
    %v521 = vshrl.u32 %v520, 7
    %v522 = vsub.s32 0, %v521
    %v523 = vrot.slane %v518, %v522
    %v524 = vlaneseq
    %v525 = vshrl.u32 %v524, 7
    %v526 = vsub.s32 1, %v525
    %v527 = vrot.slane %v518, %v526
    %v528 = vlaneseq
    %v529 = vshrl.u32 %v528, 7
    %v530 = vsub.s32 2, %v529
    %v531 = vrot.slane %v518, %v530
    %v532 = vlaneseq
    %v533 = vshrl.u32 %v532, 7
    %v534 = vsub.s32 3, %v533
    %v535 = vrot.slane %v518, %v534
    %540 = vmatprep.subr.mxu0 %v323
    %541 = vmatpush1.msra.mxu0 %v322
    %542 = vmatprep.subr.mxu0 %v319
    %543 = vmatpush1.msra.mxu0 %v318
    %544 = vmatprep.subr.mxu0 %v315
    %545 = vmatpush1.msra.mxu0 %v314
    %546 = vmatprep.subr.mxu0 %v311
    %547 = vmatpush1.msra.mxu0 %v310
    %548 = vmatprep.subr.mxu0 %v307
    %549 = vmatpush1.msra.mxu0 %v306
    %550 = vmatprep.subr.mxu0 %v303
    %551 = vmatpush1.msra.mxu0 %v302
    %552 = vmatprep.subr.mxu0 %v299
    %553 = vmatpush1.msra.mxu0 %v298
    %554 = vmatprep.subr.mxu0 %v295
    %555 = vmatpush1.msra.mxu0 %v294
    %556 = vmatprep.subr.mxu0 %v291
    %557 = vmatpush1.msra.mxu0 %v290
    %558 = vmatprep.subr.mxu0 %v287
    %559 = vmatpush1.msra.mxu0 %v286
    %560 = vmatprep.subr.mxu0 %v283
    %561 = vmatpush1.msra.mxu0 %v282
    %562 = vmatprep.subr.mxu0 %v279
    %563 = vmatpush1.msra.mxu0 %v278
    %564 = vmatprep.subr.mxu0 %v275
    %565 = vmatpush1.msra.mxu0 %v274
    %566 = vmatprep.subr.mxu0 %v271
    %567 = vmatpush1.msra.mxu0 %v270
    %568 = vmatprep.subr.mxu0 %v267
    %569 = vmatpush1.msra.mxu0 %v266
    %570 = vmatprep.subr.mxu0 %v263
    %571 = vmatpush1.msra.mxu0 %v262
    %572 = vmatprep.subr.mxu0 %v387
    %573 = vmatpush2.msra.mxu0 %v386
    %574 = vmatprep.subr.mxu0 %v383
    %575 = vmatpush2.msra.mxu0 %v382
    %576 = vmatprep.subr.mxu0 %v379
    %577 = vmatpush2.msra.mxu0 %v378
    %578 = vmatprep.subr.mxu0 %v375
    %579 = vmatpush2.msra.mxu0 %v374
    %580 = vmatprep.subr.mxu0 %v371
    %581 = vmatpush2.msra.mxu0 %v370
    %582 = vmatprep.subr.mxu0 %v367
    %583 = vmatpush2.msra.mxu0 %v366
    %584 = vmatprep.subr.mxu0 %v363
    %585 = vmatpush2.msra.mxu0 %v362
    %586 = vmatprep.subr.mxu0 %v359
    %587 = vmatpush2.msra.mxu0 %v358
    %588 = vmatprep.subr.mxu0 %v355
    %589 = vmatpush2.msra.mxu0 %v354
    %590 = vmatprep.subr.mxu0 %v351
    %591 = vmatpush2.msra.mxu0 %v350
    %592 = vmatprep.subr.mxu0 %v347
    %593 = vmatpush2.msra.mxu0 %v346
    %594 = vmatprep.subr.mxu0 %v343
    %595 = vmatpush2.msra.mxu0 %v342
    %596 = vmatprep.subr.mxu0 %v339
    %597 = vmatpush2.msra.mxu0 %v338
    %598 = vmatprep.subr.mxu0 %v335
    %599 = vmatpush2.msra.mxu0 %v334
    %600 = vmatprep.subr.mxu0 %v331
    %601 = vmatpush2.msra.mxu0 %v330
    %602 = vmatprep.subr.mxu0 %v327
    %603 = vmatpush2.msra.mxu0 %v326
    %604 = vmatprep.mubr.f32.mxu0 %v189
    %605 = vmatmul.mubr.f32.gmra.mxu0 %v187
    %v606 = vpop.f32.mrf.mxu0
    %v607 = vadd.f32 %v523, %v606
    %v608 = vpop.f32.mrf.mxu0
    %v609 = vadd.f32 %v527, %v608
    %610 = vdwg.mxu0
    %611 = vmatprep.subr.mxu0 %v451
    %612 = vmatpush1.msra.mxu0 %v450
    %613 = vmatprep.subr.mxu0 %v447
    %614 = vmatpush1.msra.mxu0 %v446
    %615 = vmatprep.subr.mxu0 %v443
    %616 = vmatpush1.msra.mxu0 %v442
    %617 = vmatprep.subr.mxu0 %v439
    %618 = vmatpush1.msra.mxu0 %v438
    %619 = vmatprep.subr.mxu0 %v435
    %620 = vmatpush1.msra.mxu0 %v434
    %621 = vmatprep.subr.mxu0 %v431
    %622 = vmatpush1.msra.mxu0 %v430
    %623 = vmatprep.subr.mxu0 %v427
    %624 = vmatpush1.msra.mxu0 %v426
    %625 = vmatprep.subr.mxu0 %v423
    %626 = vmatpush1.msra.mxu0 %v422
    %627 = vmatprep.subr.mxu0 %v419
    %628 = vmatpush1.msra.mxu0 %v418
    %629 = vmatprep.subr.mxu0 %v415
    %630 = vmatpush1.msra.mxu0 %v414
    %631 = vmatprep.subr.mxu0 %v411
    %632 = vmatpush1.msra.mxu0 %v410
    %633 = vmatprep.subr.mxu0 %v407
    %634 = vmatpush1.msra.mxu0 %v406
    %635 = vmatprep.subr.mxu0 %v403
    %636 = vmatpush1.msra.mxu0 %v402
    %637 = vmatprep.subr.mxu0 %v399
    %638 = vmatpush1.msra.mxu0 %v398
    %639 = vmatprep.subr.mxu0 %v395
    %640 = vmatpush1.msra.mxu0 %v394
    %641 = vmatprep.subr.mxu0 %v391
    %642 = vmatpush1.msra.mxu0 %v390
    %643 = vmatprep.subr.mxu0 %v515
    %644 = vmatpush2.msra.mxu0 %v514
    %645 = vmatprep.subr.mxu0 %v511
    %646 = vmatpush2.msra.mxu0 %v510
    %647 = vmatprep.subr.mxu0 %v507
    %648 = vmatpush2.msra.mxu0 %v506
    %649 = vmatprep.subr.mxu0 %v503
    %650 = vmatpush2.msra.mxu0 %v502
    %651 = vmatprep.subr.mxu0 %v499
    %652 = vmatpush2.msra.mxu0 %v498
    %653 = vmatprep.subr.mxu0 %v495
    %654 = vmatpush2.msra.mxu0 %v494
    %655 = vmatprep.subr.mxu0 %v491
    %656 = vmatpush2.msra.mxu0 %v490
    %657 = vmatprep.subr.mxu0 %v487
    %658 = vmatpush2.msra.mxu0 %v486
    %659 = vmatprep.subr.mxu0 %v483
    %660 = vmatpush2.msra.mxu0 %v482
    %661 = vmatprep.subr.mxu0 %v479
    %662 = vmatpush2.msra.mxu0 %v478
    %663 = vmatprep.subr.mxu0 %v475
    %664 = vmatpush2.msra.mxu0 %v474
    %665 = vmatprep.subr.mxu0 %v471
    %666 = vmatpush2.msra.mxu0 %v470
    %667 = vmatprep.subr.mxu0 %v467
    %668 = vmatpush2.msra.mxu0 %v466
    %669 = vmatprep.subr.mxu0 %v463
    %670 = vmatpush2.msra.mxu0 %v462
    %671 = vmatprep.subr.mxu0 %v459
    %672 = vmatpush2.msra.mxu0 %v458
    %673 = vmatprep.subr.mxu0 %v455
    %674 = vmatpush2.msra.mxu0 %v454
    %675 = vmatprep.mubr.f32.mxu0 %v260
    %676 = vmatmul.mubr.f32.gmra.mxu0 %v258
    %v677 = vpop.f32.mrf.mxu0
    %v678 = vadd.f32 %v607, %v677
    %v679 = vpop.f32.mrf.mxu0
    %v680 = vadd.f32 %v609, %v679
    %681 = vdwg.mxu0
    %682 = vmatprep.subr.mxu0 %v325
    %683 = vmatpush1.msra.mxu0 %v324
    %684 = vmatprep.subr.mxu0 %v321
    %685 = vmatpush1.msra.mxu0 %v320
    %686 = vmatprep.subr.mxu0 %v317
    %687 = vmatpush1.msra.mxu0 %v316
    %688 = vmatprep.subr.mxu0 %v313
    %689 = vmatpush1.msra.mxu0 %v312
    %690 = vmatprep.subr.mxu0 %v309
    %691 = vmatpush1.msra.mxu0 %v308
    %692 = vmatprep.subr.mxu0 %v305
    %693 = vmatpush1.msra.mxu0 %v304
    %694 = vmatprep.subr.mxu0 %v301
    %695 = vmatpush1.msra.mxu0 %v300
    %696 = vmatprep.subr.mxu0 %v297
    %697 = vmatpush1.msra.mxu0 %v296
    %698 = vmatprep.subr.mxu0 %v293
    %699 = vmatpush1.msra.mxu0 %v292
    %700 = vmatprep.subr.mxu0 %v289
    %701 = vmatpush1.msra.mxu0 %v288
    %702 = vmatprep.subr.mxu0 %v285
    %703 = vmatpush1.msra.mxu0 %v284
    %704 = vmatprep.subr.mxu0 %v281
    %705 = vmatpush1.msra.mxu0 %v280
    %706 = vmatprep.subr.mxu0 %v277
    %707 = vmatpush1.msra.mxu0 %v276
    %708 = vmatprep.subr.mxu0 %v273
    %709 = vmatpush1.msra.mxu0 %v272
    %710 = vmatprep.subr.mxu0 %v269
    %711 = vmatpush1.msra.mxu0 %v268
    %712 = vmatprep.subr.mxu0 %v265
    %713 = vmatpush1.msra.mxu0 %v264
    %714 = vmatprep.subr.mxu0 %v389
    %715 = vmatpush2.msra.mxu0 %v388
    %716 = vmatprep.subr.mxu0 %v385
    %717 = vmatpush2.msra.mxu0 %v384
    %718 = vmatprep.subr.mxu0 %v381
    %719 = vmatpush2.msra.mxu0 %v380
    %720 = vmatprep.subr.mxu0 %v377
    %721 = vmatpush2.msra.mxu0 %v376
    %722 = vmatprep.subr.mxu0 %v373
    %723 = vmatpush2.msra.mxu0 %v372
    %724 = vmatprep.subr.mxu0 %v369
    %725 = vmatpush2.msra.mxu0 %v368
    %726 = vmatprep.subr.mxu0 %v365
    %727 = vmatpush2.msra.mxu0 %v364
    %728 = vmatprep.subr.mxu0 %v361
    %729 = vmatpush2.msra.mxu0 %v360
    %730 = vmatprep.subr.mxu0 %v357
    %731 = vmatpush2.msra.mxu0 %v356
    %732 = vmatprep.subr.mxu0 %v353
    %733 = vmatpush2.msra.mxu0 %v352
    %734 = vmatprep.subr.mxu0 %v349
    %735 = vmatpush2.msra.mxu0 %v348
    %736 = vmatprep.subr.mxu0 %v345
    %737 = vmatpush2.msra.mxu0 %v344
    %738 = vmatprep.subr.mxu0 %v341
    %739 = vmatpush2.msra.mxu0 %v340
    %740 = vmatprep.subr.mxu0 %v337
    %741 = vmatpush2.msra.mxu0 %v336
    %742 = vmatprep.subr.mxu0 %v333
    %743 = vmatpush2.msra.mxu0 %v332
    %744 = vmatprep.subr.mxu0 %v329
    %745 = vmatpush2.msra.mxu0 %v328
    %746 = vmatprep.mubr.f32.mxu0 %v189
    %747 = vmatmul.mubr.f32.gmra.mxu0 %v187
    %v748 = vpop.f32.mrf.mxu0
    %v749 = vadd.f32 %v531, %v748
    %v750 = vpop.f32.mrf.mxu0
    %v751 = vadd.f32 %v535, %v750
    %752 = vdwg.mxu0
    %753 = vmatprep.subr.mxu0 %v453
    %754 = vmatpush1.msra.mxu0 %v452
    %755 = vmatprep.subr.mxu0 %v449
    %756 = vmatpush1.msra.mxu0 %v448
    %757 = vmatprep.subr.mxu0 %v445
    %758 = vmatpush1.msra.mxu0 %v444
    %759 = vmatprep.subr.mxu0 %v441
    %760 = vmatpush1.msra.mxu0 %v440
    %761 = vmatprep.subr.mxu0 %v437
    %762 = vmatpush1.msra.mxu0 %v436
    %763 = vmatprep.subr.mxu0 %v433
    %764 = vmatpush1.msra.mxu0 %v432
    %765 = vmatprep.subr.mxu0 %v429
    %766 = vmatpush1.msra.mxu0 %v428
    %767 = vmatprep.subr.mxu0 %v425
    %768 = vmatpush1.msra.mxu0 %v424
    %769 = vmatprep.subr.mxu0 %v421
    %770 = vmatpush1.msra.mxu0 %v420
    %771 = vmatprep.subr.mxu0 %v417
    %772 = vmatpush1.msra.mxu0 %v416
    %773 = vmatprep.subr.mxu0 %v413
    %774 = vmatpush1.msra.mxu0 %v412
    %775 = vmatprep.subr.mxu0 %v409
    %776 = vmatpush1.msra.mxu0 %v408
    %777 = vmatprep.subr.mxu0 %v405
    %778 = vmatpush1.msra.mxu0 %v404
    %779 = vmatprep.subr.mxu0 %v401
    %780 = vmatpush1.msra.mxu0 %v400
    %781 = vmatprep.subr.mxu0 %v397
    %782 = vmatpush1.msra.mxu0 %v396
    %783 = vmatprep.subr.mxu0 %v393
    %784 = vmatpush1.msra.mxu0 %v392
    %785 = vmatprep.subr.mxu0 %v517
    %786 = vmatpush2.msra.mxu0 %v516
    %787 = vmatprep.subr.mxu0 %v513
    %788 = vmatpush2.msra.mxu0 %v512
    %789 = vmatprep.subr.mxu0 %v509
    %790 = vmatpush2.msra.mxu0 %v508
    %791 = vmatprep.subr.mxu0 %v505
    %792 = vmatpush2.msra.mxu0 %v504
    %793 = vmatprep.subr.mxu0 %v501
    %794 = vmatpush2.msra.mxu0 %v500
    %795 = vmatprep.subr.mxu0 %v497
    %796 = vmatpush2.msra.mxu0 %v496
    %797 = vmatprep.subr.mxu0 %v493
    %798 = vmatpush2.msra.mxu0 %v492
    %799 = vmatprep.subr.mxu0 %v489
    %800 = vmatpush2.msra.mxu0 %v488
    %801 = vmatprep.subr.mxu0 %v485
    %802 = vmatpush2.msra.mxu0 %v484
    %803 = vmatprep.subr.mxu0 %v481
    %804 = vmatpush2.msra.mxu0 %v480
    %805 = vmatprep.subr.mxu0 %v477
    %806 = vmatpush2.msra.mxu0 %v476
    %807 = vmatprep.subr.mxu0 %v473
    %808 = vmatpush2.msra.mxu0 %v472
    %809 = vmatprep.subr.mxu0 %v469
    %810 = vmatpush2.msra.mxu0 %v468
    %811 = vmatprep.subr.mxu0 %v465
    %812 = vmatpush2.msra.mxu0 %v464
    %813 = vmatprep.subr.mxu0 %v461
    %814 = vmatpush2.msra.mxu0 %v460
    %815 = vmatprep.subr.mxu0 %v457
    %816 = vmatpush2.msra.mxu0 %v456
    %817 = vmatprep.mubr.f32.mxu0 %v260
    %818 = vmatmul.mubr.f32.gmra.mxu0 %v258
    %v819 = vpop.f32.mrf.mxu0
    %v820 = vadd.f32 %v749, %v819
    %v821 = vpop.f32.mrf.mxu0
    %v822 = vadd.f32 %v751, %v821
    %823 = vdwg.mxu0
    %v824 = vmax.f32 %v678, 0.0
    %v825 = vmax.f32 %v680, 0.0
    %v826 = vmax.f32 %v820, 0.0
    %v827 = vmax.f32 %v822, 0.0
    %v828 = vld [vmem:[%s5] sm:$0xf]
    %v830 = vlaneseq
    %v831 = vshrl.u32 %v830, 7
    %v832 = vsub.s32 0, %v831
    %v833 = vrot.slane %v828, %v832
    %v834 = vlaneseq
    %v835 = vshrl.u32 %v834, 7
    %v836 = vsub.s32 1, %v835
    %v837 = vrot.slane %v828, %v836
    %v838 = vlaneseq
    %v839 = vshrl.u32 %v838, 7
    %v840 = vsub.s32 2, %v839
    %v841 = vrot.slane %v828, %v840
    %v842 = vlaneseq
    %v843 = vshrl.u32 %v842, 7
    %v844 = vsub.s32 3, %v843
    %v845 = vrot.slane %v828, %v844
    %v850 = vmul.f32 %v824, %v833
    %v851 = vmul.f32 %v825, %v837
    %v852 = vmul.f32 %v826, %v841
    %v853 = vmul.f32 %v827, %v845
    %v854 = vld [vmem:[%s6] sm:$0xf]
    %v856 = vlaneseq
    %v857 = vshrl.u32 %v856, 7
    %v858 = vsub.s32 0, %v857
    %v859 = vrot.slane %v854, %v858
    %v860 = vlaneseq
    %v861 = vshrl.u32 %v860, 7
    %v862 = vsub.s32 1, %v861
    %v863 = vrot.slane %v854, %v862
    %v864 = vlaneseq
    %v865 = vshrl.u32 %v864, 7
    %v866 = vsub.s32 2, %v865
    %v867 = vrot.slane %v854, %v866
    %v868 = vlaneseq
    %v869 = vshrl.u32 %v868, 7
    %v870 = vsub.s32 3, %v869
    %v871 = vrot.slane %v854, %v870
    %v876 = vadd.f32 %v850, %v859
    %v877 = vadd.f32 %v851, %v863
    %v878 = vadd.f32 %v852, %v867
    %v879 = vadd.f32 %v853, %v871
    %v880 = vadd.f32 %v876, %v187
    %v881 = vadd.f32 %v877, %v189
    %v882 = vadd.f32 %v878, %v258
    %v883 = vadd.f32 %v879, %v260
    %v884 = vld [vmem:[%s7] sm:$0xff]
    %v885 = vld [vmem:[%s7 + $0x8] sm:$0xff]
    %v886 = vld [vmem:[%s7 + $0x10] sm:$0xff]
    %v887 = vld [vmem:[%s7 + $0x18] sm:$0xff]
    %v888 = vld [vmem:[%s7 + $0x20] sm:$0xff]
    %v889 = vld [vmem:[%s7 + $0x28] sm:$0xff]
    %v890 = vld [vmem:[%s7 + $0x30] sm:$0xff]
    %v891 = vld [vmem:[%s7 + $0x38] sm:$0xff]
    %v892 = vld [vmem:[%s7 + $0x40] sm:$0xff]
    %v893 = vld [vmem:[%s7 + $0x48] sm:$0xff]
    %v894 = vld [vmem:[%s7 + $0x50] sm:$0xff]
    %v895 = vld [vmem:[%s7 + $0x58] sm:$0xff]
    %v896 = vld [vmem:[%s7 + $0x60] sm:$0xff]
    %v897 = vld [vmem:[%s7 + $0x68] sm:$0xff]
    %v898 = vld [vmem:[%s7 + $0x70] sm:$0xff]
    %v899 = vld [vmem:[%s7 + $0x78] sm:$0xff]
    %v900 = vld [vmem:[%s7 + $0x80] sm:$0xff]
    %v901 = vld [vmem:[%s7 + $0x88] sm:$0xff]
    %v902 = vld [vmem:[%s7 + $0x90] sm:$0xff]
    %v903 = vld [vmem:[%s7 + $0x98] sm:$0xff]
    %v904 = vld [vmem:[%s7 + $0xa0] sm:$0xff]
    %v905 = vld [vmem:[%s7 + $0xa8] sm:$0xff]
    %v906 = vld [vmem:[%s7 + $0xb0] sm:$0xff]
    %v907 = vld [vmem:[%s7 + $0xb8] sm:$0xff]
    %v908 = vld [vmem:[%s7 + $0xc0] sm:$0xff]
    %v909 = vld [vmem:[%s7 + $0xc8] sm:$0xff]
    %v910 = vld [vmem:[%s7 + $0xd0] sm:$0xff]
    %v911 = vld [vmem:[%s7 + $0xd8] sm:$0xff]
    %v912 = vld [vmem:[%s7 + $0xe0] sm:$0xff]
    %v913 = vld [vmem:[%s7 + $0xe8] sm:$0xff]
    %v914 = vld [vmem:[%s7 + $0xf0] sm:$0xff]
    %v915 = vld [vmem:[%s7 + $0xf8] sm:$0xff]
    %v916 = vld [vmem:[%s7 + $0x100] sm:$0xff]
    %v917 = vld [vmem:[%s7 + $0x108] sm:$0xff]
    %v918 = vld [vmem:[%s7 + $0x110] sm:$0xff]
    %v919 = vld [vmem:[%s7 + $0x118] sm:$0xff]
    %v920 = vld [vmem:[%s7 + $0x120] sm:$0xff]
    %v921 = vld [vmem:[%s7 + $0x128] sm:$0xff]
    %v922 = vld [vmem:[%s7 + $0x130] sm:$0xff]
    %v923 = vld [vmem:[%s7 + $0x138] sm:$0xff]
    %v924 = vld [vmem:[%s7 + $0x140] sm:$0xff]
    %v925 = vld [vmem:[%s7 + $0x148] sm:$0xff]
    %v926 = vld [vmem:[%s7 + $0x150] sm:$0xff]
    %v927 = vld [vmem:[%s7 + $0x158] sm:$0xff]
    %v928 = vld [vmem:[%s7 + $0x160] sm:$0xff]
    %v929 = vld [vmem:[%s7 + $0x168] sm:$0xff]
    %v930 = vld [vmem:[%s7 + $0x170] sm:$0xff]
    %v931 = vld [vmem:[%s7 + $0x178] sm:$0xff]
    %v932 = vld [vmem:[%s7 + $0x180] sm:$0xff]
    %v933 = vld [vmem:[%s7 + $0x188] sm:$0xff]
    %v934 = vld [vmem:[%s7 + $0x190] sm:$0xff]
    %v935 = vld [vmem:[%s7 + $0x198] sm:$0xff]
    %v936 = vld [vmem:[%s7 + $0x1a0] sm:$0xff]
    %v937 = vld [vmem:[%s7 + $0x1a8] sm:$0xff]
    %v938 = vld [vmem:[%s7 + $0x1b0] sm:$0xff]
    %v939 = vld [vmem:[%s7 + $0x1b8] sm:$0xff]
    %v940 = vld [vmem:[%s7 + $0x1c0] sm:$0xff]
    %v941 = vld [vmem:[%s7 + $0x1c8] sm:$0xff]
    %v942 = vld [vmem:[%s7 + $0x1d0] sm:$0xff]
    %v943 = vld [vmem:[%s7 + $0x1d8] sm:$0xff]
    %v944 = vld [vmem:[%s7 + $0x1e0] sm:$0xff]
    %v945 = vld [vmem:[%s7 + $0x1e8] sm:$0xff]
    %v946 = vld [vmem:[%s7 + $0x1f0] sm:$0xff]
    %v947 = vld [vmem:[%s7 + $0x1f8] sm:$0xff]
    %v948 = vld [vmem:[%s7 + $0x200] sm:$0xff]
    %v949 = vld [vmem:[%s7 + $0x208] sm:$0xff]
    %v950 = vld [vmem:[%s7 + $0x210] sm:$0xff]
    %v951 = vld [vmem:[%s7 + $0x218] sm:$0xff]
    %v952 = vld [vmem:[%s7 + $0x220] sm:$0xff]
    %v953 = vld [vmem:[%s7 + $0x228] sm:$0xff]
    %v954 = vld [vmem:[%s7 + $0x230] sm:$0xff]
    %v955 = vld [vmem:[%s7 + $0x238] sm:$0xff]
    %v956 = vld [vmem:[%s7 + $0x240] sm:$0xff]
    %v957 = vld [vmem:[%s7 + $0x248] sm:$0xff]
    %v958 = vld [vmem:[%s7 + $0x250] sm:$0xff]
    %v959 = vld [vmem:[%s7 + $0x258] sm:$0xff]
    %v960 = vld [vmem:[%s7 + $0x260] sm:$0xff]
    %v961 = vld [vmem:[%s7 + $0x268] sm:$0xff]
    %v962 = vld [vmem:[%s7 + $0x270] sm:$0xff]
    %v963 = vld [vmem:[%s7 + $0x278] sm:$0xff]
    %v964 = vld [vmem:[%s7 + $0x280] sm:$0xff]
    %v965 = vld [vmem:[%s7 + $0x288] sm:$0xff]
    %v966 = vld [vmem:[%s7 + $0x290] sm:$0xff]
    %v967 = vld [vmem:[%s7 + $0x298] sm:$0xff]
    %v968 = vld [vmem:[%s7 + $0x2a0] sm:$0xff]
    %v969 = vld [vmem:[%s7 + $0x2a8] sm:$0xff]
    %v970 = vld [vmem:[%s7 + $0x2b0] sm:$0xff]
    %v971 = vld [vmem:[%s7 + $0x2b8] sm:$0xff]
    %v972 = vld [vmem:[%s7 + $0x2c0] sm:$0xff]
    %v973 = vld [vmem:[%s7 + $0x2c8] sm:$0xff]
    %v974 = vld [vmem:[%s7 + $0x2d0] sm:$0xff]
    %v975 = vld [vmem:[%s7 + $0x2d8] sm:$0xff]
    %v976 = vld [vmem:[%s7 + $0x2e0] sm:$0xff]
    %v977 = vld [vmem:[%s7 + $0x2e8] sm:$0xff]
    %v978 = vld [vmem:[%s7 + $0x2f0] sm:$0xff]
    %v979 = vld [vmem:[%s7 + $0x2f8] sm:$0xff]
    %v980 = vld [vmem:[%s7 + $0x300] sm:$0xff]
    %v981 = vld [vmem:[%s7 + $0x308] sm:$0xff]
    %v982 = vld [vmem:[%s7 + $0x310] sm:$0xff]
    %v983 = vld [vmem:[%s7 + $0x318] sm:$0xff]
    %v984 = vld [vmem:[%s7 + $0x320] sm:$0xff]
    %v985 = vld [vmem:[%s7 + $0x328] sm:$0xff]
    %v986 = vld [vmem:[%s7 + $0x330] sm:$0xff]
    %v987 = vld [vmem:[%s7 + $0x338] sm:$0xff]
    %v988 = vld [vmem:[%s7 + $0x340] sm:$0xff]
    %v989 = vld [vmem:[%s7 + $0x348] sm:$0xff]
    %v990 = vld [vmem:[%s7 + $0x350] sm:$0xff]
    %v991 = vld [vmem:[%s7 + $0x358] sm:$0xff]
    %v992 = vld [vmem:[%s7 + $0x360] sm:$0xff]
    %v993 = vld [vmem:[%s7 + $0x368] sm:$0xff]
    %v994 = vld [vmem:[%s7 + $0x370] sm:$0xff]
    %v995 = vld [vmem:[%s7 + $0x378] sm:$0xff]
    %v996 = vld [vmem:[%s7 + $0x380] sm:$0xff]
    %v997 = vld [vmem:[%s7 + $0x388] sm:$0xff]
    %v998 = vld [vmem:[%s7 + $0x390] sm:$0xff]
    %v999 = vld [vmem:[%s7 + $0x398] sm:$0xff]
    %v1000 = vld [vmem:[%s7 + $0x3a0] sm:$0xff]
    %v1001 = vld [vmem:[%s7 + $0x3a8] sm:$0xff]
    %v1002 = vld [vmem:[%s7 + $0x3b0] sm:$0xff]
    %v1003 = vld [vmem:[%s7 + $0x3b8] sm:$0xff]
    %v1004 = vld [vmem:[%s7 + $0x3c0] sm:$0xff]
    %v1005 = vld [vmem:[%s7 + $0x3c8] sm:$0xff]
    %v1006 = vld [vmem:[%s7 + $0x3d0] sm:$0xff]
    %v1007 = vld [vmem:[%s7 + $0x3d8] sm:$0xff]
    %v1008 = vld [vmem:[%s7 + $0x3e0] sm:$0xff]
    %v1009 = vld [vmem:[%s7 + $0x3e8] sm:$0xff]
    %v1010 = vld [vmem:[%s7 + $0x3f0] sm:$0xff]
    %v1011 = vld [vmem:[%s7 + $0x3f8] sm:$0xff]
    %v1012 = vld [vmem:[%s7 + $0x400] sm:$0xff]
    %v1013 = vld [vmem:[%s7 + $0x408] sm:$0xff]
    %v1014 = vld [vmem:[%s7 + $0x410] sm:$0xff]
    %v1015 = vld [vmem:[%s7 + $0x418] sm:$0xff]
    %v1016 = vld [vmem:[%s7 + $0x420] sm:$0xff]
    %v1017 = vld [vmem:[%s7 + $0x428] sm:$0xff]
    %v1018 = vld [vmem:[%s7 + $0x430] sm:$0xff]
    %v1019 = vld [vmem:[%s7 + $0x438] sm:$0xff]
    %v1020 = vld [vmem:[%s7 + $0x440] sm:$0xff]
    %v1021 = vld [vmem:[%s7 + $0x448] sm:$0xff]
    %v1022 = vld [vmem:[%s7 + $0x450] sm:$0xff]
    %v1023 = vld [vmem:[%s7 + $0x458] sm:$0xff]
    %v1024 = vld [vmem:[%s7 + $0x460] sm:$0xff]
    %v1025 = vld [vmem:[%s7 + $0x468] sm:$0xff]
    %v1026 = vld [vmem:[%s7 + $0x470] sm:$0xff]
    %v1027 = vld [vmem:[%s7 + $0x478] sm:$0xff]
    %v1028 = vld [vmem:[%s7 + $0x480] sm:$0xff]
    %v1029 = vld [vmem:[%s7 + $0x488] sm:$0xff]
    %v1030 = vld [vmem:[%s7 + $0x490] sm:$0xff]
    %v1031 = vld [vmem:[%s7 + $0x498] sm:$0xff]
    %v1032 = vld [vmem:[%s7 + $0x4a0] sm:$0xff]
    %v1033 = vld [vmem:[%s7 + $0x4a8] sm:$0xff]
    %v1034 = vld [vmem:[%s7 + $0x4b0] sm:$0xff]
    %v1035 = vld [vmem:[%s7 + $0x4b8] sm:$0xff]
    %v1036 = vld [vmem:[%s7 + $0x4c0] sm:$0xff]
    %v1037 = vld [vmem:[%s7 + $0x4c8] sm:$0xff]
    %v1038 = vld [vmem:[%s7 + $0x4d0] sm:$0xff]
    %v1039 = vld [vmem:[%s7 + $0x4d8] sm:$0xff]
    %v1040 = vld [vmem:[%s7 + $0x4e0] sm:$0xff]
    %v1041 = vld [vmem:[%s7 + $0x4e8] sm:$0xff]
    %v1042 = vld [vmem:[%s7 + $0x4f0] sm:$0xff]
    %v1043 = vld [vmem:[%s7 + $0x4f8] sm:$0xff]
    %v1044 = vld [vmem:[%s7 + $0x500] sm:$0xff]
    %v1045 = vld [vmem:[%s7 + $0x508] sm:$0xff]
    %v1046 = vld [vmem:[%s7 + $0x510] sm:$0xff]
    %v1047 = vld [vmem:[%s7 + $0x518] sm:$0xff]
    %v1048 = vld [vmem:[%s7 + $0x520] sm:$0xff]
    %v1049 = vld [vmem:[%s7 + $0x528] sm:$0xff]
    %v1050 = vld [vmem:[%s7 + $0x530] sm:$0xff]
    %v1051 = vld [vmem:[%s7 + $0x538] sm:$0xff]
    %v1052 = vld [vmem:[%s7 + $0x540] sm:$0xff]
    %v1053 = vld [vmem:[%s7 + $0x548] sm:$0xff]
    %v1054 = vld [vmem:[%s7 + $0x550] sm:$0xff]
    %v1055 = vld [vmem:[%s7 + $0x558] sm:$0xff]
    %v1056 = vld [vmem:[%s7 + $0x560] sm:$0xff]
    %v1057 = vld [vmem:[%s7 + $0x568] sm:$0xff]
    %v1058 = vld [vmem:[%s7 + $0x570] sm:$0xff]
    %v1059 = vld [vmem:[%s7 + $0x578] sm:$0xff]
    %v1060 = vld [vmem:[%s7 + $0x580] sm:$0xff]
    %v1061 = vld [vmem:[%s7 + $0x588] sm:$0xff]
    %v1062 = vld [vmem:[%s7 + $0x590] sm:$0xff]
    %v1063 = vld [vmem:[%s7 + $0x598] sm:$0xff]
    %v1064 = vld [vmem:[%s7 + $0x5a0] sm:$0xff]
    %v1065 = vld [vmem:[%s7 + $0x5a8] sm:$0xff]
    %v1066 = vld [vmem:[%s7 + $0x5b0] sm:$0xff]
    %v1067 = vld [vmem:[%s7 + $0x5b8] sm:$0xff]
    %v1068 = vld [vmem:[%s7 + $0x5c0] sm:$0xff]
    %v1069 = vld [vmem:[%s7 + $0x5c8] sm:$0xff]
    %v1070 = vld [vmem:[%s7 + $0x5d0] sm:$0xff]
    %v1071 = vld [vmem:[%s7 + $0x5d8] sm:$0xff]
    %v1072 = vld [vmem:[%s7 + $0x5e0] sm:$0xff]
    %v1073 = vld [vmem:[%s7 + $0x5e8] sm:$0xff]
    %v1074 = vld [vmem:[%s7 + $0x5f0] sm:$0xff]
    %v1075 = vld [vmem:[%s7 + $0x5f8] sm:$0xff]
    %v1076 = vld [vmem:[%s7 + $0x600] sm:$0xff]
    %v1077 = vld [vmem:[%s7 + $0x608] sm:$0xff]
    %v1078 = vld [vmem:[%s7 + $0x610] sm:$0xff]
    %v1079 = vld [vmem:[%s7 + $0x618] sm:$0xff]
    %v1080 = vld [vmem:[%s7 + $0x620] sm:$0xff]
    %v1081 = vld [vmem:[%s7 + $0x628] sm:$0xff]
    %v1082 = vld [vmem:[%s7 + $0x630] sm:$0xff]
    %v1083 = vld [vmem:[%s7 + $0x638] sm:$0xff]
    %v1084 = vld [vmem:[%s7 + $0x640] sm:$0xff]
    %v1085 = vld [vmem:[%s7 + $0x648] sm:$0xff]
    %v1086 = vld [vmem:[%s7 + $0x650] sm:$0xff]
    %v1087 = vld [vmem:[%s7 + $0x658] sm:$0xff]
    %v1088 = vld [vmem:[%s7 + $0x660] sm:$0xff]
    %v1089 = vld [vmem:[%s7 + $0x668] sm:$0xff]
    %v1090 = vld [vmem:[%s7 + $0x670] sm:$0xff]
    %v1091 = vld [vmem:[%s7 + $0x678] sm:$0xff]
    %v1092 = vld [vmem:[%s7 + $0x680] sm:$0xff]
    %v1093 = vld [vmem:[%s7 + $0x688] sm:$0xff]
    %v1094 = vld [vmem:[%s7 + $0x690] sm:$0xff]
    %v1095 = vld [vmem:[%s7 + $0x698] sm:$0xff]
    %v1096 = vld [vmem:[%s7 + $0x6a0] sm:$0xff]
    %v1097 = vld [vmem:[%s7 + $0x6a8] sm:$0xff]
    %v1098 = vld [vmem:[%s7 + $0x6b0] sm:$0xff]
    %v1099 = vld [vmem:[%s7 + $0x6b8] sm:$0xff]
    %v1100 = vld [vmem:[%s7 + $0x6c0] sm:$0xff]
    %v1101 = vld [vmem:[%s7 + $0x6c8] sm:$0xff]
    %v1102 = vld [vmem:[%s7 + $0x6d0] sm:$0xff]
    %v1103 = vld [vmem:[%s7 + $0x6d8] sm:$0xff]
    %v1104 = vld [vmem:[%s7 + $0x6e0] sm:$0xff]
    %v1105 = vld [vmem:[%s7 + $0x6e8] sm:$0xff]
    %v1106 = vld [vmem:[%s7 + $0x6f0] sm:$0xff]
    %v1107 = vld [vmem:[%s7 + $0x6f8] sm:$0xff]
    %v1108 = vld [vmem:[%s7 + $0x700] sm:$0xff]
    %v1109 = vld [vmem:[%s7 + $0x708] sm:$0xff]
    %v1110 = vld [vmem:[%s7 + $0x710] sm:$0xff]
    %v1111 = vld [vmem:[%s7 + $0x718] sm:$0xff]
    %v1112 = vld [vmem:[%s7 + $0x720] sm:$0xff]
    %v1113 = vld [vmem:[%s7 + $0x728] sm:$0xff]
    %v1114 = vld [vmem:[%s7 + $0x730] sm:$0xff]
    %v1115 = vld [vmem:[%s7 + $0x738] sm:$0xff]
    %v1116 = vld [vmem:[%s7 + $0x740] sm:$0xff]
    %v1117 = vld [vmem:[%s7 + $0x748] sm:$0xff]
    %v1118 = vld [vmem:[%s7 + $0x750] sm:$0xff]
    %v1119 = vld [vmem:[%s7 + $0x758] sm:$0xff]
    %v1120 = vld [vmem:[%s7 + $0x760] sm:$0xff]
    %v1121 = vld [vmem:[%s7 + $0x768] sm:$0xff]
    %v1122 = vld [vmem:[%s7 + $0x770] sm:$0xff]
    %v1123 = vld [vmem:[%s7 + $0x778] sm:$0xff]
    %v1124 = vld [vmem:[%s7 + $0x780] sm:$0xff]
    %v1125 = vld [vmem:[%s7 + $0x788] sm:$0xff]
    %v1126 = vld [vmem:[%s7 + $0x790] sm:$0xff]
    %v1127 = vld [vmem:[%s7 + $0x798] sm:$0xff]
    %v1128 = vld [vmem:[%s7 + $0x7a0] sm:$0xff]
    %v1129 = vld [vmem:[%s7 + $0x7a8] sm:$0xff]
    %v1130 = vld [vmem:[%s7 + $0x7b0] sm:$0xff]
    %v1131 = vld [vmem:[%s7 + $0x7b8] sm:$0xff]
    %v1132 = vld [vmem:[%s7 + $0x7c0] sm:$0xff]
    %v1133 = vld [vmem:[%s7 + $0x7c8] sm:$0xff]
    %v1134 = vld [vmem:[%s7 + $0x7d0] sm:$0xff]
    %v1135 = vld [vmem:[%s7 + $0x7d8] sm:$0xff]
    %v1136 = vld [vmem:[%s7 + $0x7e0] sm:$0xff]
    %v1137 = vld [vmem:[%s7 + $0x7e8] sm:$0xff]
    %v1138 = vld [vmem:[%s7 + $0x7f0] sm:$0xff]
    %v1139 = vld [vmem:[%s7 + $0x7f8] sm:$0xff]
    %v1140 = vld [vmem:[%s8] sm:$0xf]
    %v1142 = vlaneseq
    %v1143 = vshrl.u32 %v1142, 7
    %v1144 = vsub.s32 0, %v1143
    %v1145 = vrot.slane %v1140, %v1144
    %v1146 = vlaneseq
    %v1147 = vshrl.u32 %v1146, 7
    %v1148 = vsub.s32 1, %v1147
    %v1149 = vrot.slane %v1140, %v1148
    %v1150 = vlaneseq
    %v1151 = vshrl.u32 %v1150, 7
    %v1152 = vsub.s32 2, %v1151
    %v1153 = vrot.slane %v1140, %v1152
    %v1154 = vlaneseq
    %v1155 = vshrl.u32 %v1154, 7
    %v1156 = vsub.s32 3, %v1155
    %v1157 = vrot.slane %v1140, %v1156
    %1162 = vmatprep.subr.mxu0 %v945
    %1163 = vmatpush1.msra.mxu0 %v944
    %1164 = vmatprep.subr.mxu0 %v941
    %1165 = vmatpush1.msra.mxu0 %v940
    %1166 = vmatprep.subr.mxu0 %v937
    %1167 = vmatpush1.msra.mxu0 %v936
    %1168 = vmatprep.subr.mxu0 %v933
    %1169 = vmatpush1.msra.mxu0 %v932
    %1170 = vmatprep.subr.mxu0 %v929
    %1171 = vmatpush1.msra.mxu0 %v928
    %1172 = vmatprep.subr.mxu0 %v925
    %1173 = vmatpush1.msra.mxu0 %v924
    %1174 = vmatprep.subr.mxu0 %v921
    %1175 = vmatpush1.msra.mxu0 %v920
    %1176 = vmatprep.subr.mxu0 %v917
    %1177 = vmatpush1.msra.mxu0 %v916
    %1178 = vmatprep.subr.mxu0 %v913
    %1179 = vmatpush1.msra.mxu0 %v912
    %1180 = vmatprep.subr.mxu0 %v909
    %1181 = vmatpush1.msra.mxu0 %v908
    %1182 = vmatprep.subr.mxu0 %v905
    %1183 = vmatpush1.msra.mxu0 %v904
    %1184 = vmatprep.subr.mxu0 %v901
    %1185 = vmatpush1.msra.mxu0 %v900
    %1186 = vmatprep.subr.mxu0 %v897
    %1187 = vmatpush1.msra.mxu0 %v896
    %1188 = vmatprep.subr.mxu0 %v893
    %1189 = vmatpush1.msra.mxu0 %v892
    %1190 = vmatprep.subr.mxu0 %v889
    %1191 = vmatpush1.msra.mxu0 %v888
    %1192 = vmatprep.subr.mxu0 %v885
    %1193 = vmatpush1.msra.mxu0 %v884
    %1194 = vmatprep.subr.mxu0 %v1009
    %1195 = vmatpush2.msra.mxu0 %v1008
    %1196 = vmatprep.subr.mxu0 %v1005
    %1197 = vmatpush2.msra.mxu0 %v1004
    %1198 = vmatprep.subr.mxu0 %v1001
    %1199 = vmatpush2.msra.mxu0 %v1000
    %1200 = vmatprep.subr.mxu0 %v997
    %1201 = vmatpush2.msra.mxu0 %v996
    %1202 = vmatprep.subr.mxu0 %v993
    %1203 = vmatpush2.msra.mxu0 %v992
    %1204 = vmatprep.subr.mxu0 %v989
    %1205 = vmatpush2.msra.mxu0 %v988
    %1206 = vmatprep.subr.mxu0 %v985
    %1207 = vmatpush2.msra.mxu0 %v984
    %1208 = vmatprep.subr.mxu0 %v981
    %1209 = vmatpush2.msra.mxu0 %v980
    %1210 = vmatprep.subr.mxu0 %v977
    %1211 = vmatpush2.msra.mxu0 %v976
    %1212 = vmatprep.subr.mxu0 %v973
    %1213 = vmatpush2.msra.mxu0 %v972
    %1214 = vmatprep.subr.mxu0 %v969
    %1215 = vmatpush2.msra.mxu0 %v968
    %1216 = vmatprep.subr.mxu0 %v965
    %1217 = vmatpush2.msra.mxu0 %v964
    %1218 = vmatprep.subr.mxu0 %v961
    %1219 = vmatpush2.msra.mxu0 %v960
    %1220 = vmatprep.subr.mxu0 %v957
    %1221 = vmatpush2.msra.mxu0 %v956
    %1222 = vmatprep.subr.mxu0 %v953
    %1223 = vmatpush2.msra.mxu0 %v952
    %1224 = vmatprep.subr.mxu0 %v949
    %1225 = vmatpush2.msra.mxu0 %v948
    %1226 = vmatprep.mubr.f32.mxu0 %v881
    %1227 = vmatmul.mubr.f32.gmra.mxu0 %v880
    %v1228 = vpop.f32.mrf.mxu0
    %v1229 = vadd.f32 %v1145, %v1228
    %v1230 = vpop.f32.mrf.mxu0
    %v1231 = vadd.f32 %v1149, %v1230
    %1232 = vdwg.mxu0
    %1233 = vmatprep.subr.mxu0 %v1073
    %1234 = vmatpush1.msra.mxu0 %v1072
    %1235 = vmatprep.subr.mxu0 %v1069
    %1236 = vmatpush1.msra.mxu0 %v1068
    %1237 = vmatprep.subr.mxu0 %v1065
    %1238 = vmatpush1.msra.mxu0 %v1064
    %1239 = vmatprep.subr.mxu0 %v1061
    %1240 = vmatpush1.msra.mxu0 %v1060
    %1241 = vmatprep.subr.mxu0 %v1057
    %1242 = vmatpush1.msra.mxu0 %v1056
    %1243 = vmatprep.subr.mxu0 %v1053
    %1244 = vmatpush1.msra.mxu0 %v1052
    %1245 = vmatprep.subr.mxu0 %v1049
    %1246 = vmatpush1.msra.mxu0 %v1048
    %1247 = vmatprep.subr.mxu0 %v1045
    %1248 = vmatpush1.msra.mxu0 %v1044
    %1249 = vmatprep.subr.mxu0 %v1041
    %1250 = vmatpush1.msra.mxu0 %v1040
    %1251 = vmatprep.subr.mxu0 %v1037
    %1252 = vmatpush1.msra.mxu0 %v1036
    %1253 = vmatprep.subr.mxu0 %v1033
    %1254 = vmatpush1.msra.mxu0 %v1032
    %1255 = vmatprep.subr.mxu0 %v1029
    %1256 = vmatpush1.msra.mxu0 %v1028
    %1257 = vmatprep.subr.mxu0 %v1025
    %1258 = vmatpush1.msra.mxu0 %v1024
    %1259 = vmatprep.subr.mxu0 %v1021
    %1260 = vmatpush1.msra.mxu0 %v1020
    %1261 = vmatprep.subr.mxu0 %v1017
    %1262 = vmatpush1.msra.mxu0 %v1016
    %1263 = vmatprep.subr.mxu0 %v1013
    %1264 = vmatpush1.msra.mxu0 %v1012
    %1265 = vmatprep.subr.mxu0 %v1137
    %1266 = vmatpush2.msra.mxu0 %v1136
    %1267 = vmatprep.subr.mxu0 %v1133
    %1268 = vmatpush2.msra.mxu0 %v1132
    %1269 = vmatprep.subr.mxu0 %v1129
    %1270 = vmatpush2.msra.mxu0 %v1128
    %1271 = vmatprep.subr.mxu0 %v1125
    %1272 = vmatpush2.msra.mxu0 %v1124
    %1273 = vmatprep.subr.mxu0 %v1121
    %1274 = vmatpush2.msra.mxu0 %v1120
    %1275 = vmatprep.subr.mxu0 %v1117
    %1276 = vmatpush2.msra.mxu0 %v1116
    %1277 = vmatprep.subr.mxu0 %v1113
    %1278 = vmatpush2.msra.mxu0 %v1112
    %1279 = vmatprep.subr.mxu0 %v1109
    %1280 = vmatpush2.msra.mxu0 %v1108
    %1281 = vmatprep.subr.mxu0 %v1105
    %1282 = vmatpush2.msra.mxu0 %v1104
    %1283 = vmatprep.subr.mxu0 %v1101
    %1284 = vmatpush2.msra.mxu0 %v1100
    %1285 = vmatprep.subr.mxu0 %v1097
    %1286 = vmatpush2.msra.mxu0 %v1096
    %1287 = vmatprep.subr.mxu0 %v1093
    %1288 = vmatpush2.msra.mxu0 %v1092
    %1289 = vmatprep.subr.mxu0 %v1089
    %1290 = vmatpush2.msra.mxu0 %v1088
    %1291 = vmatprep.subr.mxu0 %v1085
    %1292 = vmatpush2.msra.mxu0 %v1084
    %1293 = vmatprep.subr.mxu0 %v1081
    %1294 = vmatpush2.msra.mxu0 %v1080
    %1295 = vmatprep.subr.mxu0 %v1077
    %1296 = vmatpush2.msra.mxu0 %v1076
    %1297 = vmatprep.mubr.f32.mxu0 %v883
    %1298 = vmatmul.mubr.f32.gmra.mxu0 %v882
    %v1299 = vpop.f32.mrf.mxu0
    %v1300 = vadd.f32 %v1229, %v1299
    %v1301 = vpop.f32.mrf.mxu0
    %v1302 = vadd.f32 %v1231, %v1301
    %1303 = vdwg.mxu0
    %1304 = vmatprep.subr.mxu0 %v947
    %1305 = vmatpush1.msra.mxu0 %v946
    %1306 = vmatprep.subr.mxu0 %v943
    %1307 = vmatpush1.msra.mxu0 %v942
    %1308 = vmatprep.subr.mxu0 %v939
    %1309 = vmatpush1.msra.mxu0 %v938
    %1310 = vmatprep.subr.mxu0 %v935
    %1311 = vmatpush1.msra.mxu0 %v934
    %1312 = vmatprep.subr.mxu0 %v931
    %1313 = vmatpush1.msra.mxu0 %v930
    %1314 = vmatprep.subr.mxu0 %v927
    %1315 = vmatpush1.msra.mxu0 %v926
    %1316 = vmatprep.subr.mxu0 %v923
    %1317 = vmatpush1.msra.mxu0 %v922
    %1318 = vmatprep.subr.mxu0 %v919
    %1319 = vmatpush1.msra.mxu0 %v918
    %1320 = vmatprep.subr.mxu0 %v915
    %1321 = vmatpush1.msra.mxu0 %v914
    %1322 = vmatprep.subr.mxu0 %v911
    %1323 = vmatpush1.msra.mxu0 %v910
    %1324 = vmatprep.subr.mxu0 %v907
    %1325 = vmatpush1.msra.mxu0 %v906
    %1326 = vmatprep.subr.mxu0 %v903
    %1327 = vmatpush1.msra.mxu0 %v902
    %1328 = vmatprep.subr.mxu0 %v899
    %1329 = vmatpush1.msra.mxu0 %v898
    %1330 = vmatprep.subr.mxu0 %v895
    %1331 = vmatpush1.msra.mxu0 %v894
    %1332 = vmatprep.subr.mxu0 %v891
    %1333 = vmatpush1.msra.mxu0 %v890
    %1334 = vmatprep.subr.mxu0 %v887
    %1335 = vmatpush1.msra.mxu0 %v886
    %1336 = vmatprep.subr.mxu0 %v1011
    %1337 = vmatpush2.msra.mxu0 %v1010
    %1338 = vmatprep.subr.mxu0 %v1007
    %1339 = vmatpush2.msra.mxu0 %v1006
    %1340 = vmatprep.subr.mxu0 %v1003
    %1341 = vmatpush2.msra.mxu0 %v1002
    %1342 = vmatprep.subr.mxu0 %v999
    %1343 = vmatpush2.msra.mxu0 %v998
    %1344 = vmatprep.subr.mxu0 %v995
    %1345 = vmatpush2.msra.mxu0 %v994
    %1346 = vmatprep.subr.mxu0 %v991
    %1347 = vmatpush2.msra.mxu0 %v990
    %1348 = vmatprep.subr.mxu0 %v987
    %1349 = vmatpush2.msra.mxu0 %v986
    %1350 = vmatprep.subr.mxu0 %v983
    %1351 = vmatpush2.msra.mxu0 %v982
    %1352 = vmatprep.subr.mxu0 %v979
    %1353 = vmatpush2.msra.mxu0 %v978
    %1354 = vmatprep.subr.mxu0 %v975
    %1355 = vmatpush2.msra.mxu0 %v974
    %1356 = vmatprep.subr.mxu0 %v971
    %1357 = vmatpush2.msra.mxu0 %v970
    %1358 = vmatprep.subr.mxu0 %v967
    %1359 = vmatpush2.msra.mxu0 %v966
    %1360 = vmatprep.subr.mxu0 %v963
    %1361 = vmatpush2.msra.mxu0 %v962
    %1362 = vmatprep.subr.mxu0 %v959
    %1363 = vmatpush2.msra.mxu0 %v958
    %1364 = vmatprep.subr.mxu0 %v955
    %1365 = vmatpush2.msra.mxu0 %v954
    %1366 = vmatprep.subr.mxu0 %v951
    %1367 = vmatpush2.msra.mxu0 %v950
    %1368 = vmatprep.mubr.f32.mxu0 %v881
    %1369 = vmatmul.mubr.f32.gmra.mxu0 %v880
    %v1370 = vpop.f32.mrf.mxu0
    %v1371 = vadd.f32 %v1153, %v1370
    %v1372 = vpop.f32.mrf.mxu0
    %v1373 = vadd.f32 %v1157, %v1372
    %1374 = vdwg.mxu0
    %1375 = vmatprep.subr.mxu0 %v1075
    %1376 = vmatpush1.msra.mxu0 %v1074
    %1377 = vmatprep.subr.mxu0 %v1071
    %1378 = vmatpush1.msra.mxu0 %v1070
    %1379 = vmatprep.subr.mxu0 %v1067
    %1380 = vmatpush1.msra.mxu0 %v1066
    %1381 = vmatprep.subr.mxu0 %v1063
    %1382 = vmatpush1.msra.mxu0 %v1062
    %1383 = vmatprep.subr.mxu0 %v1059
    %1384 = vmatpush1.msra.mxu0 %v1058
    %1385 = vmatprep.subr.mxu0 %v1055
    %1386 = vmatpush1.msra.mxu0 %v1054
    %1387 = vmatprep.subr.mxu0 %v1051
    %1388 = vmatpush1.msra.mxu0 %v1050
    %1389 = vmatprep.subr.mxu0 %v1047
    %1390 = vmatpush1.msra.mxu0 %v1046
    %1391 = vmatprep.subr.mxu0 %v1043
    %1392 = vmatpush1.msra.mxu0 %v1042
    %1393 = vmatprep.subr.mxu0 %v1039
    %1394 = vmatpush1.msra.mxu0 %v1038
    %1395 = vmatprep.subr.mxu0 %v1035
    %1396 = vmatpush1.msra.mxu0 %v1034
    %1397 = vmatprep.subr.mxu0 %v1031
    %1398 = vmatpush1.msra.mxu0 %v1030
    %1399 = vmatprep.subr.mxu0 %v1027
    %1400 = vmatpush1.msra.mxu0 %v1026
    %1401 = vmatprep.subr.mxu0 %v1023
    %1402 = vmatpush1.msra.mxu0 %v1022
    %1403 = vmatprep.subr.mxu0 %v1019
    %1404 = vmatpush1.msra.mxu0 %v1018
    %1405 = vmatprep.subr.mxu0 %v1015
    %1406 = vmatpush1.msra.mxu0 %v1014
    %1407 = vmatprep.subr.mxu0 %v1139
    %1408 = vmatpush2.msra.mxu0 %v1138
    %1409 = vmatprep.subr.mxu0 %v1135
    %1410 = vmatpush2.msra.mxu0 %v1134
    %1411 = vmatprep.subr.mxu0 %v1131
    %1412 = vmatpush2.msra.mxu0 %v1130
    %1413 = vmatprep.subr.mxu0 %v1127
    %1414 = vmatpush2.msra.mxu0 %v1126
    %1415 = vmatprep.subr.mxu0 %v1123
    %1416 = vmatpush2.msra.mxu0 %v1122
    %1417 = vmatprep.subr.mxu0 %v1119
    %1418 = vmatpush2.msra.mxu0 %v1118
    %1419 = vmatprep.subr.mxu0 %v1115
    %1420 = vmatpush2.msra.mxu0 %v1114
    %1421 = vmatprep.subr.mxu0 %v1111
    %1422 = vmatpush2.msra.mxu0 %v1110
    %1423 = vmatprep.subr.mxu0 %v1107
    %1424 = vmatpush2.msra.mxu0 %v1106
    %1425 = vmatprep.subr.mxu0 %v1103
    %1426 = vmatpush2.msra.mxu0 %v1102
    %1427 = vmatprep.subr.mxu0 %v1099
    %1428 = vmatpush2.msra.mxu0 %v1098
    %1429 = vmatprep.subr.mxu0 %v1095
    %1430 = vmatpush2.msra.mxu0 %v1094
    %1431 = vmatprep.subr.mxu0 %v1091
    %1432 = vmatpush2.msra.mxu0 %v1090
    %1433 = vmatprep.subr.mxu0 %v1087
    %1434 = vmatpush2.msra.mxu0 %v1086
    %1435 = vmatprep.subr.mxu0 %v1083
    %1436 = vmatpush2.msra.mxu0 %v1082
    %1437 = vmatprep.subr.mxu0 %v1079
    %1438 = vmatpush2.msra.mxu0 %v1078
    %1439 = vmatprep.mubr.f32.mxu0 %v883
    %1440 = vmatmul.mubr.f32.gmra.mxu0 %v882
    %v1441 = vpop.f32.mrf.mxu0
    %v1442 = vadd.f32 %v1371, %v1441
    %v1443 = vpop.f32.mrf.mxu0
    %v1444 = vadd.f32 %v1373, %v1443
    %1445 = vdwg.mxu0
    %v1446 = vmax.f32 %v1300, 0.0
    %v1447 = vmax.f32 %v1302, 0.0
    %v1448 = vmax.f32 %v1442, 0.0
    %v1449 = vmax.f32 %v1444, 0.0
    %v1450 = vld [vmem:[%s9] sm:$0xf]
    %v1452 = vlaneseq
    %v1453 = vshrl.u32 %v1452, 7
    %v1454 = vsub.s32 0, %v1453
    %v1455 = vrot.slane %v1450, %v1454
    %v1456 = vlaneseq
    %v1457 = vshrl.u32 %v1456, 7
    %v1458 = vsub.s32 1, %v1457
    %v1459 = vrot.slane %v1450, %v1458
    %v1460 = vlaneseq
    %v1461 = vshrl.u32 %v1460, 7
    %v1462 = vsub.s32 2, %v1461
    %v1463 = vrot.slane %v1450, %v1462
    %v1464 = vlaneseq
    %v1465 = vshrl.u32 %v1464, 7
    %v1466 = vsub.s32 3, %v1465
    %v1467 = vrot.slane %v1450, %v1466
    %v1472 = vmul.f32 %v1446, %v1455
    %v1473 = vmul.f32 %v1447, %v1459
    %v1474 = vmul.f32 %v1448, %v1463
    %v1475 = vmul.f32 %v1449, %v1467
    %v1476 = vld [vmem:[%s10] sm:$0xf]
    %v1478 = vlaneseq
    %v1479 = vshrl.u32 %v1478, 7
    %v1480 = vsub.s32 0, %v1479
    %v1481 = vrot.slane %v1476, %v1480
    %v1482 = vlaneseq
    %v1483 = vshrl.u32 %v1482, 7
    %v1484 = vsub.s32 1, %v1483
    %v1485 = vrot.slane %v1476, %v1484
    %v1486 = vlaneseq
    %v1487 = vshrl.u32 %v1486, 7
    %v1488 = vsub.s32 2, %v1487
    %v1489 = vrot.slane %v1476, %v1488
    %v1490 = vlaneseq
    %v1491 = vshrl.u32 %v1490, 7
    %v1492 = vsub.s32 3, %v1491
    %v1493 = vrot.slane %v1476, %v1492
    %v1498 = vadd.f32 %v1472, %v1481
    %v1499 = vadd.f32 %v1473, %v1485
    %v1500 = vadd.f32 %v1474, %v1489
    %v1501 = vadd.f32 %v1475, %v1493
    %v1502 = vadd.f32 %v1498, %v880
    %v1503 = vadd.f32 %v1499, %v881
    %v1504 = vadd.f32 %v1500, %v882
    %v1505 = vadd.f32 %v1501, %v883
    %v1506 = vld [vmem:[%s11] sm:$0xff]
    %v1507 = vld [vmem:[%s11 + $0x8] sm:$0xff]
    %v1508 = vld [vmem:[%s11 + $0x10] sm:$0xff]
    %v1509 = vld [vmem:[%s11 + $0x18] sm:$0xff]
    %v1510 = vld [vmem:[%s11 + $0x20] sm:$0xff]
    %v1511 = vld [vmem:[%s11 + $0x28] sm:$0xff]
    %v1512 = vld [vmem:[%s11 + $0x30] sm:$0xff]
    %v1513 = vld [vmem:[%s11 + $0x38] sm:$0xff]
    %v1514 = vld [vmem:[%s11 + $0x40] sm:$0xff]
    %v1515 = vld [vmem:[%s11 + $0x48] sm:$0xff]
    %v1516 = vld [vmem:[%s11 + $0x50] sm:$0xff]
    %v1517 = vld [vmem:[%s11 + $0x58] sm:$0xff]
    %v1518 = vld [vmem:[%s11 + $0x60] sm:$0xff]
    %v1519 = vld [vmem:[%s11 + $0x68] sm:$0xff]
    %v1520 = vld [vmem:[%s11 + $0x70] sm:$0xff]
    %v1521 = vld [vmem:[%s11 + $0x78] sm:$0xff]
    %v1522 = vld [vmem:[%s11 + $0x80] sm:$0xff]
    %v1523 = vld [vmem:[%s11 + $0x88] sm:$0xff]
    %v1524 = vld [vmem:[%s11 + $0x90] sm:$0xff]
    %v1525 = vld [vmem:[%s11 + $0x98] sm:$0xff]
    %v1526 = vld [vmem:[%s11 + $0xa0] sm:$0xff]
    %v1527 = vld [vmem:[%s11 + $0xa8] sm:$0xff]
    %v1528 = vld [vmem:[%s11 + $0xb0] sm:$0xff]
    %v1529 = vld [vmem:[%s11 + $0xb8] sm:$0xff]
    %v1530 = vld [vmem:[%s11 + $0xc0] sm:$0xff]
    %v1531 = vld [vmem:[%s11 + $0xc8] sm:$0xff]
    %v1532 = vld [vmem:[%s11 + $0xd0] sm:$0xff]
    %v1533 = vld [vmem:[%s11 + $0xd8] sm:$0xff]
    %v1534 = vld [vmem:[%s11 + $0xe0] sm:$0xff]
    %v1535 = vld [vmem:[%s11 + $0xe8] sm:$0xff]
    %v1536 = vld [vmem:[%s11 + $0xf0] sm:$0xff]
    %v1537 = vld [vmem:[%s11 + $0xf8] sm:$0xff]
    %v1538 = vld [vmem:[%s11 + $0x100] sm:$0xff]
    %v1539 = vld [vmem:[%s11 + $0x108] sm:$0xff]
    %v1540 = vld [vmem:[%s11 + $0x110] sm:$0xff]
    %v1541 = vld [vmem:[%s11 + $0x118] sm:$0xff]
    %v1542 = vld [vmem:[%s11 + $0x120] sm:$0xff]
    %v1543 = vld [vmem:[%s11 + $0x128] sm:$0xff]
    %v1544 = vld [vmem:[%s11 + $0x130] sm:$0xff]
    %v1545 = vld [vmem:[%s11 + $0x138] sm:$0xff]
    %v1546 = vld [vmem:[%s11 + $0x140] sm:$0xff]
    %v1547 = vld [vmem:[%s11 + $0x148] sm:$0xff]
    %v1548 = vld [vmem:[%s11 + $0x150] sm:$0xff]
    %v1549 = vld [vmem:[%s11 + $0x158] sm:$0xff]
    %v1550 = vld [vmem:[%s11 + $0x160] sm:$0xff]
    %v1551 = vld [vmem:[%s11 + $0x168] sm:$0xff]
    %v1552 = vld [vmem:[%s11 + $0x170] sm:$0xff]
    %v1553 = vld [vmem:[%s11 + $0x178] sm:$0xff]
    %v1554 = vld [vmem:[%s11 + $0x180] sm:$0xff]
    %v1555 = vld [vmem:[%s11 + $0x188] sm:$0xff]
    %v1556 = vld [vmem:[%s11 + $0x190] sm:$0xff]
    %v1557 = vld [vmem:[%s11 + $0x198] sm:$0xff]
    %v1558 = vld [vmem:[%s11 + $0x1a0] sm:$0xff]
    %v1559 = vld [vmem:[%s11 + $0x1a8] sm:$0xff]
    %v1560 = vld [vmem:[%s11 + $0x1b0] sm:$0xff]
    %v1561 = vld [vmem:[%s11 + $0x1b8] sm:$0xff]
    %v1562 = vld [vmem:[%s11 + $0x1c0] sm:$0xff]
    %v1563 = vld [vmem:[%s11 + $0x1c8] sm:$0xff]
    %v1564 = vld [vmem:[%s11 + $0x1d0] sm:$0xff]
    %v1565 = vld [vmem:[%s11 + $0x1d8] sm:$0xff]
    %v1566 = vld [vmem:[%s11 + $0x1e0] sm:$0xff]
    %v1567 = vld [vmem:[%s11 + $0x1e8] sm:$0xff]
    %v1568 = vld [vmem:[%s11 + $0x1f0] sm:$0xff]
    %v1569 = vld [vmem:[%s11 + $0x1f8] sm:$0xff]
    %v1570 = vld [vmem:[%s12] sm:$0x1]
    %v1572 = vlaneseq
    %v1573 = vshrl.u32 %v1572, 7
    %v1574 = vsub.s32 0, %v1573
    %v1575 = vrot.slane %v1570, %v1574
    %1577 = vmatprep.subr.mxu0 0.0
    %1578 = vmatpush1.msra.mxu0 %v1521
    %1579 = vmatprep.subr.mxu0 0.0
    %1580 = vmatpush1.msra.mxu0 %v1520
    %1581 = vmatprep.subr.mxu0 0.0
    %1582 = vmatpush1.msra.mxu0 %v1519
    %1583 = vmatprep.subr.mxu0 0.0
    %1584 = vmatpush1.msra.mxu0 %v1518
    %1585 = vmatprep.subr.mxu0 0.0
    %1586 = vmatpush1.msra.mxu0 %v1517
    %1587 = vmatprep.subr.mxu0 0.0
    %1588 = vmatpush1.msra.mxu0 %v1516
    %1589 = vmatprep.subr.mxu0 0.0
    %1590 = vmatpush1.msra.mxu0 %v1515
    %1591 = vmatprep.subr.mxu0 0.0
    %1592 = vmatpush1.msra.mxu0 %v1514
    %1593 = vmatprep.subr.mxu0 0.0
    %1594 = vmatpush1.msra.mxu0 %v1513
    %1595 = vmatprep.subr.mxu0 0.0
    %1596 = vmatpush1.msra.mxu0 %v1512
    %1597 = vmatprep.subr.mxu0 0.0
    %1598 = vmatpush1.msra.mxu0 %v1511
    %1599 = vmatprep.subr.mxu0 0.0
    %1600 = vmatpush1.msra.mxu0 %v1510
    %1601 = vmatprep.subr.mxu0 0.0
    %1602 = vmatpush1.msra.mxu0 %v1509
    %1603 = vmatprep.subr.mxu0 0.0
    %1604 = vmatpush1.msra.mxu0 %v1508
    %1605 = vmatprep.subr.mxu0 0.0
    %1606 = vmatpush1.msra.mxu0 %v1507
    %1607 = vmatprep.subr.mxu0 0.0
    %1608 = vmatpush1.msra.mxu0 %v1506
    %1609 = vmatprep.subr.mxu0 0.0
    %1610 = vmatpush2.msra.mxu0 %v1537
    %1611 = vmatprep.subr.mxu0 0.0
    %1612 = vmatpush2.msra.mxu0 %v1536
    %1613 = vmatprep.subr.mxu0 0.0
    %1614 = vmatpush2.msra.mxu0 %v1535
    %1615 = vmatprep.subr.mxu0 0.0
    %1616 = vmatpush2.msra.mxu0 %v1534
    %1617 = vmatprep.subr.mxu0 0.0
    %1618 = vmatpush2.msra.mxu0 %v1533
    %1619 = vmatprep.subr.mxu0 0.0
    %1620 = vmatpush2.msra.mxu0 %v1532
    %1621 = vmatprep.subr.mxu0 0.0
    %1622 = vmatpush2.msra.mxu0 %v1531
    %1623 = vmatprep.subr.mxu0 0.0
    %1624 = vmatpush2.msra.mxu0 %v1530
    %1625 = vmatprep.subr.mxu0 0.0
    %1626 = vmatpush2.msra.mxu0 %v1529
    %1627 = vmatprep.subr.mxu0 0.0
    %1628 = vmatpush2.msra.mxu0 %v1528
    %1629 = vmatprep.subr.mxu0 0.0
    %1630 = vmatpush2.msra.mxu0 %v1527
    %1631 = vmatprep.subr.mxu0 0.0
    %1632 = vmatpush2.msra.mxu0 %v1526
    %1633 = vmatprep.subr.mxu0 0.0
    %1634 = vmatpush2.msra.mxu0 %v1525
    %1635 = vmatprep.subr.mxu0 0.0
    %1636 = vmatpush2.msra.mxu0 %v1524
    %1637 = vmatprep.subr.mxu0 0.0
    %1638 = vmatpush2.msra.mxu0 %v1523
    %1639 = vmatprep.subr.mxu0 0.0
    %1640 = vmatpush2.msra.mxu0 %v1522
    %1641 = vmatprep.mubr.f32.mxu0 %v1503
    %1642 = vmatmul.mubr.f32.gmra.mxu0 %v1502
    %v1643 = vpop.f32.mrf.mxu0
    %v1644 = vadd.f32 %v1575, %v1643
    %v1645 = vpop.f32.mrf.mxu0
    %1646 = vdwg.mxu0
    %1647 = vmatprep.subr.mxu0 0.0
    %1648 = vmatpush1.msra.mxu0 %v1553
    %1649 = vmatprep.subr.mxu0 0.0
    %1650 = vmatpush1.msra.mxu0 %v1552
    %1651 = vmatprep.subr.mxu0 0.0
    %1652 = vmatpush1.msra.mxu0 %v1551
    %1653 = vmatprep.subr.mxu0 0.0
    %1654 = vmatpush1.msra.mxu0 %v1550
    %1655 = vmatprep.subr.mxu0 0.0
    %1656 = vmatpush1.msra.mxu0 %v1549
    %1657 = vmatprep.subr.mxu0 0.0
    %1658 = vmatpush1.msra.mxu0 %v1548
    %1659 = vmatprep.subr.mxu0 0.0
    %1660 = vmatpush1.msra.mxu0 %v1547
    %1661 = vmatprep.subr.mxu0 0.0
    %1662 = vmatpush1.msra.mxu0 %v1546
    %1663 = vmatprep.subr.mxu0 0.0
    %1664 = vmatpush1.msra.mxu0 %v1545
    %1665 = vmatprep.subr.mxu0 0.0
    %1666 = vmatpush1.msra.mxu0 %v1544
    %1667 = vmatprep.subr.mxu0 0.0
    %1668 = vmatpush1.msra.mxu0 %v1543
    %1669 = vmatprep.subr.mxu0 0.0
    %1670 = vmatpush1.msra.mxu0 %v1542
    %1671 = vmatprep.subr.mxu0 0.0
    %1672 = vmatpush1.msra.mxu0 %v1541
    %1673 = vmatprep.subr.mxu0 0.0
    %1674 = vmatpush1.msra.mxu0 %v1540
    %1675 = vmatprep.subr.mxu0 0.0
    %1676 = vmatpush1.msra.mxu0 %v1539
    %1677 = vmatprep.subr.mxu0 0.0
    %1678 = vmatpush1.msra.mxu0 %v1538
    %1679 = vmatprep.subr.mxu0 0.0
    %1680 = vmatpush2.msra.mxu0 %v1569
    %1681 = vmatprep.subr.mxu0 0.0
    %1682 = vmatpush2.msra.mxu0 %v1568
    %1683 = vmatprep.subr.mxu0 0.0
    %1684 = vmatpush2.msra.mxu0 %v1567
    %1685 = vmatprep.subr.mxu0 0.0
    %1686 = vmatpush2.msra.mxu0 %v1566
    %1687 = vmatprep.subr.mxu0 0.0
    %1688 = vmatpush2.msra.mxu0 %v1565
    %1689 = vmatprep.subr.mxu0 0.0
    %1690 = vmatpush2.msra.mxu0 %v1564
    %1691 = vmatprep.subr.mxu0 0.0
    %1692 = vmatpush2.msra.mxu0 %v1563
    %1693 = vmatprep.subr.mxu0 0.0
    %1694 = vmatpush2.msra.mxu0 %v1562
    %1695 = vmatprep.subr.mxu0 0.0
    %1696 = vmatpush2.msra.mxu0 %v1561
    %1697 = vmatprep.subr.mxu0 0.0
    %1698 = vmatpush2.msra.mxu0 %v1560
    %1699 = vmatprep.subr.mxu0 0.0
    %1700 = vmatpush2.msra.mxu0 %v1559
    %1701 = vmatprep.subr.mxu0 0.0
    %1702 = vmatpush2.msra.mxu0 %v1558
    %1703 = vmatprep.subr.mxu0 0.0
    %1704 = vmatpush2.msra.mxu0 %v1557
    %1705 = vmatprep.subr.mxu0 0.0
    %1706 = vmatpush2.msra.mxu0 %v1556
    %1707 = vmatprep.subr.mxu0 0.0
    %1708 = vmatpush2.msra.mxu0 %v1555
    %1709 = vmatprep.subr.mxu0 0.0
    %1710 = vmatpush2.msra.mxu0 %v1554
    %1711 = vmatprep.mubr.f32.mxu0 %v1505
    %1712 = vmatmul.mubr.f32.gmra.mxu0 %v1504
    %v1713 = vpop.f32.mrf.mxu0
    %v1714 = vadd.f32 %v1644, %v1713
    %v1715 = vpop.f32.mrf.mxu0
    %1716 = vdwg.mxu0
    %v1717 = vmax.f32 %v1714, 0.0
    %v1718 = vld [vmem:[%s13] sm:$0xff]
    %v1719 = vld [vmem:[%s13 + $0x8] sm:$0xff]
    %v1720 = vld [vmem:[%s13 + $0x10] sm:$0xff]
    %v1721 = vld [vmem:[%s13 + $0x18] sm:$0xff]
    %v1722 = vld [vmem:[%s13 + $0x20] sm:$0xff]
    %v1723 = vld [vmem:[%s13 + $0x28] sm:$0xff]
    %v1724 = vld [vmem:[%s13 + $0x30] sm:$0xff]
    %v1725 = vld [vmem:[%s13 + $0x38] sm:$0xff]
    %v1726 = vld [vmem:[%s13 + $0x40] sm:$0xff]
    %v1727 = vld [vmem:[%s13 + $0x48] sm:$0xff]
    %v1728 = vld [vmem:[%s13 + $0x50] sm:$0xff]
    %v1729 = vld [vmem:[%s13 + $0x58] sm:$0xff]
    %v1730 = vld [vmem:[%s13 + $0x60] sm:$0xff]
    %v1731 = vld [vmem:[%s13 + $0x68] sm:$0xff]
    %v1732 = vld [vmem:[%s13 + $0x70] sm:$0xff]
    %v1733 = vld [vmem:[%s13 + $0x78] sm:$0xff]
    %v1734 = vld [vmem:[%s15] sm:$0xf]
    %v1736 = vlaneseq
    %v1737 = vshrl.u32 %v1736, 7
    %v1738 = vsub.s32 0, %v1737
    %v1739 = vrot.slane %v1734, %v1738
    %v1740 = vlaneseq
    %v1741 = vshrl.u32 %v1740, 7
    %v1742 = vsub.s32 1, %v1741
    %v1743 = vrot.slane %v1734, %v1742
    %v1744 = vlaneseq
    %v1745 = vshrl.u32 %v1744, 7
    %v1746 = vsub.s32 2, %v1745
    %v1747 = vrot.slane %v1734, %v1746
    %v1748 = vlaneseq
    %v1749 = vshrl.u32 %v1748, 7
    %v1750 = vsub.s32 3, %v1749
    %v1751 = vrot.slane %v1734, %v1750
    %v1757 = vsel %vm116, %v1717, 0
    %1759 = vmatprep.subr.mxu0 0.0
    %1760 = vmatpush1.msra.mxu0 0.0
    %1761 = vmatprep.subr.mxu0 0.0
    %1762 = vmatpush1.msra.mxu0 0.0
    %1763 = vmatprep.subr.mxu0 0.0
    %1764 = vmatpush1.msra.mxu0 0.0
    %1765 = vmatprep.subr.mxu0 0.0
    %1766 = vmatpush1.msra.mxu0 0.0
    %1767 = vmatprep.subr.mxu0 0.0
    %1768 = vmatpush1.msra.mxu0 0.0
    %1769 = vmatprep.subr.mxu0 0.0
    %1770 = vmatpush1.msra.mxu0 0.0
    %1771 = vmatprep.subr.mxu0 0.0
    %1772 = vmatpush1.msra.mxu0 0.0
    %1773 = vmatprep.subr.mxu0 0.0
    %1774 = vmatpush1.msra.mxu0 0.0
    %1775 = vmatprep.subr.mxu0 0.0
    %1776 = vmatpush1.msra.mxu0 0.0
    %1777 = vmatprep.subr.mxu0 0.0
    %1778 = vmatpush1.msra.mxu0 0.0
    %1779 = vmatprep.subr.mxu0 0.0
    %1780 = vmatpush1.msra.mxu0 0.0
    %1781 = vmatprep.subr.mxu0 0.0
    %1782 = vmatpush1.msra.mxu0 0.0
    %1783 = vmatprep.subr.mxu0 %v1731
    %1784 = vmatpush1.msra.mxu0 %v1730
    %1785 = vmatprep.subr.mxu0 %v1727
    %1786 = vmatpush1.msra.mxu0 %v1726
    %1787 = vmatprep.subr.mxu0 %v1723
    %1788 = vmatpush1.msra.mxu0 %v1722
    %1789 = vmatprep.subr.mxu0 %v1719
    %1790 = vmatpush1.msra.mxu0 %v1718
    %1791 = vmatprep.subr.mxu0 0.0
    %1792 = vmatpush2.msra.mxu0 0.0
    %1793 = vmatprep.subr.mxu0 0.0
    %1794 = vmatpush2.msra.mxu0 0.0
    %1795 = vmatprep.subr.mxu0 0.0
    %1796 = vmatpush2.msra.mxu0 0.0
    %1797 = vmatprep.subr.mxu0 0.0
    %1798 = vmatpush2.msra.mxu0 0.0
    %1799 = vmatprep.subr.mxu0 0.0
    %1800 = vmatpush2.msra.mxu0 0.0
    %1801 = vmatprep.subr.mxu0 0.0
    %1802 = vmatpush2.msra.mxu0 0.0
    %1803 = vmatprep.subr.mxu0 0.0
    %1804 = vmatpush2.msra.mxu0 0.0
    %1805 = vmatprep.subr.mxu0 0.0
    %1806 = vmatpush2.msra.mxu0 0.0
    %1807 = vmatprep.subr.mxu0 0.0
    %1808 = vmatpush2.msra.mxu0 0.0
    %1809 = vmatprep.subr.mxu0 0.0
    %1810 = vmatpush2.msra.mxu0 0.0
    %1811 = vmatprep.subr.mxu0 0.0
    %1812 = vmatpush2.msra.mxu0 0.0
    %1813 = vmatprep.subr.mxu0 0.0
    %1814 = vmatpush2.msra.mxu0 0.0
    %1815 = vmatprep.subr.mxu0 0.0
    %1816 = vmatpush2.msra.mxu0 0.0
    %1817 = vmatprep.subr.mxu0 0.0
    %1818 = vmatpush2.msra.mxu0 0.0
    %1819 = vmatprep.subr.mxu0 0.0
    %1820 = vmatpush2.msra.mxu0 0.0
    %1821 = vmatprep.subr.mxu0 0.0
    %1822 = vmatpush2.msra.mxu0 0.0
    %1823 = vmatprep.mubr.f32.mxu0 0.0
    %1824 = vmatmul.mubr.f32.gmra.mxu0 %v1757
    %v1825 = vpop.f32.mrf.mxu0
    %v1826 = vadd.f32 %v1739, %v1825
    %v1827 = vpop.f32.mrf.mxu0
    %v1828 = vadd.f32 %v1743, %v1827
    %1829 = vdwg.mxu0
    %1830 = vmatprep.subr.mxu0 0.0
    %1831 = vmatpush1.msra.mxu0 0.0
    %1832 = vmatprep.subr.mxu0 0.0
    %1833 = vmatpush1.msra.mxu0 0.0
    %1834 = vmatprep.subr.mxu0 0.0
    %1835 = vmatpush1.msra.mxu0 0.0
    %1836 = vmatprep.subr.mxu0 0.0
    %1837 = vmatpush1.msra.mxu0 0.0
    %1838 = vmatprep.subr.mxu0 0.0
    %1839 = vmatpush1.msra.mxu0 0.0
    %1840 = vmatprep.subr.mxu0 0.0
    %1841 = vmatpush1.msra.mxu0 0.0
    %1842 = vmatprep.subr.mxu0 0.0
    %1843 = vmatpush1.msra.mxu0 0.0
    %1844 = vmatprep.subr.mxu0 0.0
    %1845 = vmatpush1.msra.mxu0 0.0
    %1846 = vmatprep.subr.mxu0 0.0
    %1847 = vmatpush1.msra.mxu0 0.0
    %1848 = vmatprep.subr.mxu0 0.0
    %1849 = vmatpush1.msra.mxu0 0.0
    %1850 = vmatprep.subr.mxu0 0.0
    %1851 = vmatpush1.msra.mxu0 0.0
    %1852 = vmatprep.subr.mxu0 0.0
    %1853 = vmatpush1.msra.mxu0 0.0
    %1854 = vmatprep.subr.mxu0 %v1733
    %1855 = vmatpush1.msra.mxu0 %v1732
    %1856 = vmatprep.subr.mxu0 %v1729
    %1857 = vmatpush1.msra.mxu0 %v1728
    %1858 = vmatprep.subr.mxu0 %v1725
    %1859 = vmatpush1.msra.mxu0 %v1724
    %1860 = vmatprep.subr.mxu0 %v1721
    %1861 = vmatpush1.msra.mxu0 %v1720
    %1862 = vmatprep.subr.mxu0 0.0
    %1863 = vmatpush2.msra.mxu0 0.0
    %1864 = vmatprep.subr.mxu0 0.0
    %1865 = vmatpush2.msra.mxu0 0.0
    %1866 = vmatprep.subr.mxu0 0.0
    %1867 = vmatpush2.msra.mxu0 0.0
    %1868 = vmatprep.subr.mxu0 0.0
    %1869 = vmatpush2.msra.mxu0 0.0
    %1870 = vmatprep.subr.mxu0 0.0
    %1871 = vmatpush2.msra.mxu0 0.0
    %1872 = vmatprep.subr.mxu0 0.0
    %1873 = vmatpush2.msra.mxu0 0.0
    %1874 = vmatprep.subr.mxu0 0.0
    %1875 = vmatpush2.msra.mxu0 0.0
    %1876 = vmatprep.subr.mxu0 0.0
    %1877 = vmatpush2.msra.mxu0 0.0
    %1878 = vmatprep.subr.mxu0 0.0
    %1879 = vmatpush2.msra.mxu0 0.0
    %1880 = vmatprep.subr.mxu0 0.0
    %1881 = vmatpush2.msra.mxu0 0.0
    %1882 = vmatprep.subr.mxu0 0.0
    %1883 = vmatpush2.msra.mxu0 0.0
    %1884 = vmatprep.subr.mxu0 0.0
    %1885 = vmatpush2.msra.mxu0 0.0
    %1886 = vmatprep.subr.mxu0 0.0
    %1887 = vmatpush2.msra.mxu0 0.0
    %1888 = vmatprep.subr.mxu0 0.0
    %1889 = vmatpush2.msra.mxu0 0.0
    %1890 = vmatprep.subr.mxu0 0.0
    %1891 = vmatpush2.msra.mxu0 0.0
    %1892 = vmatprep.subr.mxu0 0.0
    %1893 = vmatpush2.msra.mxu0 0.0
    %1894 = vmatprep.mubr.f32.mxu0 0.0
    %1895 = vmatmul.mubr.f32.gmra.mxu0 %v1757
    %v1896 = vpop.f32.mrf.mxu0
    %v1897 = vadd.f32 %v1747, %v1896
    %v1898 = vpop.f32.mrf.mxu0
    %v1899 = vadd.f32 %v1751, %v1898
    %1900 = vdwg.mxu0
    %v1901 = vld [vmem:[%s14] sm:$0xff]
    %v1902 = vld [vmem:[%s14 + $0x8] sm:$0xff]
    %v1903 = vld [vmem:[%s14 + $0x10] sm:$0xff]
    %v1904 = vld [vmem:[%s14 + $0x18] sm:$0xff]
    %v1905 = vld [vmem:[%s14 + $0x20] sm:$0xff]
    %v1906 = vld [vmem:[%s14 + $0x28] sm:$0xff]
    %v1907 = vld [vmem:[%s14 + $0x30] sm:$0xff]
    %v1908 = vld [vmem:[%s14 + $0x38] sm:$0xff]
    %v1909 = vld [vmem:[%s14 + $0x40] sm:$0xff]
    %v1910 = vld [vmem:[%s14 + $0x48] sm:$0xff]
    %v1911 = vld [vmem:[%s14 + $0x50] sm:$0xff]
    %v1912 = vld [vmem:[%s14 + $0x58] sm:$0xff]
    %v1913 = vld [vmem:[%s14 + $0x60] sm:$0xff]
    %v1914 = vld [vmem:[%s14 + $0x68] sm:$0xff]
    %v1915 = vld [vmem:[%s14 + $0x70] sm:$0xff]
    %v1916 = vld [vmem:[%s14 + $0x78] sm:$0xff]
    %v1917 = vld [vmem:[%s14 + $0x80] sm:$0xff]
    %v1918 = vld [vmem:[%s14 + $0x88] sm:$0xff]
    %v1919 = vld [vmem:[%s14 + $0x90] sm:$0xff]
    %v1920 = vld [vmem:[%s14 + $0x98] sm:$0xff]
    %vm1921 = vcmask 326656
    %v1923 = vsel %vm1921, 0.0, 0
    %1925 = vmatprep.subr.mxu0 0.0
    %1926 = vmatpush1.msra.mxu0 0.0
    %1927 = vmatprep.subr.mxu0 0.0
    %1928 = vmatpush1.msra.mxu0 0.0
    %1929 = vmatprep.subr.mxu0 0.0
    %1930 = vmatpush1.msra.mxu0 0.0
    %1931 = vmatprep.subr.mxu0 0.0
    %1932 = vmatpush1.msra.mxu0 0.0
    %1933 = vmatprep.subr.mxu0 0.0
    %1934 = vmatpush1.msra.mxu0 0.0
    %1935 = vmatprep.subr.mxu0 0.0
    %1936 = vmatpush1.msra.mxu0 0.0
    %1937 = vmatprep.subr.mxu0 0.0
    %1938 = vmatpush1.msra.mxu0 0.0
    %1939 = vmatprep.subr.mxu0 0.0
    %1940 = vmatpush1.msra.mxu0 0.0
    %1941 = vmatprep.subr.mxu0 0.0
    %1942 = vmatpush1.msra.mxu0 0.0
    %1943 = vmatprep.subr.mxu0 0.0
    %1944 = vmatpush1.msra.mxu0 0.0
    %1945 = vmatprep.subr.mxu0 0.0
    %1946 = vmatpush1.msra.mxu0 0.0
    %1947 = vmatprep.subr.mxu0 %v1918
    %1948 = vmatpush1.msra.mxu0 %v1917
    %1949 = vmatprep.subr.mxu0 %v1914
    %1950 = vmatpush1.msra.mxu0 %v1913
    %1951 = vmatprep.subr.mxu0 %v1910
    %1952 = vmatpush1.msra.mxu0 %v1909
    %1953 = vmatprep.subr.mxu0 %v1906
    %1954 = vmatpush1.msra.mxu0 %v1905
    %1955 = vmatprep.subr.mxu0 %v1902
    %1956 = vmatpush1.msra.mxu0 %v1901
    %1957 = vmatprep.subr.mxu0 0.0
    %1958 = vmatpush2.msra.mxu0 0.0
    %1959 = vmatprep.subr.mxu0 0.0
    %1960 = vmatpush2.msra.mxu0 0.0
    %1961 = vmatprep.subr.mxu0 0.0
    %1962 = vmatpush2.msra.mxu0 0.0
    %1963 = vmatprep.subr.mxu0 0.0
    %1964 = vmatpush2.msra.mxu0 0.0
    %1965 = vmatprep.subr.mxu0 0.0
    %1966 = vmatpush2.msra.mxu0 0.0
    %1967 = vmatprep.subr.mxu0 0.0
    %1968 = vmatpush2.msra.mxu0 0.0
    %1969 = vmatprep.subr.mxu0 0.0
    %1970 = vmatpush2.msra.mxu0 0.0
    %1971 = vmatprep.subr.mxu0 0.0
    %1972 = vmatpush2.msra.mxu0 0.0
    %1973 = vmatprep.subr.mxu0 0.0
    %1974 = vmatpush2.msra.mxu0 0.0
    %1975 = vmatprep.subr.mxu0 0.0
    %1976 = vmatpush2.msra.mxu0 0.0
    %1977 = vmatprep.subr.mxu0 0.0
    %1978 = vmatpush2.msra.mxu0 0.0
    %1979 = vmatprep.subr.mxu0 0.0
    %1980 = vmatpush2.msra.mxu0 0.0
    %1981 = vmatprep.subr.mxu0 0.0
    %1982 = vmatpush2.msra.mxu0 0.0
    %1983 = vmatprep.subr.mxu0 0.0
    %1984 = vmatpush2.msra.mxu0 0.0
    %1985 = vmatprep.subr.mxu0 0.0
    %1986 = vmatpush2.msra.mxu0 0.0
    %1987 = vmatprep.subr.mxu0 0.0
    %1988 = vmatpush2.msra.mxu0 0.0
    %1989 = vmatprep.mubr.f32.mxu0 0.0
    %1990 = vmatmul.mubr.f32.gmra.mxu0 %v1923
    %v1991 = vpop.f32.mrf.mxu0
    %v1992 = vadd.f32 0.0, %v1991
    %v1993 = vpop.f32.mrf.mxu0
    %v1994 = vadd.f32 0.0, %v1993
    %1995 = vdwg.mxu0
    %1996 = vmatprep.subr.mxu0 0.0
    %1997 = vmatpush1.msra.mxu0 0.0
    %1998 = vmatprep.subr.mxu0 0.0
    %1999 = vmatpush1.msra.mxu0 0.0
    %2000 = vmatprep.subr.mxu0 0.0
    %2001 = vmatpush1.msra.mxu0 0.0
    %2002 = vmatprep.subr.mxu0 0.0
    %2003 = vmatpush1.msra.mxu0 0.0
    %2004 = vmatprep.subr.mxu0 0.0
    %2005 = vmatpush1.msra.mxu0 0.0
    %2006 = vmatprep.subr.mxu0 0.0
    %2007 = vmatpush1.msra.mxu0 0.0
    %2008 = vmatprep.subr.mxu0 0.0
    %2009 = vmatpush1.msra.mxu0 0.0
    %2010 = vmatprep.subr.mxu0 0.0
    %2011 = vmatpush1.msra.mxu0 0.0
    %2012 = vmatprep.subr.mxu0 0.0
    %2013 = vmatpush1.msra.mxu0 0.0
    %2014 = vmatprep.subr.mxu0 0.0
    %2015 = vmatpush1.msra.mxu0 0.0
    %2016 = vmatprep.subr.mxu0 0.0
    %2017 = vmatpush1.msra.mxu0 0.0
    %2018 = vmatprep.subr.mxu0 %v1920
    %2019 = vmatpush1.msra.mxu0 %v1919
    %2020 = vmatprep.subr.mxu0 %v1916
    %2021 = vmatpush1.msra.mxu0 %v1915
    %2022 = vmatprep.subr.mxu0 %v1912
    %2023 = vmatpush1.msra.mxu0 %v1911
    %2024 = vmatprep.subr.mxu0 %v1908
    %2025 = vmatpush1.msra.mxu0 %v1907
    %2026 = vmatprep.subr.mxu0 %v1904
    %2027 = vmatpush1.msra.mxu0 %v1903
    %2028 = vmatprep.subr.mxu0 0.0
    %2029 = vmatpush2.msra.mxu0 0.0
    %2030 = vmatprep.subr.mxu0 0.0
    %2031 = vmatpush2.msra.mxu0 0.0
    %2032 = vmatprep.subr.mxu0 0.0
    %2033 = vmatpush2.msra.mxu0 0.0
    %2034 = vmatprep.subr.mxu0 0.0
    %2035 = vmatpush2.msra.mxu0 0.0
    %2036 = vmatprep.subr.mxu0 0.0
    %2037 = vmatpush2.msra.mxu0 0.0
    %2038 = vmatprep.subr.mxu0 0.0
    %2039 = vmatpush2.msra.mxu0 0.0
    %2040 = vmatprep.subr.mxu0 0.0
    %2041 = vmatpush2.msra.mxu0 0.0
    %2042 = vmatprep.subr.mxu0 0.0
    %2043 = vmatpush2.msra.mxu0 0.0
    %2044 = vmatprep.subr.mxu0 0.0
    %2045 = vmatpush2.msra.mxu0 0.0
    %2046 = vmatprep.subr.mxu0 0.0
    %2047 = vmatpush2.msra.mxu0 0.0
    %2048 = vmatprep.subr.mxu0 0.0
    %2049 = vmatpush2.msra.mxu0 0.0
    %2050 = vmatprep.subr.mxu0 0.0
    %2051 = vmatpush2.msra.mxu0 0.0
    %2052 = vmatprep.subr.mxu0 0.0
    %2053 = vmatpush2.msra.mxu0 0.0
    %2054 = vmatprep.subr.mxu0 0.0
    %2055 = vmatpush2.msra.mxu0 0.0
    %2056 = vmatprep.subr.mxu0 0.0
    %2057 = vmatpush2.msra.mxu0 0.0
    %2058 = vmatprep.subr.mxu0 0.0
    %2059 = vmatpush2.msra.mxu0 0.0
    %2060 = vmatprep.mubr.f32.mxu0 0.0
    %2061 = vmatmul.mubr.f32.gmra.mxu0 %v1923
    %v2062 = vpop.f32.mrf.mxu0
    %v2063 = vadd.f32 0.0, %v2062
    %v2064 = vpop.f32.mrf.mxu0
    %v2065 = vadd.f32 0.0, %v2064
    %2066 = vdwg.mxu0
    %v2067 = vadd.f32 %v1826, %v1992
    %v2068 = vadd.f32 %v1828, %v1994
    %v2069 = vadd.f32 %v1897, %v2063
    %v2070 = vadd.f32 %v1899, %v2065
    %v2071 = vxor.u32 %v2067, 2147483648
    %v2072 = vmul.f32 %v2071, 1.442695
    %v2073 = vpow.pop %v2072
    %v2074 = vadd.f32 %v2073, 1.0
    %v2075 = vrcp.pop %v2074
    %v2076 = vmul.f32 1.0, %v2075
    %v2077 = vxor.u32 %v2068, 2147483648
    %v2078 = vmul.f32 %v2077, 1.442695
    %v2079 = vpow.pop %v2078
    %v2080 = vadd.f32 %v2079, 1.0
    %v2081 = vrcp.pop %v2080
    %v2082 = vmul.f32 1.0, %v2081
    %v2083 = vtanh.pop %v2069
    %v2084 = vxor.u32 %v2070, 2147483648
    %v2085 = vmul.f32 %v2084, 1.442695
    %v2086 = vpow.pop %v2085
    %v2087 = vadd.f32 %v2086, 1.0
    %v2088 = vrcp.pop %v2087
    %v2089 = vmul.f32 1.0, %v2088
    %v2090 = vmul.f32 %v2082, 0.0
    %v2091 = vmul.f32 %v2076, %v2083
    %v2092 = vadd.f32 %v2090, %v2091
    %v2093 = vtanh.pop %v2092
    %v2094 = vmul.f32 %v2089, %v2093
    %v2096 = vsel %vm1921, %v2094, 0
    %2098 = vmatprep.subr.mxu0 0.0
    %2099 = vmatpush1.msra.mxu0 0.0
    %2100 = vmatprep.subr.mxu0 0.0
    %2101 = vmatpush1.msra.mxu0 0.0
    %2102 = vmatprep.subr.mxu0 0.0
    %2103 = vmatpush1.msra.mxu0 0.0
    %2104 = vmatprep.subr.mxu0 0.0
    %2105 = vmatpush1.msra.mxu0 0.0
    %2106 = vmatprep.subr.mxu0 0.0
    %2107 = vmatpush1.msra.mxu0 0.0
    %2108 = vmatprep.subr.mxu0 0.0
    %2109 = vmatpush1.msra.mxu0 0.0
    %2110 = vmatprep.subr.mxu0 0.0
    %2111 = vmatpush1.msra.mxu0 0.0
    %2112 = vmatprep.subr.mxu0 0.0
    %2113 = vmatpush1.msra.mxu0 0.0
    %2114 = vmatprep.subr.mxu0 0.0
    %2115 = vmatpush1.msra.mxu0 0.0
    %2116 = vmatprep.subr.mxu0 0.0
    %2117 = vmatpush1.msra.mxu0 0.0
    %2118 = vmatprep.subr.mxu0 0.0
    %2119 = vmatpush1.msra.mxu0 0.0
    %2120 = vmatprep.subr.mxu0 %v1918
    %2121 = vmatpush1.msra.mxu0 %v1917
    %2122 = vmatprep.subr.mxu0 %v1914
    %2123 = vmatpush1.msra.mxu0 %v1913
    %2124 = vmatprep.subr.mxu0 %v1910
    %2125 = vmatpush1.msra.mxu0 %v1909
    %2126 = vmatprep.subr.mxu0 %v1906
    %2127 = vmatpush1.msra.mxu0 %v1905
    %2128 = vmatprep.subr.mxu0 %v1902
    %2129 = vmatpush1.msra.mxu0 %v1901
    %2130 = vmatprep.subr.mxu0 0.0
    %2131 = vmatpush2.msra.mxu0 0.0
    %2132 = vmatprep.subr.mxu0 0.0
    %2133 = vmatpush2.msra.mxu0 0.0
    %2134 = vmatprep.subr.mxu0 0.0
    %2135 = vmatpush2.msra.mxu0 0.0
    %2136 = vmatprep.subr.mxu0 0.0
    %2137 = vmatpush2.msra.mxu0 0.0
    %2138 = vmatprep.subr.mxu0 0.0
    %2139 = vmatpush2.msra.mxu0 0.0
    %2140 = vmatprep.subr.mxu0 0.0
    %2141 = vmatpush2.msra.mxu0 0.0
    %2142 = vmatprep.subr.mxu0 0.0
    %2143 = vmatpush2.msra.mxu0 0.0
    %2144 = vmatprep.subr.mxu0 0.0
    %2145 = vmatpush2.msra.mxu0 0.0
    %2146 = vmatprep.subr.mxu0 0.0
    %2147 = vmatpush2.msra.mxu0 0.0
    %2148 = vmatprep.subr.mxu0 0.0
    %2149 = vmatpush2.msra.mxu0 0.0
    %2150 = vmatprep.subr.mxu0 0.0
    %2151 = vmatpush2.msra.mxu0 0.0
    %2152 = vmatprep.subr.mxu0 0.0
    %2153 = vmatpush2.msra.mxu0 0.0
    %2154 = vmatprep.subr.mxu0 0.0
    %2155 = vmatpush2.msra.mxu0 0.0
    %2156 = vmatprep.subr.mxu0 0.0
    %2157 = vmatpush2.msra.mxu0 0.0
    %2158 = vmatprep.subr.mxu0 0.0
    %2159 = vmatpush2.msra.mxu0 0.0
    %2160 = vmatprep.subr.mxu0 0.0
    %2161 = vmatpush2.msra.mxu0 0.0
    %2162 = vmatprep.mubr.f32.mxu0 0.0
    %2163 = vmatmul.mubr.f32.gmra.mxu0 %v2096
    %v2164 = vpop.f32.mrf.mxu0
    %v2165 = vadd.f32 0.0, %v2164
    %v2166 = vpop.f32.mrf.mxu0
    %v2167 = vadd.f32 0.0, %v2166
    %2168 = vdwg.mxu0
    %2169 = vmatprep.subr.mxu0 0.0
    %2170 = vmatpush1.msra.mxu0 0.0
    %2171 = vmatprep.subr.mxu0 0.0
    %2172 = vmatpush1.msra.mxu0 0.0
    %2173 = vmatprep.subr.mxu0 0.0
    %2174 = vmatpush1.msra.mxu0 0.0
    %2175 = vmatprep.subr.mxu0 0.0
    %2176 = vmatpush1.msra.mxu0 0.0
    %2177 = vmatprep.subr.mxu0 0.0
    %2178 = vmatpush1.msra.mxu0 0.0
    %2179 = vmatprep.subr.mxu0 0.0
    %2180 = vmatpush1.msra.mxu0 0.0
    %2181 = vmatprep.subr.mxu0 0.0
    %2182 = vmatpush1.msra.mxu0 0.0
    %2183 = vmatprep.subr.mxu0 0.0
    %2184 = vmatpush1.msra.mxu0 0.0
    %2185 = vmatprep.subr.mxu0 0.0
    %2186 = vmatpush1.msra.mxu0 0.0
    %2187 = vmatprep.subr.mxu0 0.0
    %2188 = vmatpush1.msra.mxu0 0.0
    %2189 = vmatprep.subr.mxu0 0.0
    %2190 = vmatpush1.msra.mxu0 0.0
    %2191 = vmatprep.subr.mxu0 %v1920
    %2192 = vmatpush1.msra.mxu0 %v1919
    %2193 = vmatprep.subr.mxu0 %v1916
    %2194 = vmatpush1.msra.mxu0 %v1915
    %2195 = vmatprep.subr.mxu0 %v1912
    %2196 = vmatpush1.msra.mxu0 %v1911
    %2197 = vmatprep.subr.mxu0 %v1908
    %2198 = vmatpush1.msra.mxu0 %v1907
    %2199 = vmatprep.subr.mxu0 %v1904
    %2200 = vmatpush1.msra.mxu0 %v1903
    %2201 = vmatprep.subr.mxu0 0.0
    %2202 = vmatpush2.msra.mxu0 0.0
    %2203 = vmatprep.subr.mxu0 0.0
    %2204 = vmatpush2.msra.mxu0 0.0
    %2205 = vmatprep.subr.mxu0 0.0
    %2206 = vmatpush2.msra.mxu0 0.0
    %2207 = vmatprep.subr.mxu0 0.0
    %2208 = vmatpush2.msra.mxu0 0.0
    %2209 = vmatprep.subr.mxu0 0.0
    %2210 = vmatpush2.msra.mxu0 0.0
    %2211 = vmatprep.subr.mxu0 0.0
    %2212 = vmatpush2.msra.mxu0 0.0
    %2213 = vmatprep.subr.mxu0 0.0
    %2214 = vmatpush2.msra.mxu0 0.0
    %2215 = vmatprep.subr.mxu0 0.0
    %2216 = vmatpush2.msra.mxu0 0.0
    %2217 = vmatprep.subr.mxu0 0.0
    %2218 = vmatpush2.msra.mxu0 0.0
    %2219 = vmatprep.subr.mxu0 0.0
    %2220 = vmatpush2.msra.mxu0 0.0
    %2221 = vmatprep.subr.mxu0 0.0
    %2222 = vmatpush2.msra.mxu0 0.0
    %2223 = vmatprep.subr.mxu0 0.0
    %2224 = vmatpush2.msra.mxu0 0.0
    %2225 = vmatprep.subr.mxu0 0.0
    %2226 = vmatpush2.msra.mxu0 0.0
    %2227 = vmatprep.subr.mxu0 0.0
    %2228 = vmatpush2.msra.mxu0 0.0
    %2229 = vmatprep.subr.mxu0 0.0
    %2230 = vmatpush2.msra.mxu0 0.0
    %2231 = vmatprep.subr.mxu0 0.0
    %2232 = vmatpush2.msra.mxu0 0.0
    %2233 = vmatprep.mubr.f32.mxu0 0.0
    %2234 = vmatmul.mubr.f32.gmra.mxu0 %v2096
    %v2235 = vpop.f32.mrf.mxu0
    %v2236 = vadd.f32 0.0, %v2235
    %v2237 = vpop.f32.mrf.mxu0
    %v2238 = vadd.f32 0.0, %v2237
    %2239 = vdwg.mxu0
    %v2244 = vrot.slane %v2165, 7
    %v2245 = vrot.slane %v2167, 7
    %v2246 = vrot.slane %v2236, 7
    %v2247 = vrot.slane %v2238, 7
    %v2252 = vadd.f32 %v1826, %v2244
    %v2253 = vadd.f32 %v1828, %v2245
    %v2254 = vadd.f32 %v1897, %v2246
    %v2255 = vadd.f32 %v1899, %v2247
    %v2256 = vxor.u32 %v2252, 2147483648
    %v2257 = vmul.f32 %v2256, 1.442695
    %v2258 = vpow.pop %v2257
    %v2259 = vadd.f32 %v2258, 1.0
    %v2260 = vrcp.pop %v2259
    %v2261 = vmul.f32 1.0, %v2260
    %v2262 = vxor.u32 %v2253, 2147483648
    %v2263 = vmul.f32 %v2262, 1.442695
    %v2264 = vpow.pop %v2263
    %v2265 = vadd.f32 %v2264, 1.0
    %v2266 = vrcp.pop %v2265
    %v2267 = vmul.f32 1.0, %v2266
    %v2268 = vtanh.pop %v2254
    %v2269 = vxor.u32 %v2255, 2147483648
    %v2270 = vmul.f32 %v2269, 1.442695
    %v2271 = vpow.pop %v2270
    %v2272 = vadd.f32 %v2271, 1.0
    %v2273 = vrcp.pop %v2272
    %v2274 = vmul.f32 1.0, %v2273
    %v2276 = vrot.slane %v2092, 7
    %v2278 = vmul.f32 %v2267, %v2276
    %v2279 = vmul.f32 %v2261, %v2268
    %v2280 = vadd.f32 %v2278, %v2279
    %v2281 = vtanh.pop %v2280
    %v2282 = vmul.f32 %v2274, %v2281
    %v2284 = vrot.slane %v2282, 1
    %v2285 = vsel %vm1921, %v2284, 0
    %2287 = vmatprep.subr.mxu0 0.0
    %2288 = vmatpush1.msra.mxu0 0.0
    %2289 = vmatprep.subr.mxu0 0.0
    %2290 = vmatpush1.msra.mxu0 0.0
    %2291 = vmatprep.subr.mxu0 0.0
    %2292 = vmatpush1.msra.mxu0 0.0
    %2293 = vmatprep.subr.mxu0 0.0
    %2294 = vmatpush1.msra.mxu0 0.0
    %2295 = vmatprep.subr.mxu0 0.0
    %2296 = vmatpush1.msra.mxu0 0.0
    %2297 = vmatprep.subr.mxu0 0.0
    %2298 = vmatpush1.msra.mxu0 0.0
    %2299 = vmatprep.subr.mxu0 0.0
    %2300 = vmatpush1.msra.mxu0 0.0
    %2301 = vmatprep.subr.mxu0 0.0
    %2302 = vmatpush1.msra.mxu0 0.0
    %2303 = vmatprep.subr.mxu0 0.0
    %2304 = vmatpush1.msra.mxu0 0.0
    %2305 = vmatprep.subr.mxu0 0.0
    %2306 = vmatpush1.msra.mxu0 0.0
    %2307 = vmatprep.subr.mxu0 0.0
    %2308 = vmatpush1.msra.mxu0 0.0
    %2309 = vmatprep.subr.mxu0 %v1918
    %2310 = vmatpush1.msra.mxu0 %v1917
    %2311 = vmatprep.subr.mxu0 %v1914
    %2312 = vmatpush1.msra.mxu0 %v1913
    %2313 = vmatprep.subr.mxu0 %v1910
    %2314 = vmatpush1.msra.mxu0 %v1909
    %2315 = vmatprep.subr.mxu0 %v1906
    %2316 = vmatpush1.msra.mxu0 %v1905
    %2317 = vmatprep.subr.mxu0 %v1902
    %2318 = vmatpush1.msra.mxu0 %v1901
    %2319 = vmatprep.subr.mxu0 0.0
    %2320 = vmatpush2.msra.mxu0 0.0
    %2321 = vmatprep.subr.mxu0 0.0
    %2322 = vmatpush2.msra.mxu0 0.0
    %2323 = vmatprep.subr.mxu0 0.0
    %2324 = vmatpush2.msra.mxu0 0.0
    %2325 = vmatprep.subr.mxu0 0.0
    %2326 = vmatpush2.msra.mxu0 0.0
    %2327 = vmatprep.subr.mxu0 0.0
    %2328 = vmatpush2.msra.mxu0 0.0
    %2329 = vmatprep.subr.mxu0 0.0
    %2330 = vmatpush2.msra.mxu0 0.0
    %2331 = vmatprep.subr.mxu0 0.0
    %2332 = vmatpush2.msra.mxu0 0.0
    %2333 = vmatprep.subr.mxu0 0.0
    %2334 = vmatpush2.msra.mxu0 0.0
    %2335 = vmatprep.subr.mxu0 0.0
    %2336 = vmatpush2.msra.mxu0 0.0
    %2337 = vmatprep.subr.mxu0 0.0
    %2338 = vmatpush2.msra.mxu0 0.0
    %2339 = vmatprep.subr.mxu0 0.0
    %2340 = vmatpush2.msra.mxu0 0.0
    %2341 = vmatprep.subr.mxu0 0.0
    %2342 = vmatpush2.msra.mxu0 0.0
    %2343 = vmatprep.subr.mxu0 0.0
    %2344 = vmatpush2.msra.mxu0 0.0
    %2345 = vmatprep.subr.mxu0 0.0
    %2346 = vmatpush2.msra.mxu0 0.0
    %2347 = vmatprep.subr.mxu0 0.0
    %2348 = vmatpush2.msra.mxu0 0.0
    %2349 = vmatprep.subr.mxu0 0.0
    %2350 = vmatpush2.msra.mxu0 0.0
    %2351 = vmatprep.mubr.f32.mxu0 0.0
    %2352 = vmatmul.mubr.f32.gmra.mxu0 %v2285
    %v2353 = vpop.f32.mrf.mxu0
    %v2354 = vadd.f32 0.0, %v2353
    %v2355 = vpop.f32.mrf.mxu0
    %v2356 = vadd.f32 0.0, %v2355
    %2357 = vdwg.mxu0
    %2358 = vmatprep.subr.mxu0 0.0
    %2359 = vmatpush1.msra.mxu0 0.0
    %2360 = vmatprep.subr.mxu0 0.0
    %2361 = vmatpush1.msra.mxu0 0.0
    %2362 = vmatprep.subr.mxu0 0.0
    %2363 = vmatpush1.msra.mxu0 0.0
    %2364 = vmatprep.subr.mxu0 0.0
    %2365 = vmatpush1.msra.mxu0 0.0
    %2366 = vmatprep.subr.mxu0 0.0
    %2367 = vmatpush1.msra.mxu0 0.0
    %2368 = vmatprep.subr.mxu0 0.0
    %2369 = vmatpush1.msra.mxu0 0.0
    %2370 = vmatprep.subr.mxu0 0.0
    %2371 = vmatpush1.msra.mxu0 0.0
    %2372 = vmatprep.subr.mxu0 0.0
    %2373 = vmatpush1.msra.mxu0 0.0
    %2374 = vmatprep.subr.mxu0 0.0
    %2375 = vmatpush1.msra.mxu0 0.0
    %2376 = vmatprep.subr.mxu0 0.0
    %2377 = vmatpush1.msra.mxu0 0.0
    %2378 = vmatprep.subr.mxu0 0.0
    %2379 = vmatpush1.msra.mxu0 0.0
    %2380 = vmatprep.subr.mxu0 %v1920
    %2381 = vmatpush1.msra.mxu0 %v1919
    %2382 = vmatprep.subr.mxu0 %v1916
    %2383 = vmatpush1.msra.mxu0 %v1915
    %2384 = vmatprep.subr.mxu0 %v1912
    %2385 = vmatpush1.msra.mxu0 %v1911
    %2386 = vmatprep.subr.mxu0 %v1908
    %2387 = vmatpush1.msra.mxu0 %v1907
    %2388 = vmatprep.subr.mxu0 %v1904
    %2389 = vmatpush1.msra.mxu0 %v1903
    %2390 = vmatprep.subr.mxu0 0.0
    %2391 = vmatpush2.msra.mxu0 0.0
    %2392 = vmatprep.subr.mxu0 0.0
    %2393 = vmatpush2.msra.mxu0 0.0
    %2394 = vmatprep.subr.mxu0 0.0
    %2395 = vmatpush2.msra.mxu0 0.0
    %2396 = vmatprep.subr.mxu0 0.0
    %2397 = vmatpush2.msra.mxu0 0.0
    %2398 = vmatprep.subr.mxu0 0.0
    %2399 = vmatpush2.msra.mxu0 0.0
    %2400 = vmatprep.subr.mxu0 0.0
    %2401 = vmatpush2.msra.mxu0 0.0
    %2402 = vmatprep.subr.mxu0 0.0
    %2403 = vmatpush2.msra.mxu0 0.0
    %2404 = vmatprep.subr.mxu0 0.0
    %2405 = vmatpush2.msra.mxu0 0.0
    %2406 = vmatprep.subr.mxu0 0.0
    %2407 = vmatpush2.msra.mxu0 0.0
    %2408 = vmatprep.subr.mxu0 0.0
    %2409 = vmatpush2.msra.mxu0 0.0
    %2410 = vmatprep.subr.mxu0 0.0
    %2411 = vmatpush2.msra.mxu0 0.0
    %2412 = vmatprep.subr.mxu0 0.0
    %2413 = vmatpush2.msra.mxu0 0.0
    %2414 = vmatprep.subr.mxu0 0.0
    %2415 = vmatpush2.msra.mxu0 0.0
    %2416 = vmatprep.subr.mxu0 0.0
    %2417 = vmatpush2.msra.mxu0 0.0
    %2418 = vmatprep.subr.mxu0 0.0
    %2419 = vmatpush2.msra.mxu0 0.0
    %2420 = vmatprep.subr.mxu0 0.0
    %2421 = vmatpush2.msra.mxu0 0.0
    %2422 = vmatprep.mubr.f32.mxu0 0.0
    %2423 = vmatmul.mubr.f32.gmra.mxu0 %v2285
    %v2424 = vpop.f32.mrf.mxu0
    %v2425 = vadd.f32 0.0, %v2424
    %v2426 = vpop.f32.mrf.mxu0
    %v2427 = vadd.f32 0.0, %v2426
    %2428 = vdwg.mxu0
    %v2433 = vrot.slane %v2354, 6
    %v2434 = vrot.slane %v2356, 6
    %v2435 = vrot.slane %v2425, 6
    %v2436 = vrot.slane %v2427, 6
    %v2441 = vadd.f32 %v1826, %v2433
    %v2442 = vadd.f32 %v1828, %v2434
    %v2443 = vadd.f32 %v1897, %v2435
    %v2444 = vadd.f32 %v1899, %v2436
    %v2445 = vxor.u32 %v2441, 2147483648
    %v2446 = vmul.f32 %v2445, 1.442695
    %v2447 = vpow.pop %v2446
    %v2448 = vadd.f32 %v2447, 1.0
    %v2449 = vrcp.pop %v2448
    %v2450 = vmul.f32 1.0, %v2449
    %v2451 = vxor.u32 %v2442, 2147483648
    %v2452 = vmul.f32 %v2451, 1.442695
    %v2453 = vpow.pop %v2452
    %v2454 = vadd.f32 %v2453, 1.0
    %v2455 = vrcp.pop %v2454
    %v2456 = vmul.f32 1.0, %v2455
    %v2457 = vtanh.pop %v2443
    %v2458 = vxor.u32 %v2444, 2147483648
    %v2459 = vmul.f32 %v2458, 1.442695
    %v2460 = vpow.pop %v2459
    %v2461 = vadd.f32 %v2460, 1.0
    %v2462 = vrcp.pop %v2461
    %v2463 = vmul.f32 1.0, %v2462
    %v2465 = vrot.slane %v2280, 7
    %v2467 = vmul.f32 %v2456, %v2465
    %v2468 = vmul.f32 %v2450, %v2457
    %v2469 = vadd.f32 %v2467, %v2468
    %v2470 = vtanh.pop %v2469
    %v2471 = vmul.f32 %v2463, %v2470
    %v2473 = vrot.slane %v2471, 2
    %v2474 = vsel %vm1921, %v2473, 0
    %2476 = vmatprep.subr.mxu0 0.0
    %2477 = vmatpush1.msra.mxu0 0.0
    %2478 = vmatprep.subr.mxu0 0.0
    %2479 = vmatpush1.msra.mxu0 0.0
    %2480 = vmatprep.subr.mxu0 0.0
    %2481 = vmatpush1.msra.mxu0 0.0
    %2482 = vmatprep.subr.mxu0 0.0
    %2483 = vmatpush1.msra.mxu0 0.0
    %2484 = vmatprep.subr.mxu0 0.0
    %2485 = vmatpush1.msra.mxu0 0.0
    %2486 = vmatprep.subr.mxu0 0.0
    %2487 = vmatpush1.msra.mxu0 0.0
    %2488 = vmatprep.subr.mxu0 0.0
    %2489 = vmatpush1.msra.mxu0 0.0
    %2490 = vmatprep.subr.mxu0 0.0
    %2491 = vmatpush1.msra.mxu0 0.0
    %2492 = vmatprep.subr.mxu0 0.0
    %2493 = vmatpush1.msra.mxu0 0.0
    %2494 = vmatprep.subr.mxu0 0.0
    %2495 = vmatpush1.msra.mxu0 0.0
    %2496 = vmatprep.subr.mxu0 0.0
    %2497 = vmatpush1.msra.mxu0 0.0
    %2498 = vmatprep.subr.mxu0 %v1918
    %2499 = vmatpush1.msra.mxu0 %v1917
    %2500 = vmatprep.subr.mxu0 %v1914
    %2501 = vmatpush1.msra.mxu0 %v1913
    %2502 = vmatprep.subr.mxu0 %v1910
    %2503 = vmatpush1.msra.mxu0 %v1909
    %2504 = vmatprep.subr.mxu0 %v1906
    %2505 = vmatpush1.msra.mxu0 %v1905
    %2506 = vmatprep.subr.mxu0 %v1902
    %2507 = vmatpush1.msra.mxu0 %v1901
    %2508 = vmatprep.subr.mxu0 0.0
    %2509 = vmatpush2.msra.mxu0 0.0
    %2510 = vmatprep.subr.mxu0 0.0
    %2511 = vmatpush2.msra.mxu0 0.0
    %2512 = vmatprep.subr.mxu0 0.0
    %2513 = vmatpush2.msra.mxu0 0.0
    %2514 = vmatprep.subr.mxu0 0.0
    %2515 = vmatpush2.msra.mxu0 0.0
    %2516 = vmatprep.subr.mxu0 0.0
    %2517 = vmatpush2.msra.mxu0 0.0
    %2518 = vmatprep.subr.mxu0 0.0
    %2519 = vmatpush2.msra.mxu0 0.0
    %2520 = vmatprep.subr.mxu0 0.0
    %2521 = vmatpush2.msra.mxu0 0.0
    %2522 = vmatprep.subr.mxu0 0.0
    %2523 = vmatpush2.msra.mxu0 0.0
    %2524 = vmatprep.subr.mxu0 0.0
    %2525 = vmatpush2.msra.mxu0 0.0
    %2526 = vmatprep.subr.mxu0 0.0
    %2527 = vmatpush2.msra.mxu0 0.0
    %2528 = vmatprep.subr.mxu0 0.0
    %2529 = vmatpush2.msra.mxu0 0.0
    %2530 = vmatprep.subr.mxu0 0.0
    %2531 = vmatpush2.msra.mxu0 0.0
    %2532 = vmatprep.subr.mxu0 0.0
    %2533 = vmatpush2.msra.mxu0 0.0
    %2534 = vmatprep.subr.mxu0 0.0
    %2535 = vmatpush2.msra.mxu0 0.0
    %2536 = vmatprep.subr.mxu0 0.0
    %2537 = vmatpush2.msra.mxu0 0.0
    %2538 = vmatprep.subr.mxu0 0.0
    %2539 = vmatpush2.msra.mxu0 0.0
    %2540 = vmatprep.mubr.f32.mxu0 0.0
    %2541 = vmatmul.mubr.f32.gmra.mxu0 %v2474
    %v2542 = vpop.f32.mrf.mxu0
    %v2543 = vadd.f32 0.0, %v2542
    %v2544 = vpop.f32.mrf.mxu0
    %v2545 = vadd.f32 0.0, %v2544
    %2546 = vdwg.mxu0
    %2547 = vmatprep.subr.mxu0 0.0
    %2548 = vmatpush1.msra.mxu0 0.0
    %2549 = vmatprep.subr.mxu0 0.0
    %2550 = vmatpush1.msra.mxu0 0.0
    %2551 = vmatprep.subr.mxu0 0.0
    %2552 = vmatpush1.msra.mxu0 0.0
    %2553 = vmatprep.subr.mxu0 0.0
    %2554 = vmatpush1.msra.mxu0 0.0
    %2555 = vmatprep.subr.mxu0 0.0
    %2556 = vmatpush1.msra.mxu0 0.0
    %2557 = vmatprep.subr.mxu0 0.0
    %2558 = vmatpush1.msra.mxu0 0.0
    %2559 = vmatprep.subr.mxu0 0.0
    %2560 = vmatpush1.msra.mxu0 0.0
    %2561 = vmatprep.subr.mxu0 0.0
    %2562 = vmatpush1.msra.mxu0 0.0
    %2563 = vmatprep.subr.mxu0 0.0
    %2564 = vmatpush1.msra.mxu0 0.0
    %2565 = vmatprep.subr.mxu0 0.0
    %2566 = vmatpush1.msra.mxu0 0.0
    %2567 = vmatprep.subr.mxu0 0.0
    %2568 = vmatpush1.msra.mxu0 0.0
    %2569 = vmatprep.subr.mxu0 %v1920
    %2570 = vmatpush1.msra.mxu0 %v1919
    %2571 = vmatprep.subr.mxu0 %v1916
    %2572 = vmatpush1.msra.mxu0 %v1915
    %2573 = vmatprep.subr.mxu0 %v1912
    %2574 = vmatpush1.msra.mxu0 %v1911
    %2575 = vmatprep.subr.mxu0 %v1908
    %2576 = vmatpush1.msra.mxu0 %v1907
    %2577 = vmatprep.subr.mxu0 %v1904
    %2578 = vmatpush1.msra.mxu0 %v1903
    %2579 = vmatprep.subr.mxu0 0.0
    %2580 = vmatpush2.msra.mxu0 0.0
    %2581 = vmatprep.subr.mxu0 0.0
    %2582 = vmatpush2.msra.mxu0 0.0
    %2583 = vmatprep.subr.mxu0 0.0
    %2584 = vmatpush2.msra.mxu0 0.0
    %2585 = vmatprep.subr.mxu0 0.0
    %2586 = vmatpush2.msra.mxu0 0.0
    %2587 = vmatprep.subr.mxu0 0.0
    %2588 = vmatpush2.msra.mxu0 0.0
    %2589 = vmatprep.subr.mxu0 0.0
    %2590 = vmatpush2.msra.mxu0 0.0
    %2591 = vmatprep.subr.mxu0 0.0
    %2592 = vmatpush2.msra.mxu0 0.0
    %2593 = vmatprep.subr.mxu0 0.0
    %2594 = vmatpush2.msra.mxu0 0.0
    %2595 = vmatprep.subr.mxu0 0.0
    %2596 = vmatpush2.msra.mxu0 0.0
    %2597 = vmatprep.subr.mxu0 0.0
    %2598 = vmatpush2.msra.mxu0 0.0
    %2599 = vmatprep.subr.mxu0 0.0
    %2600 = vmatpush2.msra.mxu0 0.0
    %2601 = vmatprep.subr.mxu0 0.0
    %2602 = vmatpush2.msra.mxu0 0.0
    %2603 = vmatprep.subr.mxu0 0.0
    %2604 = vmatpush2.msra.mxu0 0.0
    %2605 = vmatprep.subr.mxu0 0.0
    %2606 = vmatpush2.msra.mxu0 0.0
    %2607 = vmatprep.subr.mxu0 0.0
    %2608 = vmatpush2.msra.mxu0 0.0
    %2609 = vmatprep.subr.mxu0 0.0
    %2610 = vmatpush2.msra.mxu0 0.0
    %2611 = vmatprep.mubr.f32.mxu0 0.0
    %2612 = vmatmul.mubr.f32.gmra.mxu0 %v2474
    %v2613 = vpop.f32.mrf.mxu0
    %v2614 = vadd.f32 0.0, %v2613
    %v2615 = vpop.f32.mrf.mxu0
    %v2616 = vadd.f32 0.0, %v2615
    %2617 = vdwg.mxu0
    %v2622 = vrot.slane %v2543, 5
    %v2623 = vrot.slane %v2545, 5
    %v2624 = vrot.slane %v2614, 5
    %v2625 = vrot.slane %v2616, 5
    %v2630 = vadd.f32 %v1826, %v2622
    %v2631 = vadd.f32 %v1828, %v2623
    %v2632 = vadd.f32 %v1897, %v2624
    %v2633 = vadd.f32 %v1899, %v2625
    %v2634 = vxor.u32 %v2630, 2147483648
    %v2635 = vmul.f32 %v2634, 1.442695
    %v2636 = vpow.pop %v2635
    %v2637 = vadd.f32 %v2636, 1.0
    %v2638 = vrcp.pop %v2637
    %v2639 = vmul.f32 1.0, %v2638
    %v2640 = vxor.u32 %v2631, 2147483648
    %v2641 = vmul.f32 %v2640, 1.442695
    %v2642 = vpow.pop %v2641
    %v2643 = vadd.f32 %v2642, 1.0
    %v2644 = vrcp.pop %v2643
    %v2645 = vmul.f32 1.0, %v2644
    %v2646 = vtanh.pop %v2632
    %v2647 = vxor.u32 %v2633, 2147483648
    %v2648 = vmul.f32 %v2647, 1.442695
    %v2649 = vpow.pop %v2648
    %v2650 = vadd.f32 %v2649, 1.0
    %v2651 = vrcp.pop %v2650
    %v2652 = vmul.f32 1.0, %v2651
    %v2654 = vrot.slane %v2469, 7
    %v2656 = vmul.f32 %v2645, %v2654
    %v2657 = vmul.f32 %v2639, %v2646
    %v2658 = vadd.f32 %v2656, %v2657
    %v2659 = vtanh.pop %v2658
    %v2660 = vmul.f32 %v2652, %v2659
    %v2662 = vrot.slane %v2660, 3
    %v2663 = vsel %vm1921, %v2662, 0
    %2665 = vmatprep.subr.mxu0 0.0
    %2666 = vmatpush1.msra.mxu0 0.0
    %2667 = vmatprep.subr.mxu0 0.0
    %2668 = vmatpush1.msra.mxu0 0.0
    %2669 = vmatprep.subr.mxu0 0.0
    %2670 = vmatpush1.msra.mxu0 0.0
    %2671 = vmatprep.subr.mxu0 0.0
    %2672 = vmatpush1.msra.mxu0 0.0
    %2673 = vmatprep.subr.mxu0 0.0
    %2674 = vmatpush1.msra.mxu0 0.0
    %2675 = vmatprep.subr.mxu0 0.0
    %2676 = vmatpush1.msra.mxu0 0.0
    %2677 = vmatprep.subr.mxu0 0.0
    %2678 = vmatpush1.msra.mxu0 0.0
    %2679 = vmatprep.subr.mxu0 0.0
    %2680 = vmatpush1.msra.mxu0 0.0
    %2681 = vmatprep.subr.mxu0 0.0
    %2682 = vmatpush1.msra.mxu0 0.0
    %2683 = vmatprep.subr.mxu0 0.0
    %2684 = vmatpush1.msra.mxu0 0.0
    %2685 = vmatprep.subr.mxu0 0.0
    %2686 = vmatpush1.msra.mxu0 0.0
    %2687 = vmatprep.subr.mxu0 %v1918
    %2688 = vmatpush1.msra.mxu0 %v1917
    %2689 = vmatprep.subr.mxu0 %v1914
    %2690 = vmatpush1.msra.mxu0 %v1913
    %2691 = vmatprep.subr.mxu0 %v1910
    %2692 = vmatpush1.msra.mxu0 %v1909
    %2693 = vmatprep.subr.mxu0 %v1906
    %2694 = vmatpush1.msra.mxu0 %v1905
    %2695 = vmatprep.subr.mxu0 %v1902
    %2696 = vmatpush1.msra.mxu0 %v1901
    %2697 = vmatprep.subr.mxu0 0.0
    %2698 = vmatpush2.msra.mxu0 0.0
    %2699 = vmatprep.subr.mxu0 0.0
    %2700 = vmatpush2.msra.mxu0 0.0
    %2701 = vmatprep.subr.mxu0 0.0
    %2702 = vmatpush2.msra.mxu0 0.0
    %2703 = vmatprep.subr.mxu0 0.0
    %2704 = vmatpush2.msra.mxu0 0.0
    %2705 = vmatprep.subr.mxu0 0.0
    %2706 = vmatpush2.msra.mxu0 0.0
    %2707 = vmatprep.subr.mxu0 0.0
    %2708 = vmatpush2.msra.mxu0 0.0
    %2709 = vmatprep.subr.mxu0 0.0
    %2710 = vmatpush2.msra.mxu0 0.0
    %2711 = vmatprep.subr.mxu0 0.0
    %2712 = vmatpush2.msra.mxu0 0.0
    %2713 = vmatprep.subr.mxu0 0.0
    %2714 = vmatpush2.msra.mxu0 0.0
    %2715 = vmatprep.subr.mxu0 0.0
    %2716 = vmatpush2.msra.mxu0 0.0
    %2717 = vmatprep.subr.mxu0 0.0
    %2718 = vmatpush2.msra.mxu0 0.0
    %2719 = vmatprep.subr.mxu0 0.0
    %2720 = vmatpush2.msra.mxu0 0.0
    %2721 = vmatprep.subr.mxu0 0.0
    %2722 = vmatpush2.msra.mxu0 0.0
    %2723 = vmatprep.subr.mxu0 0.0
    %2724 = vmatpush2.msra.mxu0 0.0
    %2725 = vmatprep.subr.mxu0 0.0
    %2726 = vmatpush2.msra.mxu0 0.0
    %2727 = vmatprep.subr.mxu0 0.0
    %2728 = vmatpush2.msra.mxu0 0.0
    %2729 = vmatprep.mubr.f32.mxu0 0.0
    %2730 = vmatmul.mubr.f32.gmra.mxu0 %v2663
    %v2731 = vpop.f32.mrf.mxu0
    %v2732 = vadd.f32 0.0, %v2731
    %v2733 = vpop.f32.mrf.mxu0
    %v2734 = vadd.f32 0.0, %v2733
    %2735 = vdwg.mxu0
    %2736 = vmatprep.subr.mxu0 0.0
    %2737 = vmatpush1.msra.mxu0 0.0
    %2738 = vmatprep.subr.mxu0 0.0
    %2739 = vmatpush1.msra.mxu0 0.0
    %2740 = vmatprep.subr.mxu0 0.0
    %2741 = vmatpush1.msra.mxu0 0.0
    %2742 = vmatprep.subr.mxu0 0.0
    %2743 = vmatpush1.msra.mxu0 0.0
    %2744 = vmatprep.subr.mxu0 0.0
    %2745 = vmatpush1.msra.mxu0 0.0
    %2746 = vmatprep.subr.mxu0 0.0
    %2747 = vmatpush1.msra.mxu0 0.0
    %2748 = vmatprep.subr.mxu0 0.0
    %2749 = vmatpush1.msra.mxu0 0.0
    %2750 = vmatprep.subr.mxu0 0.0
    %2751 = vmatpush1.msra.mxu0 0.0
    %2752 = vmatprep.subr.mxu0 0.0
    %2753 = vmatpush1.msra.mxu0 0.0
    %2754 = vmatprep.subr.mxu0 0.0
    %2755 = vmatpush1.msra.mxu0 0.0
    %2756 = vmatprep.subr.mxu0 0.0
    %2757 = vmatpush1.msra.mxu0 0.0
    %2758 = vmatprep.subr.mxu0 %v1920
    %2759 = vmatpush1.msra.mxu0 %v1919
    %2760 = vmatprep.subr.mxu0 %v1916
    %2761 = vmatpush1.msra.mxu0 %v1915
    %2762 = vmatprep.subr.mxu0 %v1912
    %2763 = vmatpush1.msra.mxu0 %v1911
    %2764 = vmatprep.subr.mxu0 %v1908
    %2765 = vmatpush1.msra.mxu0 %v1907
    %2766 = vmatprep.subr.mxu0 %v1904
    %2767 = vmatpush1.msra.mxu0 %v1903
    %2768 = vmatprep.subr.mxu0 0.0
    %2769 = vmatpush2.msra.mxu0 0.0
    %2770 = vmatprep.subr.mxu0 0.0
    %2771 = vmatpush2.msra.mxu0 0.0
    %2772 = vmatprep.subr.mxu0 0.0
    %2773 = vmatpush2.msra.mxu0 0.0
    %2774 = vmatprep.subr.mxu0 0.0
    %2775 = vmatpush2.msra.mxu0 0.0
    %2776 = vmatprep.subr.mxu0 0.0
    %2777 = vmatpush2.msra.mxu0 0.0
    %2778 = vmatprep.subr.mxu0 0.0
    %2779 = vmatpush2.msra.mxu0 0.0
    %2780 = vmatprep.subr.mxu0 0.0
    %2781 = vmatpush2.msra.mxu0 0.0
    %2782 = vmatprep.subr.mxu0 0.0
    %2783 = vmatpush2.msra.mxu0 0.0
    %2784 = vmatprep.subr.mxu0 0.0
    %2785 = vmatpush2.msra.mxu0 0.0
    %2786 = vmatprep.subr.mxu0 0.0
    %2787 = vmatpush2.msra.mxu0 0.0
    %2788 = vmatprep.subr.mxu0 0.0
    %2789 = vmatpush2.msra.mxu0 0.0
    %2790 = vmatprep.subr.mxu0 0.0
    %2791 = vmatpush2.msra.mxu0 0.0
    %2792 = vmatprep.subr.mxu0 0.0
    %2793 = vmatpush2.msra.mxu0 0.0
    %2794 = vmatprep.subr.mxu0 0.0
    %2795 = vmatpush2.msra.mxu0 0.0
    %2796 = vmatprep.subr.mxu0 0.0
    %2797 = vmatpush2.msra.mxu0 0.0
    %2798 = vmatprep.subr.mxu0 0.0
    %2799 = vmatpush2.msra.mxu0 0.0
    %2800 = vmatprep.mubr.f32.mxu0 0.0
    %2801 = vmatmul.mubr.f32.gmra.mxu0 %v2663
    %v2802 = vpop.f32.mrf.mxu0
    %v2803 = vadd.f32 0.0, %v2802
    %v2804 = vpop.f32.mrf.mxu0
    %v2805 = vadd.f32 0.0, %v2804
    %2806 = vdwg.mxu0
    %v2811 = vrot.slane %v2732, 4
    %v2812 = vrot.slane %v2734, 4
    %v2813 = vrot.slane %v2803, 4
    %v2814 = vrot.slane %v2805, 4
    %v2819 = vadd.f32 %v1826, %v2811
    %v2820 = vadd.f32 %v1828, %v2812
    %v2821 = vadd.f32 %v1897, %v2813
    %v2822 = vadd.f32 %v1899, %v2814
    %v2823 = vxor.u32 %v2819, 2147483648
    %v2824 = vmul.f32 %v2823, 1.442695
    %v2825 = vpow.pop %v2824
    %v2826 = vadd.f32 %v2825, 1.0
    %v2827 = vrcp.pop %v2826
    %v2828 = vmul.f32 1.0, %v2827
    %v2829 = vxor.u32 %v2820, 2147483648
    %v2830 = vmul.f32 %v2829, 1.442695
    %v2831 = vpow.pop %v2830
    %v2832 = vadd.f32 %v2831, 1.0
    %v2833 = vrcp.pop %v2832
    %v2834 = vmul.f32 1.0, %v2833
    %v2835 = vtanh.pop %v2821
    %v2836 = vxor.u32 %v2822, 2147483648
    %v2837 = vmul.f32 %v2836, 1.442695
    %v2838 = vpow.pop %v2837
    %v2839 = vadd.f32 %v2838, 1.0
    %v2840 = vrcp.pop %v2839
    %v2841 = vmul.f32 1.0, %v2840
    %v2843 = vrot.slane %v2658, 7
    %v2845 = vmul.f32 %v2834, %v2843
    %v2846 = vmul.f32 %v2828, %v2835
    %v2847 = vadd.f32 %v2845, %v2846
    %v2848 = vtanh.pop %v2847
    %v2849 = vmul.f32 %v2841, %v2848
    %v2851 = vrot.slane %v2849, 4
    %v2852 = vsel %vm1921, %v2851, 0
    %2854 = vmatprep.subr.mxu0 0.0
    %2855 = vmatpush1.msra.mxu0 0.0
    %2856 = vmatprep.subr.mxu0 0.0
    %2857 = vmatpush1.msra.mxu0 0.0
    %2858 = vmatprep.subr.mxu0 0.0
    %2859 = vmatpush1.msra.mxu0 0.0
    %2860 = vmatprep.subr.mxu0 0.0
    %2861 = vmatpush1.msra.mxu0 0.0
    %2862 = vmatprep.subr.mxu0 0.0
    %2863 = vmatpush1.msra.mxu0 0.0
    %2864 = vmatprep.subr.mxu0 0.0
    %2865 = vmatpush1.msra.mxu0 0.0
    %2866 = vmatprep.subr.mxu0 0.0
    %2867 = vmatpush1.msra.mxu0 0.0
    %2868 = vmatprep.subr.mxu0 0.0
    %2869 = vmatpush1.msra.mxu0 0.0
    %2870 = vmatprep.subr.mxu0 0.0
    %2871 = vmatpush1.msra.mxu0 0.0
    %2872 = vmatprep.subr.mxu0 0.0
    %2873 = vmatpush1.msra.mxu0 0.0
    %2874 = vmatprep.subr.mxu0 0.0
    %2875 = vmatpush1.msra.mxu0 0.0
    %2876 = vmatprep.subr.mxu0 %v1918
    %2877 = vmatpush1.msra.mxu0 %v1917
    %2878 = vmatprep.subr.mxu0 %v1914
    %2879 = vmatpush1.msra.mxu0 %v1913
    %2880 = vmatprep.subr.mxu0 %v1910
    %2881 = vmatpush1.msra.mxu0 %v1909
    %2882 = vmatprep.subr.mxu0 %v1906
    %2883 = vmatpush1.msra.mxu0 %v1905
    %2884 = vmatprep.subr.mxu0 %v1902
    %2885 = vmatpush1.msra.mxu0 %v1901
    %2886 = vmatprep.subr.mxu0 0.0
    %2887 = vmatpush2.msra.mxu0 0.0
    %2888 = vmatprep.subr.mxu0 0.0
    %2889 = vmatpush2.msra.mxu0 0.0
    %2890 = vmatprep.subr.mxu0 0.0
    %2891 = vmatpush2.msra.mxu0 0.0
    %2892 = vmatprep.subr.mxu0 0.0
    %2893 = vmatpush2.msra.mxu0 0.0
    %2894 = vmatprep.subr.mxu0 0.0
    %2895 = vmatpush2.msra.mxu0 0.0
    %2896 = vmatprep.subr.mxu0 0.0
    %2897 = vmatpush2.msra.mxu0 0.0
    %2898 = vmatprep.subr.mxu0 0.0
    %2899 = vmatpush2.msra.mxu0 0.0
    %2900 = vmatprep.subr.mxu0 0.0
    %2901 = vmatpush2.msra.mxu0 0.0
    %2902 = vmatprep.subr.mxu0 0.0
    %2903 = vmatpush2.msra.mxu0 0.0
    %2904 = vmatprep.subr.mxu0 0.0
    %2905 = vmatpush2.msra.mxu0 0.0
    %2906 = vmatprep.subr.mxu0 0.0
    %2907 = vmatpush2.msra.mxu0 0.0
    %2908 = vmatprep.subr.mxu0 0.0
    %2909 = vmatpush2.msra.mxu0 0.0
    %2910 = vmatprep.subr.mxu0 0.0
    %2911 = vmatpush2.msra.mxu0 0.0
    %2912 = vmatprep.subr.mxu0 0.0
    %2913 = vmatpush2.msra.mxu0 0.0
    %2914 = vmatprep.subr.mxu0 0.0
    %2915 = vmatpush2.msra.mxu0 0.0
    %2916 = vmatprep.subr.mxu0 0.0
    %2917 = vmatpush2.msra.mxu0 0.0
    %2918 = vmatprep.mubr.f32.mxu0 0.0
    %2919 = vmatmul.mubr.f32.gmra.mxu0 %v2852
    %v2920 = vpop.f32.mrf.mxu0
    %v2921 = vadd.f32 0.0, %v2920
    %v2922 = vpop.f32.mrf.mxu0
    %v2923 = vadd.f32 0.0, %v2922
    %2924 = vdwg.mxu0
    %2925 = vmatprep.subr.mxu0 0.0
    %2926 = vmatpush1.msra.mxu0 0.0
    %2927 = vmatprep.subr.mxu0 0.0
    %2928 = vmatpush1.msra.mxu0 0.0
    %2929 = vmatprep.subr.mxu0 0.0
    %2930 = vmatpush1.msra.mxu0 0.0
    %2931 = vmatprep.subr.mxu0 0.0
    %2932 = vmatpush1.msra.mxu0 0.0
    %2933 = vmatprep.subr.mxu0 0.0
    %2934 = vmatpush1.msra.mxu0 0.0
    %2935 = vmatprep.subr.mxu0 0.0
    %2936 = vmatpush1.msra.mxu0 0.0
    %2937 = vmatprep.subr.mxu0 0.0
    %2938 = vmatpush1.msra.mxu0 0.0
    %2939 = vmatprep.subr.mxu0 0.0
    %2940 = vmatpush1.msra.mxu0 0.0
    %2941 = vmatprep.subr.mxu0 0.0
    %2942 = vmatpush1.msra.mxu0 0.0
    %2943 = vmatprep.subr.mxu0 0.0
    %2944 = vmatpush1.msra.mxu0 0.0
    %2945 = vmatprep.subr.mxu0 0.0
    %2946 = vmatpush1.msra.mxu0 0.0
    %2947 = vmatprep.subr.mxu0 %v1920
    %2948 = vmatpush1.msra.mxu0 %v1919
    %2949 = vmatprep.subr.mxu0 %v1916
    %2950 = vmatpush1.msra.mxu0 %v1915
    %2951 = vmatprep.subr.mxu0 %v1912
    %2952 = vmatpush1.msra.mxu0 %v1911
    %2953 = vmatprep.subr.mxu0 %v1908
    %2954 = vmatpush1.msra.mxu0 %v1907
    %2955 = vmatprep.subr.mxu0 %v1904
    %2956 = vmatpush1.msra.mxu0 %v1903
    %2957 = vmatprep.subr.mxu0 0.0
    %2958 = vmatpush2.msra.mxu0 0.0
    %2959 = vmatprep.subr.mxu0 0.0
    %2960 = vmatpush2.msra.mxu0 0.0
    %2961 = vmatprep.subr.mxu0 0.0
    %2962 = vmatpush2.msra.mxu0 0.0
    %2963 = vmatprep.subr.mxu0 0.0
    %2964 = vmatpush2.msra.mxu0 0.0
    %2965 = vmatprep.subr.mxu0 0.0
    %2966 = vmatpush2.msra.mxu0 0.0
    %2967 = vmatprep.subr.mxu0 0.0
    %2968 = vmatpush2.msra.mxu0 0.0
    %2969 = vmatprep.subr.mxu0 0.0
    %2970 = vmatpush2.msra.mxu0 0.0
    %2971 = vmatprep.subr.mxu0 0.0
    %2972 = vmatpush2.msra.mxu0 0.0
    %2973 = vmatprep.subr.mxu0 0.0
    %2974 = vmatpush2.msra.mxu0 0.0
    %2975 = vmatprep.subr.mxu0 0.0
    %2976 = vmatpush2.msra.mxu0 0.0
    %2977 = vmatprep.subr.mxu0 0.0
    %2978 = vmatpush2.msra.mxu0 0.0
    %2979 = vmatprep.subr.mxu0 0.0
    %2980 = vmatpush2.msra.mxu0 0.0
    %2981 = vmatprep.subr.mxu0 0.0
    %2982 = vmatpush2.msra.mxu0 0.0
    %2983 = vmatprep.subr.mxu0 0.0
    %2984 = vmatpush2.msra.mxu0 0.0
    %2985 = vmatprep.subr.mxu0 0.0
    %2986 = vmatpush2.msra.mxu0 0.0
    %2987 = vmatprep.subr.mxu0 0.0
    %2988 = vmatpush2.msra.mxu0 0.0
    %2989 = vmatprep.mubr.f32.mxu0 0.0
    %2990 = vmatmul.mubr.f32.gmra.mxu0 %v2852
    %v2991 = vpop.f32.mrf.mxu0
    %v2992 = vadd.f32 0.0, %v2991
    %v2993 = vpop.f32.mrf.mxu0
    %v2994 = vadd.f32 0.0, %v2993
    %2995 = vdwg.mxu0
    %v3000 = vrot.slane %v2921, 3
    %v3001 = vrot.slane %v2923, 3
    %v3002 = vrot.slane %v2992, 3
    %v3003 = vrot.slane %v2994, 3
    %v3008 = vadd.f32 %v1826, %v3000
    %v3009 = vadd.f32 %v1828, %v3001
    %v3010 = vadd.f32 %v1897, %v3002
    %v3011 = vadd.f32 %v1899, %v3003
    %v3012 = vxor.u32 %v3008, 2147483648
    %v3013 = vmul.f32 %v3012, 1.442695
    %v3014 = vpow.pop %v3013
    %v3015 = vadd.f32 %v3014, 1.0
    %v3016 = vrcp.pop %v3015
    %v3017 = vmul.f32 1.0, %v3016
    %v3018 = vxor.u32 %v3009, 2147483648
    %v3019 = vmul.f32 %v3018, 1.442695
    %v3020 = vpow.pop %v3019
    %v3021 = vadd.f32 %v3020, 1.0
    %v3022 = vrcp.pop %v3021
    %v3023 = vmul.f32 1.0, %v3022
    %v3024 = vtanh.pop %v3010
    %v3025 = vxor.u32 %v3011, 2147483648
    %v3026 = vmul.f32 %v3025, 1.442695
    %v3027 = vpow.pop %v3026
    %v3028 = vadd.f32 %v3027, 1.0
    %v3029 = vrcp.pop %v3028
    %v3030 = vmul.f32 1.0, %v3029
    %v3032 = vrot.slane %v2847, 7
    %v3034 = vmul.f32 %v3023, %v3032
    %v3035 = vmul.f32 %v3017, %v3024
    %v3036 = vadd.f32 %v3034, %v3035
    %v3037 = vtanh.pop %v3036
    %v3038 = vmul.f32 %v3030, %v3037
    %v3040 = vrot.slane %v3038, 5
    %v3041 = vsel %vm1921, %v3040, 0
    %3043 = vmatprep.subr.mxu0 0.0
    %3044 = vmatpush1.msra.mxu0 0.0
    %3045 = vmatprep.subr.mxu0 0.0
    %3046 = vmatpush1.msra.mxu0 0.0
    %3047 = vmatprep.subr.mxu0 0.0
    %3048 = vmatpush1.msra.mxu0 0.0
    %3049 = vmatprep.subr.mxu0 0.0
    %3050 = vmatpush1.msra.mxu0 0.0
    %3051 = vmatprep.subr.mxu0 0.0
    %3052 = vmatpush1.msra.mxu0 0.0
    %3053 = vmatprep.subr.mxu0 0.0
    %3054 = vmatpush1.msra.mxu0 0.0
    %3055 = vmatprep.subr.mxu0 0.0
    %3056 = vmatpush1.msra.mxu0 0.0
    %3057 = vmatprep.subr.mxu0 0.0
    %3058 = vmatpush1.msra.mxu0 0.0
    %3059 = vmatprep.subr.mxu0 0.0
    %3060 = vmatpush1.msra.mxu0 0.0
    %3061 = vmatprep.subr.mxu0 0.0
    %3062 = vmatpush1.msra.mxu0 0.0
    %3063 = vmatprep.subr.mxu0 0.0
    %3064 = vmatpush1.msra.mxu0 0.0
    %3065 = vmatprep.subr.mxu0 %v1918
    %3066 = vmatpush1.msra.mxu0 %v1917
    %3067 = vmatprep.subr.mxu0 %v1914
    %3068 = vmatpush1.msra.mxu0 %v1913
    %3069 = vmatprep.subr.mxu0 %v1910
    %3070 = vmatpush1.msra.mxu0 %v1909
    %3071 = vmatprep.subr.mxu0 %v1906
    %3072 = vmatpush1.msra.mxu0 %v1905
    %3073 = vmatprep.subr.mxu0 %v1902
    %3074 = vmatpush1.msra.mxu0 %v1901
    %3075 = vmatprep.subr.mxu0 0.0
    %3076 = vmatpush2.msra.mxu0 0.0
    %3077 = vmatprep.subr.mxu0 0.0
    %3078 = vmatpush2.msra.mxu0 0.0
    %3079 = vmatprep.subr.mxu0 0.0
    %3080 = vmatpush2.msra.mxu0 0.0
    %3081 = vmatprep.subr.mxu0 0.0
    %3082 = vmatpush2.msra.mxu0 0.0
    %3083 = vmatprep.subr.mxu0 0.0
    %3084 = vmatpush2.msra.mxu0 0.0
    %3085 = vmatprep.subr.mxu0 0.0
    %3086 = vmatpush2.msra.mxu0 0.0
    %3087 = vmatprep.subr.mxu0 0.0
    %3088 = vmatpush2.msra.mxu0 0.0
    %3089 = vmatprep.subr.mxu0 0.0
    %3090 = vmatpush2.msra.mxu0 0.0
    %3091 = vmatprep.subr.mxu0 0.0
    %3092 = vmatpush2.msra.mxu0 0.0
    %3093 = vmatprep.subr.mxu0 0.0
    %3094 = vmatpush2.msra.mxu0 0.0
    %3095 = vmatprep.subr.mxu0 0.0
    %3096 = vmatpush2.msra.mxu0 0.0
    %3097 = vmatprep.subr.mxu0 0.0
    %3098 = vmatpush2.msra.mxu0 0.0
    %3099 = vmatprep.subr.mxu0 0.0
    %3100 = vmatpush2.msra.mxu0 0.0
    %3101 = vmatprep.subr.mxu0 0.0
    %3102 = vmatpush2.msra.mxu0 0.0
    %3103 = vmatprep.subr.mxu0 0.0
    %3104 = vmatpush2.msra.mxu0 0.0
    %3105 = vmatprep.subr.mxu0 0.0
    %3106 = vmatpush2.msra.mxu0 0.0
    %3107 = vmatprep.mubr.f32.mxu0 0.0
    %3108 = vmatmul.mubr.f32.gmra.mxu0 %v3041
    %v3109 = vpop.f32.mrf.mxu0
    %v3110 = vadd.f32 0.0, %v3109
    %v3111 = vpop.f32.mrf.mxu0
    %v3112 = vadd.f32 0.0, %v3111
    %3113 = vdwg.mxu0
    %3114 = vmatprep.subr.mxu0 0.0
    %3115 = vmatpush1.msra.mxu0 0.0
    %3116 = vmatprep.subr.mxu0 0.0
    %3117 = vmatpush1.msra.mxu0 0.0
    %3118 = vmatprep.subr.mxu0 0.0
    %3119 = vmatpush1.msra.mxu0 0.0
    %3120 = vmatprep.subr.mxu0 0.0
    %3121 = vmatpush1.msra.mxu0 0.0
    %3122 = vmatprep.subr.mxu0 0.0
    %3123 = vmatpush1.msra.mxu0 0.0
    %3124 = vmatprep.subr.mxu0 0.0
    %3125 = vmatpush1.msra.mxu0 0.0
    %3126 = vmatprep.subr.mxu0 0.0
    %3127 = vmatpush1.msra.mxu0 0.0
    %3128 = vmatprep.subr.mxu0 0.0
    %3129 = vmatpush1.msra.mxu0 0.0
    %3130 = vmatprep.subr.mxu0 0.0
    %3131 = vmatpush1.msra.mxu0 0.0
    %3132 = vmatprep.subr.mxu0 0.0
    %3133 = vmatpush1.msra.mxu0 0.0
    %3134 = vmatprep.subr.mxu0 0.0
    %3135 = vmatpush1.msra.mxu0 0.0
    %3136 = vmatprep.subr.mxu0 %v1920
    %3137 = vmatpush1.msra.mxu0 %v1919
    %3138 = vmatprep.subr.mxu0 %v1916
    %3139 = vmatpush1.msra.mxu0 %v1915
    %3140 = vmatprep.subr.mxu0 %v1912
    %3141 = vmatpush1.msra.mxu0 %v1911
    %3142 = vmatprep.subr.mxu0 %v1908
    %3143 = vmatpush1.msra.mxu0 %v1907
    %3144 = vmatprep.subr.mxu0 %v1904
    %3145 = vmatpush1.msra.mxu0 %v1903
    %3146 = vmatprep.subr.mxu0 0.0
    %3147 = vmatpush2.msra.mxu0 0.0
    %3148 = vmatprep.subr.mxu0 0.0
    %3149 = vmatpush2.msra.mxu0 0.0
    %3150 = vmatprep.subr.mxu0 0.0
    %3151 = vmatpush2.msra.mxu0 0.0
    %3152 = vmatprep.subr.mxu0 0.0
    %3153 = vmatpush2.msra.mxu0 0.0
    %3154 = vmatprep.subr.mxu0 0.0
    %3155 = vmatpush2.msra.mxu0 0.0
    %3156 = vmatprep.subr.mxu0 0.0
    %3157 = vmatpush2.msra.mxu0 0.0
    %3158 = vmatprep.subr.mxu0 0.0
    %3159 = vmatpush2.msra.mxu0 0.0
    %3160 = vmatprep.subr.mxu0 0.0
    %3161 = vmatpush2.msra.mxu0 0.0
    %3162 = vmatprep.subr.mxu0 0.0
    %3163 = vmatpush2.msra.mxu0 0.0
    %3164 = vmatprep.subr.mxu0 0.0
    %3165 = vmatpush2.msra.mxu0 0.0
    %3166 = vmatprep.subr.mxu0 0.0
    %3167 = vmatpush2.msra.mxu0 0.0
    %3168 = vmatprep.subr.mxu0 0.0
    %3169 = vmatpush2.msra.mxu0 0.0
    %3170 = vmatprep.subr.mxu0 0.0
    %3171 = vmatpush2.msra.mxu0 0.0
    %3172 = vmatprep.subr.mxu0 0.0
    %3173 = vmatpush2.msra.mxu0 0.0
    %3174 = vmatprep.subr.mxu0 0.0
    %3175 = vmatpush2.msra.mxu0 0.0
    %3176 = vmatprep.subr.mxu0 0.0
    %3177 = vmatpush2.msra.mxu0 0.0
    %3178 = vmatprep.mubr.f32.mxu0 0.0
    %3179 = vmatmul.mubr.f32.gmra.mxu0 %v3041
    %v3180 = vpop.f32.mrf.mxu0
    %v3181 = vadd.f32 0.0, %v3180
    %v3182 = vpop.f32.mrf.mxu0
    %v3183 = vadd.f32 0.0, %v3182
    %3184 = vdwg.mxu0
    %v3189 = vrot.slane %v3110, 2
    %v3190 = vrot.slane %v3112, 2
    %v3191 = vrot.slane %v3181, 2
    %v3192 = vrot.slane %v3183, 2
    %v3197 = vadd.f32 %v1826, %v3189
    %v3198 = vadd.f32 %v1828, %v3190
    %v3199 = vadd.f32 %v1897, %v3191
    %v3200 = vadd.f32 %v1899, %v3192
    %v3201 = vxor.u32 %v3197, 2147483648
    %v3202 = vmul.f32 %v3201, 1.442695
    %v3203 = vpow.pop %v3202
    %v3204 = vadd.f32 %v3203, 1.0
    %v3205 = vrcp.pop %v3204
    %v3206 = vmul.f32 1.0, %v3205
    %v3207 = vxor.u32 %v3198, 2147483648
    %v3208 = vmul.f32 %v3207, 1.442695
    %v3209 = vpow.pop %v3208
    %v3210 = vadd.f32 %v3209, 1.0
    %v3211 = vrcp.pop %v3210
    %v3212 = vmul.f32 1.0, %v3211
    %v3213 = vtanh.pop %v3199
    %v3214 = vxor.u32 %v3200, 2147483648
    %v3215 = vmul.f32 %v3214, 1.442695
    %v3216 = vpow.pop %v3215
    %v3217 = vadd.f32 %v3216, 1.0
    %v3218 = vrcp.pop %v3217
    %v3219 = vmul.f32 1.0, %v3218
    %v3221 = vrot.slane %v3036, 7
    %v3223 = vmul.f32 %v3212, %v3221
    %v3224 = vmul.f32 %v3206, %v3213
    %v3225 = vadd.f32 %v3223, %v3224
    %v3226 = vtanh.pop %v3225
    %v3227 = vmul.f32 %v3219, %v3226
    %v3229 = vrot.slane %v3227, 6
    %v3230 = vsel %vm1921, %v3229, 0
    %3232 = vmatprep.subr.mxu0 0.0
    %3233 = vmatpush1.msra.mxu0 0.0
    %3234 = vmatprep.subr.mxu0 0.0
    %3235 = vmatpush1.msra.mxu0 0.0
    %3236 = vmatprep.subr.mxu0 0.0
    %3237 = vmatpush1.msra.mxu0 0.0
    %3238 = vmatprep.subr.mxu0 0.0
    %3239 = vmatpush1.msra.mxu0 0.0
    %3240 = vmatprep.subr.mxu0 0.0
    %3241 = vmatpush1.msra.mxu0 0.0
    %3242 = vmatprep.subr.mxu0 0.0
    %3243 = vmatpush1.msra.mxu0 0.0
    %3244 = vmatprep.subr.mxu0 0.0
    %3245 = vmatpush1.msra.mxu0 0.0
    %3246 = vmatprep.subr.mxu0 0.0
    %3247 = vmatpush1.msra.mxu0 0.0
    %3248 = vmatprep.subr.mxu0 0.0
    %3249 = vmatpush1.msra.mxu0 0.0
    %3250 = vmatprep.subr.mxu0 0.0
    %3251 = vmatpush1.msra.mxu0 0.0
    %3252 = vmatprep.subr.mxu0 0.0
    %3253 = vmatpush1.msra.mxu0 0.0
    %3254 = vmatprep.subr.mxu0 %v1918
    %3255 = vmatpush1.msra.mxu0 %v1917
    %3256 = vmatprep.subr.mxu0 %v1914
    %3257 = vmatpush1.msra.mxu0 %v1913
    %3258 = vmatprep.subr.mxu0 %v1910
    %3259 = vmatpush1.msra.mxu0 %v1909
    %3260 = vmatprep.subr.mxu0 %v1906
    %3261 = vmatpush1.msra.mxu0 %v1905
    %3262 = vmatprep.subr.mxu0 %v1902
    %3263 = vmatpush1.msra.mxu0 %v1901
    %3264 = vmatprep.subr.mxu0 0.0
    %3265 = vmatpush2.msra.mxu0 0.0
    %3266 = vmatprep.subr.mxu0 0.0
    %3267 = vmatpush2.msra.mxu0 0.0
    %3268 = vmatprep.subr.mxu0 0.0
    %3269 = vmatpush2.msra.mxu0 0.0
    %3270 = vmatprep.subr.mxu0 0.0
    %3271 = vmatpush2.msra.mxu0 0.0
    %3272 = vmatprep.subr.mxu0 0.0
    %3273 = vmatpush2.msra.mxu0 0.0
    %3274 = vmatprep.subr.mxu0 0.0
    %3275 = vmatpush2.msra.mxu0 0.0
    %3276 = vmatprep.subr.mxu0 0.0
    %3277 = vmatpush2.msra.mxu0 0.0
    %3278 = vmatprep.subr.mxu0 0.0
    %3279 = vmatpush2.msra.mxu0 0.0
    %3280 = vmatprep.subr.mxu0 0.0
    %3281 = vmatpush2.msra.mxu0 0.0
    %3282 = vmatprep.subr.mxu0 0.0
    %3283 = vmatpush2.msra.mxu0 0.0
    %3284 = vmatprep.subr.mxu0 0.0
    %3285 = vmatpush2.msra.mxu0 0.0
    %3286 = vmatprep.subr.mxu0 0.0
    %3287 = vmatpush2.msra.mxu0 0.0
    %3288 = vmatprep.subr.mxu0 0.0
    %3289 = vmatpush2.msra.mxu0 0.0
    %3290 = vmatprep.subr.mxu0 0.0
    %3291 = vmatpush2.msra.mxu0 0.0
    %3292 = vmatprep.subr.mxu0 0.0
    %3293 = vmatpush2.msra.mxu0 0.0
    %3294 = vmatprep.subr.mxu0 0.0
    %3295 = vmatpush2.msra.mxu0 0.0
    %3296 = vmatprep.mubr.f32.mxu0 0.0
    %3297 = vmatmul.mubr.f32.gmra.mxu0 %v3230
    %v3298 = vpop.f32.mrf.mxu0
    %v3299 = vadd.f32 0.0, %v3298
    %v3300 = vpop.f32.mrf.mxu0
    %v3301 = vadd.f32 0.0, %v3300
    %3302 = vdwg.mxu0
    %3303 = vmatprep.subr.mxu0 0.0
    %3304 = vmatpush1.msra.mxu0 0.0
    %3305 = vmatprep.subr.mxu0 0.0
    %3306 = vmatpush1.msra.mxu0 0.0
    %3307 = vmatprep.subr.mxu0 0.0
    %3308 = vmatpush1.msra.mxu0 0.0
    %3309 = vmatprep.subr.mxu0 0.0
    %3310 = vmatpush1.msra.mxu0 0.0
    %3311 = vmatprep.subr.mxu0 0.0
    %3312 = vmatpush1.msra.mxu0 0.0
    %3313 = vmatprep.subr.mxu0 0.0
    %3314 = vmatpush1.msra.mxu0 0.0
    %3315 = vmatprep.subr.mxu0 0.0
    %3316 = vmatpush1.msra.mxu0 0.0
    %3317 = vmatprep.subr.mxu0 0.0
    %3318 = vmatpush1.msra.mxu0 0.0
    %3319 = vmatprep.subr.mxu0 0.0
    %3320 = vmatpush1.msra.mxu0 0.0
    %3321 = vmatprep.subr.mxu0 0.0
    %3322 = vmatpush1.msra.mxu0 0.0
    %3323 = vmatprep.subr.mxu0 0.0
    %3324 = vmatpush1.msra.mxu0 0.0
    %3325 = vmatprep.subr.mxu0 %v1920
    %3326 = vmatpush1.msra.mxu0 %v1919
    %3327 = vmatprep.subr.mxu0 %v1916
    %3328 = vmatpush1.msra.mxu0 %v1915
    %3329 = vmatprep.subr.mxu0 %v1912
    %3330 = vmatpush1.msra.mxu0 %v1911
    %3331 = vmatprep.subr.mxu0 %v1908
    %3332 = vmatpush1.msra.mxu0 %v1907
    %3333 = vmatprep.subr.mxu0 %v1904
    %3334 = vmatpush1.msra.mxu0 %v1903
    %3335 = vmatprep.subr.mxu0 0.0
    %3336 = vmatpush2.msra.mxu0 0.0
    %3337 = vmatprep.subr.mxu0 0.0
    %3338 = vmatpush2.msra.mxu0 0.0
    %3339 = vmatprep.subr.mxu0 0.0
    %3340 = vmatpush2.msra.mxu0 0.0
    %3341 = vmatprep.subr.mxu0 0.0
    %3342 = vmatpush2.msra.mxu0 0.0
    %3343 = vmatprep.subr.mxu0 0.0
    %3344 = vmatpush2.msra.mxu0 0.0
    %3345 = vmatprep.subr.mxu0 0.0
    %3346 = vmatpush2.msra.mxu0 0.0
    %3347 = vmatprep.subr.mxu0 0.0
    %3348 = vmatpush2.msra.mxu0 0.0
    %3349 = vmatprep.subr.mxu0 0.0
    %3350 = vmatpush2.msra.mxu0 0.0
    %3351 = vmatprep.subr.mxu0 0.0
    %3352 = vmatpush2.msra.mxu0 0.0
    %3353 = vmatprep.subr.mxu0 0.0
    %3354 = vmatpush2.msra.mxu0 0.0
    %3355 = vmatprep.subr.mxu0 0.0
    %3356 = vmatpush2.msra.mxu0 0.0
    %3357 = vmatprep.subr.mxu0 0.0
    %3358 = vmatpush2.msra.mxu0 0.0
    %3359 = vmatprep.subr.mxu0 0.0
    %3360 = vmatpush2.msra.mxu0 0.0
    %3361 = vmatprep.subr.mxu0 0.0
    %3362 = vmatpush2.msra.mxu0 0.0
    %3363 = vmatprep.subr.mxu0 0.0
    %3364 = vmatpush2.msra.mxu0 0.0
    %3365 = vmatprep.subr.mxu0 0.0
    %3366 = vmatpush2.msra.mxu0 0.0
    %3367 = vmatprep.mubr.f32.mxu0 0.0
    %3368 = vmatmul.mubr.f32.gmra.mxu0 %v3230
    %v3369 = vpop.f32.mrf.mxu0
    %v3370 = vadd.f32 0.0, %v3369
    %v3371 = vpop.f32.mrf.mxu0
    %v3372 = vadd.f32 0.0, %v3371
    %3373 = vdwg.mxu0
    %v3378 = vrot.slane %v3299, 1
    %v3379 = vrot.slane %v3301, 1
    %v3380 = vrot.slane %v3370, 1
    %v3381 = vrot.slane %v3372, 1
    %v3386 = vadd.f32 %v1826, %v3378
    %v3387 = vadd.f32 %v1828, %v3379
    %v3388 = vadd.f32 %v1897, %v3380
    %v3389 = vadd.f32 %v1899, %v3381
    %v3390 = vxor.u32 %v3386, 2147483648
    %v3391 = vmul.f32 %v3390, 1.442695
    %v3392 = vpow.pop %v3391
    %v3393 = vadd.f32 %v3392, 1.0
    %v3394 = vrcp.pop %v3393
    %v3395 = vmul.f32 1.0, %v3394
    %v3396 = vxor.u32 %v3387, 2147483648
    %v3397 = vmul.f32 %v3396, 1.442695
    %v3398 = vpow.pop %v3397
    %v3399 = vadd.f32 %v3398, 1.0
    %v3400 = vrcp.pop %v3399
    %v3401 = vmul.f32 1.0, %v3400
    %v3402 = vtanh.pop %v3388
    %v3403 = vxor.u32 %v3389, 2147483648
    %v3404 = vmul.f32 %v3403, 1.442695
    %v3405 = vpow.pop %v3404
    %v3406 = vadd.f32 %v3405, 1.0
    %v3407 = vrcp.pop %v3406
    %v3408 = vmul.f32 1.0, %v3407
    %v3410 = vrot.slane %v3225, 7
    %v3412 = vmul.f32 %v3401, %v3410
    %v3413 = vmul.f32 %v3395, %v3402
    %v3414 = vadd.f32 %v3412, %v3413
    %v3415 = vtanh.pop %v3414
    %v3416 = vmul.f32 %v3408, %v3415
    %v3417 = vld [vmem:[%s16] sm:$0xff]
    %v3418 = vld [vmem:[%s16 + $0x8] sm:$0xff]
    %v3419 = vld [vmem:[%s16 + $0x10] sm:$0xff]
    %v3420 = vld [vmem:[%s16 + $0x18] sm:$0xff]
    %v3421 = vld [vmem:[%s16 + $0x20] sm:$0xff]
    %v3422 = vld [vmem:[%s16 + $0x28] sm:$0xff]
    %v3423 = vld [vmem:[%s16 + $0x30] sm:$0xff]
    %v3424 = vld [vmem:[%s16 + $0x38] sm:$0xff]
    %v3425 = vld [vmem:[%s16 + $0x40] sm:$0xff]
    %v3426 = vld [vmem:[%s16 + $0x48] sm:$0xff]
    %v3427 = vld [vmem:[%s16 + $0x50] sm:$0xff]
    %v3428 = vld [vmem:[%s16 + $0x58] sm:$0xff]
    %v3429 = vld [vmem:[%s16 + $0x60] sm:$0xff]
    %v3430 = vld [vmem:[%s16 + $0x68] sm:$0xff]
    %v3431 = vld [vmem:[%s16 + $0x70] sm:$0xff]
    %v3432 = vld [vmem:[%s16 + $0x78] sm:$0xff]
    %v3433 = vld [vmem:[%s17] sm:$0xf]
    %v3434 = vrot.slane %v1717, 7
    %v3436 = vlaneseq
    %v3437 = vshrl.u32 %v3436, 7
    %v3438 = vsub.s32 0, %v3437
    %v3439 = vrot.slane %v3433, %v3438
    %v3440 = vlaneseq
    %v3441 = vshrl.u32 %v3440, 7
    %v3442 = vsub.s32 2, %v3441
    %v3443 = vrot.slane %v3433, %v3442
    %v3444 = vlaneseq
    %v3445 = vshrl.u32 %v3444, 7
    %v3446 = vsub.s32 3, %v3445
    %v3447 = vrot.slane %v3433, %v3446
    %v3451 = vsel %vm116, %v3434, 0
    %3453 = vmatprep.subr.mxu0 0.0
    %3454 = vmatpush1.msra.mxu0 0.0
    %3455 = vmatprep.subr.mxu0 0.0
    %3456 = vmatpush1.msra.mxu0 0.0
    %3457 = vmatprep.subr.mxu0 0.0
    %3458 = vmatpush1.msra.mxu0 0.0
    %3459 = vmatprep.subr.mxu0 0.0
    %3460 = vmatpush1.msra.mxu0 0.0
    %3461 = vmatprep.subr.mxu0 0.0
    %3462 = vmatpush1.msra.mxu0 0.0
    %3463 = vmatprep.subr.mxu0 0.0
    %3464 = vmatpush1.msra.mxu0 0.0
    %3465 = vmatprep.subr.mxu0 0.0
    %3466 = vmatpush1.msra.mxu0 0.0
    %3467 = vmatprep.subr.mxu0 0.0
    %3468 = vmatpush1.msra.mxu0 0.0
    %3469 = vmatprep.subr.mxu0 0.0
    %3470 = vmatpush1.msra.mxu0 0.0
    %3471 = vmatprep.subr.mxu0 0.0
    %3472 = vmatpush1.msra.mxu0 0.0
    %3473 = vmatprep.subr.mxu0 0.0
    %3474 = vmatpush1.msra.mxu0 0.0
    %3475 = vmatprep.subr.mxu0 0.0
    %3476 = vmatpush1.msra.mxu0 0.0
    %3477 = vmatprep.subr.mxu0 %v3430
    %3478 = vmatpush1.msra.mxu0 %v3429
    %3479 = vmatprep.subr.mxu0 %v3426
    %3480 = vmatpush1.msra.mxu0 %v3425
    %3481 = vmatprep.subr.mxu0 %v3422
    %3482 = vmatpush1.msra.mxu0 %v3421
    %3483 = vmatprep.subr.mxu0 %v3418
    %3484 = vmatpush1.msra.mxu0 %v3417
    %3485 = vmatprep.subr.mxu0 0.0
    %3486 = vmatpush2.msra.mxu0 0.0
    %3487 = vmatprep.subr.mxu0 0.0
    %3488 = vmatpush2.msra.mxu0 0.0
    %3489 = vmatprep.subr.mxu0 0.0
    %3490 = vmatpush2.msra.mxu0 0.0
    %3491 = vmatprep.subr.mxu0 0.0
    %3492 = vmatpush2.msra.mxu0 0.0
    %3493 = vmatprep.subr.mxu0 0.0
    %3494 = vmatpush2.msra.mxu0 0.0
    %3495 = vmatprep.subr.mxu0 0.0
    %3496 = vmatpush2.msra.mxu0 0.0
    %3497 = vmatprep.subr.mxu0 0.0
    %3498 = vmatpush2.msra.mxu0 0.0
    %3499 = vmatprep.subr.mxu0 0.0
    %3500 = vmatpush2.msra.mxu0 0.0
    %3501 = vmatprep.subr.mxu0 0.0
    %3502 = vmatpush2.msra.mxu0 0.0
    %3503 = vmatprep.subr.mxu0 0.0
    %3504 = vmatpush2.msra.mxu0 0.0
    %3505 = vmatprep.subr.mxu0 0.0
    %3506 = vmatpush2.msra.mxu0 0.0
    %3507 = vmatprep.subr.mxu0 0.0
    %3508 = vmatpush2.msra.mxu0 0.0
    %3509 = vmatprep.subr.mxu0 0.0
    %3510 = vmatpush2.msra.mxu0 0.0
    %3511 = vmatprep.subr.mxu0 0.0
    %3512 = vmatpush2.msra.mxu0 0.0
    %3513 = vmatprep.subr.mxu0 0.0
    %3514 = vmatpush2.msra.mxu0 0.0
    %3515 = vmatprep.subr.mxu0 0.0
    %3516 = vmatpush2.msra.mxu0 0.0
    %3517 = vmatprep.mubr.f32.mxu0 0.0
    %3518 = vmatmul.mubr.f32.gmra.mxu0 %v3451
    %v3519 = vpop.f32.mrf.mxu0
    %v3520 = vadd.f32 %v3439, %v3519
    %v3521 = vpop.f32.mrf.mxu0
    %3522 = vdwg.mxu0
    %3523 = vmatprep.subr.mxu0 0.0
    %3524 = vmatpush1.msra.mxu0 0.0
    %3525 = vmatprep.subr.mxu0 0.0
    %3526 = vmatpush1.msra.mxu0 0.0
    %3527 = vmatprep.subr.mxu0 0.0
    %3528 = vmatpush1.msra.mxu0 0.0
    %3529 = vmatprep.subr.mxu0 0.0
    %3530 = vmatpush1.msra.mxu0 0.0
    %3531 = vmatprep.subr.mxu0 0.0
    %3532 = vmatpush1.msra.mxu0 0.0
    %3533 = vmatprep.subr.mxu0 0.0
    %3534 = vmatpush1.msra.mxu0 0.0
    %3535 = vmatprep.subr.mxu0 0.0
    %3536 = vmatpush1.msra.mxu0 0.0
    %3537 = vmatprep.subr.mxu0 0.0
    %3538 = vmatpush1.msra.mxu0 0.0
    %3539 = vmatprep.subr.mxu0 0.0
    %3540 = vmatpush1.msra.mxu0 0.0
    %3541 = vmatprep.subr.mxu0 0.0
    %3542 = vmatpush1.msra.mxu0 0.0
    %3543 = vmatprep.subr.mxu0 0.0
    %3544 = vmatpush1.msra.mxu0 0.0
    %3545 = vmatprep.subr.mxu0 0.0
    %3546 = vmatpush1.msra.mxu0 0.0
    %3547 = vmatprep.subr.mxu0 %v3432
    %3548 = vmatpush1.msra.mxu0 %v3431
    %3549 = vmatprep.subr.mxu0 %v3428
    %3550 = vmatpush1.msra.mxu0 %v3427
    %3551 = vmatprep.subr.mxu0 %v3424
    %3552 = vmatpush1.msra.mxu0 %v3423
    %3553 = vmatprep.subr.mxu0 %v3420
    %3554 = vmatpush1.msra.mxu0 %v3419
    %3555 = vmatprep.subr.mxu0 0.0
    %3556 = vmatpush2.msra.mxu0 0.0
    %3557 = vmatprep.subr.mxu0 0.0
    %3558 = vmatpush2.msra.mxu0 0.0
    %3559 = vmatprep.subr.mxu0 0.0
    %3560 = vmatpush2.msra.mxu0 0.0
    %3561 = vmatprep.subr.mxu0 0.0
    %3562 = vmatpush2.msra.mxu0 0.0
    %3563 = vmatprep.subr.mxu0 0.0
    %3564 = vmatpush2.msra.mxu0 0.0
    %3565 = vmatprep.subr.mxu0 0.0
    %3566 = vmatpush2.msra.mxu0 0.0
    %3567 = vmatprep.subr.mxu0 0.0
    %3568 = vmatpush2.msra.mxu0 0.0
    %3569 = vmatprep.subr.mxu0 0.0
    %3570 = vmatpush2.msra.mxu0 0.0
    %3571 = vmatprep.subr.mxu0 0.0
    %3572 = vmatpush2.msra.mxu0 0.0
    %3573 = vmatprep.subr.mxu0 0.0
    %3574 = vmatpush2.msra.mxu0 0.0
    %3575 = vmatprep.subr.mxu0 0.0
    %3576 = vmatpush2.msra.mxu0 0.0
    %3577 = vmatprep.subr.mxu0 0.0
    %3578 = vmatpush2.msra.mxu0 0.0
    %3579 = vmatprep.subr.mxu0 0.0
    %3580 = vmatpush2.msra.mxu0 0.0
    %3581 = vmatprep.subr.mxu0 0.0
    %3582 = vmatpush2.msra.mxu0 0.0
    %3583 = vmatprep.subr.mxu0 0.0
    %3584 = vmatpush2.msra.mxu0 0.0
    %3585 = vmatprep.subr.mxu0 0.0
    %3586 = vmatpush2.msra.mxu0 0.0
    %3587 = vmatprep.mubr.f32.mxu0 0.0
    %3588 = vmatmul.mubr.f32.gmra.mxu0 %v3451
    %v3589 = vpop.f32.mrf.mxu0
    %v3590 = vadd.f32 %v3443, %v3589
    %v3591 = vpop.f32.mrf.mxu0
    %v3592 = vadd.f32 %v3447, %v3591
    %3593 = vdwg.mxu0
    %v3594 = vxor.u32 %v3520, 2147483648
    %v3595 = vmul.f32 %v3594, 1.442695
    %v3596 = vpow.pop %v3595
    %v3597 = vadd.f32 %v3596, 1.0
    %v3598 = vrcp.pop %v3597
    %v3599 = vmul.f32 1.0, %v3598
    %v3600 = vtanh.pop %v3590
    %v3601 = vxor.u32 %v3592, 2147483648
    %v3602 = vmul.f32 %v3601, 1.442695
    %v3603 = vpow.pop %v3602
    %v3604 = vadd.f32 %v3603, 1.0
    %v3605 = vrcp.pop %v3604
    %v3606 = vmul.f32 1.0, %v3605
    %v3607 = vmul.f32 %v3599, %v3600
    %v3608 = vtanh.pop %v3607
    %v3609 = vmul.f32 %v3606, %v3608
    %v3610 = vld [vmem:[%s18] sm:$0xff]
    %v3611 = vld [vmem:[%s18 + $0x8] sm:$0xff]
    %v3612 = vld [vmem:[%s18 + $0x10] sm:$0xff]
    %v3613 = vld [vmem:[%s18 + $0x18] sm:$0xff]
    %v3614 = vld [vmem:[%s18 + $0x20] sm:$0xff]
    %v3615 = vld [vmem:[%s19] sm:$0xff]
    %v3616 = vld [vmem:[%s19 + $0x8] sm:$0xff]
    %v3617 = vld [vmem:[%s19 + $0x10] sm:$0xff]
    %v3618 = vld [vmem:[%s19 + $0x18] sm:$0xff]
    %v3619 = vld [vmem:[%s19 + $0x20] sm:$0xff]
    %v3621 = vsel %vm1921, %v3609, 0
    %3623 = vmatprep.subr.mxu0 0.0
    %3624 = vmatpush1.msra.mxu0 0.0
    %3625 = vmatprep.subr.mxu0 0.0
    %3626 = vmatpush1.msra.mxu0 0.0
    %3627 = vmatprep.subr.mxu0 0.0
    %3628 = vmatpush1.msra.mxu0 0.0
    %3629 = vmatprep.subr.mxu0 0.0
    %3630 = vmatpush1.msra.mxu0 0.0
    %3631 = vmatprep.subr.mxu0 0.0
    %3632 = vmatpush1.msra.mxu0 0.0
    %3633 = vmatprep.subr.mxu0 0.0
    %3634 = vmatpush1.msra.mxu0 0.0
    %3635 = vmatprep.subr.mxu0 0.0
    %3636 = vmatpush1.msra.mxu0 0.0
    %3637 = vmatprep.subr.mxu0 0.0
    %3638 = vmatpush1.msra.mxu0 0.0
    %3639 = vmatprep.subr.mxu0 0.0
    %3640 = vmatpush1.msra.mxu0 0.0
    %3641 = vmatprep.subr.mxu0 0.0
    %3642 = vmatpush1.msra.mxu0 0.0
    %3643 = vmatprep.subr.mxu0 0.0
    %3644 = vmatpush1.msra.mxu0 0.0
    %3645 = vmatprep.subr.mxu0 0.0
    %3646 = vmatpush1.msra.mxu0 %v3619
    %3647 = vmatprep.subr.mxu0 0.0
    %3648 = vmatpush1.msra.mxu0 %v3618
    %3649 = vmatprep.subr.mxu0 0.0
    %3650 = vmatpush1.msra.mxu0 %v3617
    %3651 = vmatprep.subr.mxu0 0.0
    %3652 = vmatpush1.msra.mxu0 %v3616
    %3653 = vmatprep.subr.mxu0 0.0
    %3654 = vmatpush1.msra.mxu0 %v3615
    %3655 = vmatprep.subr.mxu0 0.0
    %3656 = vmatpush2.msra.mxu0 0.0
    %3657 = vmatprep.subr.mxu0 0.0
    %3658 = vmatpush2.msra.mxu0 0.0
    %3659 = vmatprep.subr.mxu0 0.0
    %3660 = vmatpush2.msra.mxu0 0.0
    %3661 = vmatprep.subr.mxu0 0.0
    %3662 = vmatpush2.msra.mxu0 0.0
    %3663 = vmatprep.subr.mxu0 0.0
    %3664 = vmatpush2.msra.mxu0 0.0
    %3665 = vmatprep.subr.mxu0 0.0
    %3666 = vmatpush2.msra.mxu0 0.0
    %3667 = vmatprep.subr.mxu0 0.0
    %3668 = vmatpush2.msra.mxu0 0.0
    %3669 = vmatprep.subr.mxu0 0.0
    %3670 = vmatpush2.msra.mxu0 0.0
    %3671 = vmatprep.subr.mxu0 0.0
    %3672 = vmatpush2.msra.mxu0 0.0
    %3673 = vmatprep.subr.mxu0 0.0
    %3674 = vmatpush2.msra.mxu0 0.0
    %3675 = vmatprep.subr.mxu0 0.0
    %3676 = vmatpush2.msra.mxu0 0.0
    %3677 = vmatprep.subr.mxu0 0.0
    %3678 = vmatpush2.msra.mxu0 0.0
    %3679 = vmatprep.subr.mxu0 0.0
    %3680 = vmatpush2.msra.mxu0 0.0
    %3681 = vmatprep.subr.mxu0 0.0
    %3682 = vmatpush2.msra.mxu0 0.0
    %3683 = vmatprep.subr.mxu0 0.0
    %3684 = vmatpush2.msra.mxu0 0.0
    %3685 = vmatprep.subr.mxu0 0.0
    %3686 = vmatpush2.msra.mxu0 0.0
    %3687 = vmatprep.mubr.f32.mxu0 0.0
    %3688 = vmatmul.mubr.f32.gmra.mxu0 %v3621
    %v3689 = vpop.f32.mrf.mxu0
    %v3690 = vadd.f32 0.0, %v3689
    %v3691 = vpop.f32.mrf.mxu0
    %3692 = vdwg.mxu0
    %v3694 = vrot.slane %v3416, 7
    %v3695 = vsel %vm1921, %v3694, 0
    %3697 = vmatprep.subr.mxu0 0.0
    %3698 = vmatpush1.msra.mxu0 0.0
    %3699 = vmatprep.subr.mxu0 0.0
    %3700 = vmatpush1.msra.mxu0 0.0
    %3701 = vmatprep.subr.mxu0 0.0
    %3702 = vmatpush1.msra.mxu0 0.0
    %3703 = vmatprep.subr.mxu0 0.0
    %3704 = vmatpush1.msra.mxu0 0.0
    %3705 = vmatprep.subr.mxu0 0.0
    %3706 = vmatpush1.msra.mxu0 0.0
    %3707 = vmatprep.subr.mxu0 0.0
    %3708 = vmatpush1.msra.mxu0 0.0
    %3709 = vmatprep.subr.mxu0 0.0
    %3710 = vmatpush1.msra.mxu0 0.0
    %3711 = vmatprep.subr.mxu0 0.0
    %3712 = vmatpush1.msra.mxu0 0.0
    %3713 = vmatprep.subr.mxu0 0.0
    %3714 = vmatpush1.msra.mxu0 0.0
    %3715 = vmatprep.subr.mxu0 0.0
    %3716 = vmatpush1.msra.mxu0 0.0
    %3717 = vmatprep.subr.mxu0 0.0
    %3718 = vmatpush1.msra.mxu0 0.0
    %3719 = vmatprep.subr.mxu0 0.0
    %3720 = vmatpush1.msra.mxu0 %v3614
    %3721 = vmatprep.subr.mxu0 0.0
    %3722 = vmatpush1.msra.mxu0 %v3613
    %3723 = vmatprep.subr.mxu0 0.0
    %3724 = vmatpush1.msra.mxu0 %v3612
    %3725 = vmatprep.subr.mxu0 0.0
    %3726 = vmatpush1.msra.mxu0 %v3611
    %3727 = vmatprep.subr.mxu0 0.0
    %3728 = vmatpush1.msra.mxu0 %v3610
    %3729 = vmatprep.subr.mxu0 0.0
    %3730 = vmatpush2.msra.mxu0 0.0
    %3731 = vmatprep.subr.mxu0 0.0
    %3732 = vmatpush2.msra.mxu0 0.0
    %3733 = vmatprep.subr.mxu0 0.0
    %3734 = vmatpush2.msra.mxu0 0.0
    %3735 = vmatprep.subr.mxu0 0.0
    %3736 = vmatpush2.msra.mxu0 0.0
    %3737 = vmatprep.subr.mxu0 0.0
    %3738 = vmatpush2.msra.mxu0 0.0
    %3739 = vmatprep.subr.mxu0 0.0
    %3740 = vmatpush2.msra.mxu0 0.0
    %3741 = vmatprep.subr.mxu0 0.0
    %3742 = vmatpush2.msra.mxu0 0.0
    %3743 = vmatprep.subr.mxu0 0.0
    %3744 = vmatpush2.msra.mxu0 0.0
    %3745 = vmatprep.subr.mxu0 0.0
    %3746 = vmatpush2.msra.mxu0 0.0
    %3747 = vmatprep.subr.mxu0 0.0
    %3748 = vmatpush2.msra.mxu0 0.0
    %3749 = vmatprep.subr.mxu0 0.0
    %3750 = vmatpush2.msra.mxu0 0.0
    %3751 = vmatprep.subr.mxu0 0.0
    %3752 = vmatpush2.msra.mxu0 0.0
    %3753 = vmatprep.subr.mxu0 0.0
    %3754 = vmatpush2.msra.mxu0 0.0
    %3755 = vmatprep.subr.mxu0 0.0
    %3756 = vmatpush2.msra.mxu0 0.0
    %3757 = vmatprep.subr.mxu0 0.0
    %3758 = vmatpush2.msra.mxu0 0.0
    %3759 = vmatprep.subr.mxu0 0.0
    %3760 = vmatpush2.msra.mxu0 0.0
    %3761 = vmatprep.mubr.f32.mxu0 0.0
    %3762 = vmatmul.mubr.f32.gmra.mxu0 %v3695
    %v3763 = vpop.f32.mrf.mxu0
    %v3764 = vadd.f32 %v3690, %v3763
    %v3765 = vpop.f32.mrf.mxu0
    %3766 = vdwg.mxu0
    %v3767 = vld [vmem:[%s20] sm:$0x1]
    %v3768 = vadd.f32 %v3764, %v3767
    %v3769 = vmax.f32 %v3768, 0.0
    %v3770 = vld [vmem:[%s21] sm:$0xff]
    %v3771 = vld [vmem:[%s21 + $0x8] sm:$0xff]
    %v3772 = vld [vmem:[#allocation2] sm:$0x1]
    %vm3773 = vcmask 130048
    %v3775 = vsel %vm3773, %v3769, 0
    %3777 = vmatprep.subr.mxu0 0.0
    %3778 = vmatpush1.msra.mxu0 0.0
    %3779 = vmatprep.subr.mxu0 0.0
    %3780 = vmatpush1.msra.mxu0 0.0
    %3781 = vmatprep.subr.mxu0 0.0
    %3782 = vmatpush1.msra.mxu0 0.0
    %3783 = vmatprep.subr.mxu0 0.0
    %3784 = vmatpush1.msra.mxu0 0.0
    %3785 = vmatprep.subr.mxu0 0.0
    %3786 = vmatpush1.msra.mxu0 0.0
    %3787 = vmatprep.subr.mxu0 0.0
    %3788 = vmatpush1.msra.mxu0 0.0
    %3789 = vmatprep.subr.mxu0 0.0
    %3790 = vmatpush1.msra.mxu0 0.0
    %3791 = vmatprep.subr.mxu0 0.0
    %3792 = vmatpush1.msra.mxu0 0.0
    %3793 = vmatprep.subr.mxu0 0.0
    %3794 = vmatpush1.msra.mxu0 0.0
    %3795 = vmatprep.subr.mxu0 0.0
    %3796 = vmatpush1.msra.mxu0 0.0
    %3797 = vmatprep.subr.mxu0 0.0
    %3798 = vmatpush1.msra.mxu0 0.0
    %3799 = vmatprep.subr.mxu0 0.0
    %3800 = vmatpush1.msra.mxu0 0.0
    %3801 = vmatprep.subr.mxu0 0.0
    %3802 = vmatpush1.msra.mxu0 0.0
    %3803 = vmatprep.subr.mxu0 0.0
    %3804 = vmatpush1.msra.mxu0 0.0
    %3805 = vmatprep.subr.mxu0 0.0
    %3806 = vmatpush1.msra.mxu0 %v3771
    %3807 = vmatprep.subr.mxu0 0.0
    %3808 = vmatpush1.msra.mxu0 %v3770
    %3809 = vmatprep.subr.mxu0 0.0
    %3810 = vmatpush2.msra.mxu0 0.0
    %3811 = vmatprep.subr.mxu0 0.0
    %3812 = vmatpush2.msra.mxu0 0.0
    %3813 = vmatprep.subr.mxu0 0.0
    %3814 = vmatpush2.msra.mxu0 0.0
    %3815 = vmatprep.subr.mxu0 0.0
    %3816 = vmatpush2.msra.mxu0 0.0
    %3817 = vmatprep.subr.mxu0 0.0
    %3818 = vmatpush2.msra.mxu0 0.0
    %3819 = vmatprep.subr.mxu0 0.0
    %3820 = vmatpush2.msra.mxu0 0.0
    %3821 = vmatprep.subr.mxu0 0.0
    %3822 = vmatpush2.msra.mxu0 0.0
    %3823 = vmatprep.subr.mxu0 0.0
    %3824 = vmatpush2.msra.mxu0 0.0
    %3825 = vmatprep.subr.mxu0 0.0
    %3826 = vmatpush2.msra.mxu0 0.0
    %3827 = vmatprep.subr.mxu0 0.0
    %3828 = vmatpush2.msra.mxu0 0.0
    %3829 = vmatprep.subr.mxu0 0.0
    %3830 = vmatpush2.msra.mxu0 0.0
    %3831 = vmatprep.subr.mxu0 0.0
    %3832 = vmatpush2.msra.mxu0 0.0
    %3833 = vmatprep.subr.mxu0 0.0
    %3834 = vmatpush2.msra.mxu0 0.0
    %3835 = vmatprep.subr.mxu0 0.0
    %3836 = vmatpush2.msra.mxu0 0.0
    %3837 = vmatprep.subr.mxu0 0.0
    %3838 = vmatpush2.msra.mxu0 0.0
    %3839 = vmatprep.subr.mxu0 0.0
    %3840 = vmatpush2.msra.mxu0 0.0
    %3841 = vmatprep.mubr.f32.mxu0 0.0
    %3842 = vmatmul.mubr.f32.gmra.mxu0 %v3775
    %v3843 = vpop.f32.mrf.mxu0
    %v3844 = vadd.f32 %v3772, %v3843
    %v3845 = vpop.f32.mrf.mxu0
    %3846 = vdwg.mxu0
    %vm3847 = vcmask 0
    %3848 = vst.msk [vmem:[#allocation3] sm:$0x1] %vm3847, %v3844
    // Predicated region
    $region94: #{h_stgcn_forward.1} parent=1 // pred_check
      _
    $region95: #{h_stgcn_forward.1} parent=1 // pred_check_branch
      %3850 = sbr.rel (0) target = $region97
    $region96: #{h_stgcn_forward.1} parent=1 // pred_region
      %s3852 = ssub.s32 16, 16
      %3853 = vsyncadd [#allocation4], %s3852
      %s3855 = sshll.u32 [#allocation3], 4
      %s3856 = int_to_ptr.vmem [resolvable:$true] %s3855
      %3858 = dma.vmem_to_hbm [thread:$0]  %s3856, 16, %s23, [#allocation4]
    $region97: #{h_stgcn_forward.1} parent=1 // pred_fallthru
      _
    // Predicated region
    $region98: #{h_stgcn_forward.1} parent=1 // pred_check
      _
    $region99: #{h_stgcn_forward.1} parent=1 // pred_check_branch
      %3860 = sbr.rel (0) target = $region101
    $region100: #{h_stgcn_forward.1} parent=1 // pred_region
      %3861 = dma.done [#allocation4], 16
    $region101: #{h_stgcn_forward.1} parent=1 // pred_fallthru
      _
    %3862 = vsyncpa [#allocation4], 1

</llo_original>
